<compile_context>
chip_gen: v6e
topology: v6e:2x2x1
jax: 0.10.0
libtpu: 0.0.40
codegen_flags: <defaults>
</compile_context>

<pallas_src>
import jax
import jax.numpy as jnp
from jax.experimental import pallas as pl
from jax.experimental.pallas import tpu as pltpu

# -------------------- synthetic config --------------------
HIDDEN = 32
NUM_HEADS = 4
HEAD_DIM = HIDDEN // NUM_HEADS
NUM_LAYERS = 2
INTERMEDIATE = 64
MAX_POS = 8            # config.max_position_embeddings == vid_num
TYPE_VOCAB = 2
IMG_DIM = 20
TEXT_DIM = 24
LN_EPS_BERT = 1e-12
LN_EPS_LINEAR = 1e-5


# -------------------- fused Pallas kernel --------------------
def _ln(x, g, b, eps):
    """Row-wise LayerNorm on a VMEM-resident value. g/b: [1, N]."""
    mean = jnp.mean(x, axis=-1, keepdims=True)
    var = jnp.mean(jnp.square(x - mean), axis=-1, keepdims=True)
    inv = jax.lax.rsqrt(var + eps)
    return (x - mean) * inv * g + b


def _mma_fused_kernel(vid_ref, txt_ref, aux_ref, mask_ref,
                      img_ln_g_ref, img_ln_b_ref, img_w_ref, img_b_ref,
                      txt_ln_g_ref, txt_ln_b_ref, txt_w_ref, txt_b_ref,
                      emb_ln_g_ref, emb_ln_b_ref,
                      wqkv_ref, bqkv_ref, wo_ref, bo_ref,
                      ln1_g_ref, ln1_b_ref,
                      wi_ref, bi_ref, wo2_ref, bo2_ref,
                      ln2_g_ref, ln2_b_ref,
                      o_ref):
    # ---- branch LinearLayers: LayerNorm -> Dropout(id, eval) -> Linear -> ReLU
    vid = _ln(vid_ref[0], img_ln_g_ref[...], img_ln_b_ref[...], LN_EPS_LINEAR)
    vid = jnp.maximum(
        jnp.dot(vid, img_w_ref[...], preferred_element_type=jnp.float32)
        + img_b_ref[...], 0.0)
    txt = _ln(txt_ref[0], txt_ln_g_ref[...], txt_ln_b_ref[...], LN_EPS_LINEAR)
    txt = jnp.maximum(
        jnp.dot(txt, txt_w_ref[...], preferred_element_type=jnp.float32)
        + txt_b_ref[...], 0.0)

    # ---- BertEmbeddings: inputs_embeds + pos_emb + tok_emb (pre-summed aux),
    #      then LayerNorm — fused, no HBM round trip.
    x = jnp.concatenate([vid, txt], axis=0) + aux_ref[0]          # [S, H]
    x = _ln(x, emb_ln_g_ref[...], emb_ln_b_ref[...], LN_EPS_BERT)

    S = x.shape[0]
    # ---- extended attention mask bias; broadcast to [S, S] ONCE (hoisted out
    #      of the layer/head loops — broadcast_in_dim is not CSE'd by JAX).
    bias = jnp.broadcast_to((1.0 - mask_ref[0]) * -10000.0, (S, S))

    # ---- BertEncoder layers (weights stay resident in VMEM; static unroll)
    for l in range(NUM_LAYERS):
        # fused QKV projection (1/sqrt(dh) already folded into the Q weights)
        qkv = (jnp.dot(x, wqkv_ref[l], preferred_element_type=jnp.float32)
               + bqkv_ref[l])                                     # [S, 3H]

        ctx_heads = []
        for h in range(NUM_HEADS):                                # unrolled
            lo = h * HEAD_DIM
            q = qkv[:, lo:lo + HEAD_DIM]                          # [S, DH]
            k = qkv[:, HIDDEN + lo:HIDDEN + lo + HEAD_DIM]
            v = qkv[:, 2 * HIDDEN + lo:2 * HIDDEN + lo + HEAD_DIM]
            s = jax.lax.dot_general(q, k, (((1,), (1,)), ((), ())),
                                    preferred_element_type=jnp.float32)
            s = s + bias                                          # [S, S]
            s = s - jnp.max(s, axis=-1, keepdims=True)            # stable
            p = jnp.exp(s)
            p = p * pl.reciprocal(jnp.sum(p, axis=-1, keepdims=True),
                                  approx=True)
            ctx_heads.append(
                jnp.dot(p, v, preferred_element_type=jnp.float32))
        ctx = jnp.concatenate(ctx_heads, axis=-1)                 # [S, H]

        attn_out = (jnp.dot(ctx, wo_ref[l],
                            preferred_element_type=jnp.float32) + bo_ref[l])
        x = _ln(attn_out + x, ln1_g_ref[l], ln1_b_ref[l], LN_EPS_BERT)

        inter = (jnp.dot(x, wi_ref[l],
                         preferred_element_type=jnp.float32) + bi_ref[l])
        # TODO(synk): BERT's "gelu" is erf-based; tanh approximation used here
        # (erf lowering in Mosaic is not guaranteed).
        inter = jax.nn.gelu(inter, approximate=True)
        ffn = (jnp.dot(inter, wo2_ref[l],
                       preferred_element_type=jnp.float32) + bo2_ref[l])
        x = _ln(ffn + x, ln2_g_ref[l], ln2_b_ref[l], LN_EPS_BERT)

    o_ref[0] = x.astype(o_ref.dtype)


def fused_forward(vid, txt, aux, mask, fp):
    """One pallas_call for the whole model; grid over batch ("parallel")."""
    B = vid.shape[0]
    S = aux.shape[1]

    weights = [
        fp["img_ln_g"], fp["img_ln_b"], fp["img_w"], fp["img_b"],
        fp["txt_ln_g"], fp["txt_ln_b"], fp["txt_w"], fp["txt_b"],
        fp["emb_ln_g"], fp["emb_ln_b"],
        fp["wqkv"], fp["bqkv"], fp["wo"], fp["bo"],
        fp["ln1_g"], fp["ln1_b"],
        fp["wi"], fp["bi"], fp["wo2"], fp["bo2"],
        fp["ln2_g"], fp["ln2_b"],
    ]

    def batch_spec(a):  # one batch slice per grid step
        return pl.BlockSpec((1,) + a.shape[1:],
                            lambda b, _n=a.ndim: (b,) + (0,) * (_n - 1))

    def const_spec(a):  # same block every step -> DMA'd into VMEM once
        return pl.BlockSpec(a.shape, lambda b, _n=a.ndim: (0,) * _n)

    in_specs = ([batch_spec(vid), batch_spec(txt),
                 batch_spec(aux), batch_spec(mask)]
                + [const_spec(w) for w in weights])

    return pl.pallas_call(
        _mma_fused_kernel,
        grid=(B,),
        in_specs=in_specs,
        out_specs=pl.BlockSpec((1, S, HIDDEN), lambda b: (b, 0, 0)),
        out_shape=jax.ShapeDtypeStruct((B, S, HIDDEN), jnp.float32),
        compiler_params=pltpu.CompilerParams(
            dimension_semantics=("parallel",)),
    )(vid, txt, aux, mask, *weights)


# -------------------- parameters --------------------
def init_params(key):
    keys = iter(jax.random.split(key, 64))

    def w(shape):
        return 0.02 * jax.random.normal(next(keys), shape, jnp.float32)

    def zeros(shape):
        return jnp.zeros(shape, jnp.float32)

    def ones(shape):
        return jnp.ones(shape, jnp.float32)

    params = {
        "img_linear": dict(ln_g=ones((1, IMG_DIM)), ln_b=zeros((1, IMG_DIM)),
                           w=w((IMG_DIM, HIDDEN)), b=zeros((1, HIDDEN))),
        "text_linear": dict(ln_g=ones((1, TEXT_DIM)), ln_b=zeros((1, TEXT_DIM)),
                            w=w((TEXT_DIM, HIDDEN)), b=zeros((1, HIDDEN))),
        "pos_emb": w((MAX_POS, HIDDEN)),
        "tok_emb": w((TYPE_VOCAB, HIDDEN)),
        "emb_ln_g": ones((1, HIDDEN)), "emb_ln_b": zeros((1, HIDDEN)),
        "layers": [],
    }
    for _ in range(NUM_LAYERS):
        params["layers"].append(dict(
            wq=w((HIDDEN, HIDDEN)), bq=zeros((1, HIDDEN)),
            wk=w((HIDDEN, HIDDEN)), bk=zeros((1, HIDDEN)),
            wv=w((HIDDEN, HIDDEN)), bv=zeros((1, HIDDEN)),
            wo=w((HIDDEN, HIDDEN)), bo=zeros((1, HIDDEN)),
            ln1_g=ones((1, HIDDEN)), ln1_b=zeros((1, HIDDEN)),
            wi=w((HIDDEN, INTERMEDIATE)), bi=zeros((1, INTERMEDIATE)),
            wo2=w((INTERMEDIATE, HIDDEN)), bo2=zeros((1, HIDDEN)),
            ln2_g=ones((1, HIDDEN)), ln2_b=zeros((1, HIDDEN)),
        ))
    return params


def pack_params(params):
    """Stack per-layer weights, fuse QKV, fold 1/sqrt(dh) into wq/bq."""
    scale = 1.0 / (HEAD_DIM ** 0.5)
    layers = params["layers"]

    def stack(name):
        return jnp.stack([l[name] for l in layers], axis=0)

    wqkv = jnp.stack(
        [jnp.concatenate([l["wq"] * scale, l["wk"], l["wv"]], axis=1)
         for l in layers], axis=0)                       # [L, H, 3H]
    bqkv = jnp.stack(
        [jnp.concatenate([l["bq"] * scale, l["bk"], l["bv"]], axis=1)
         for l in layers], axis=0)                       # [L, 1, 3H]

    return {
        "img_ln_g": params["img_linear"]["ln_g"],
        "img_ln_b": params["img_linear"]["ln_b"],
        "img_w": params["img_linear"]["w"],
        "img_b": params["img_linear"]["b"],
        "txt_ln_g": params["text_linear"]["ln_g"],
        "txt_ln_b": params["text_linear"]["ln_b"],
        "txt_w": params["text_linear"]["w"],
        "txt_b": params["text_linear"]["b"],
        "emb_ln_g": params["emb_ln_g"], "emb_ln_b": params["emb_ln_b"],
        "wqkv": wqkv, "bqkv": bqkv,
        "wo": stack("wo"), "bo": stack("bo"),
        "ln1_g": stack("ln1_g"), "ln1_b": stack("ln1_b"),
        "wi": stack("wi"), "bi": stack("bi"),
        "wo2": stack("wo2"), "bo2": stack("bo2"),
        "ln2_g": stack("ln2_g"), "ln2_b": stack("ln2_b"),
    }


# -------------------- model forward --------------------
@jax.jit
def mma_forward(params, vid_features, vid_position_ids, vid_token_type_ids,
                vid_attention_mask, text_features, text_position_ids,
                text_token_type_ids, text_attention_mask):
    B = vid_features.shape[0]
    pos = jnp.concatenate([vid_position_ids, text_position_ids], axis=1)
    tok = jnp.concatenate([vid_token_type_ids, text_token_type_ids], axis=1)
    mask = jnp.concatenate([vid_attention_mask, text_attention_mask],
                           axis=1).astype(jnp.float32)
    S = pos.shape[1]

    # tiny embedding-table gathers done in plain JAX; summed once, added
    # to the features inside the fused kernel.
    aux = params["pos_emb"][pos] + params["tok_emb"][tok]        # [B, S, H]

    fp = pack_params(params)
    out = fused_forward(vid_features, text_features, aux,
                        mask.reshape(B, 1, S), fp)               # [B, S, H]

    # torch.split(output, vid_num, dim=1)
    return tuple(out[:, i:i + MAX_POS] for i in range(0, S, MAX_POS))


# -------------------- demo --------------------
if __name__ == "__main__":
    key = jax.random.PRNGKey(0)
    kp, kv, kt = jax.random.split(key, 3)
    params = init_params(kp)

    B, Lv, Lt = 2, MAX_POS, 8
    vid_features = jax.random.normal(kv, (B, Lv, IMG_DIM), jnp.float32)
    text_features = jax.random.normal(kt, (B, Lt, TEXT_DIM), jnp.float32)
    vid_position_ids = jnp.tile(jnp.arange(Lv, dtype=jnp.int32)[None], (B, 1))
    text_position_ids = jnp.tile(jnp.arange(Lt, dtype=jnp.int32)[None], (B, 1))
    vid_token_type_ids = jnp.zeros((B, Lv), jnp.int32)
    text_token_type_ids = jnp.ones((B, Lt), jnp.int32)
    vid_attention_mask = jnp.ones((B, Lv), jnp.float32)
    text_attention_mask = jnp.ones((B, Lt), jnp.float32).at[1, -2:].set(0.0)

    outs = mma_forward(params, vid_features, vid_position_ids,
                       vid_token_type_ids, vid_attention_mask,
                       text_features, text_position_ids,
                       text_token_type_ids, text_attention_mask)
    outs = jax.block_until_ready(outs)

    assert len(outs) == 2
    assert outs[0].shape == (B, MAX_POS, HIDDEN)
    assert outs[1].shape == (B, Lt, HIDDEN)
    assert all(bool(jnp.all(jnp.isfinite(o))) for o in outs)
    print("KERNEL_OK")
</pallas_src>

<mosaic_0001>
module attributes {stable_mosaic.version = 11 : i64} {
  func.func @_mma_fused_kernel(%arg0: i32, %arg1: memref<1x8x20xf32, #tpu.memory_space<vmem>>, %arg2: memref<1x8x24xf32, #tpu.memory_space<vmem>>, %arg3: memref<1x16x32xf32, #tpu.memory_space<vmem>>, %arg4: memref<1x1x16xf32, #tpu.memory_space<vmem>>, %arg5: memref<1x20xf32, #tpu.memory_space<vmem>>, %arg6: memref<1x20xf32, #tpu.memory_space<vmem>>, %arg7: memref<20x32xf32, #tpu.memory_space<vmem>>, %arg8: memref<1x32xf32, #tpu.memory_space<vmem>>, %arg9: memref<1x24xf32, #tpu.memory_space<vmem>>, %arg10: memref<1x24xf32, #tpu.memory_space<vmem>>, %arg11: memref<24x32xf32, #tpu.memory_space<vmem>>, %arg12: memref<1x32xf32, #tpu.memory_space<vmem>>, %arg13: memref<1x32xf32, #tpu.memory_space<vmem>>, %arg14: memref<1x32xf32, #tpu.memory_space<vmem>>, %arg15: memref<2x32x96xf32, #tpu.memory_space<vmem>>, %arg16: memref<2x1x96xf32, #tpu.memory_space<vmem>>, %arg17: memref<2x32x32xf32, #tpu.memory_space<vmem>>, %arg18: memref<2x1x32xf32, #tpu.memory_space<vmem>>, %arg19: memref<2x1x32xf32, #tpu.memory_space<vmem>>, %arg20: memref<2x1x32xf32, #tpu.memory_space<vmem>>, %arg21: memref<2x32x64xf32, #tpu.memory_space<vmem>>, %arg22: memref<2x1x64xf32, #tpu.memory_space<vmem>>, %arg23: memref<2x64x32xf32, #tpu.memory_space<vmem>>, %arg24: memref<2x1x32xf32, #tpu.memory_space<vmem>>, %arg25: memref<2x1x32xf32, #tpu.memory_space<vmem>>, %arg26: memref<2x1x32xf32, #tpu.memory_space<vmem>>, %arg27: memref<1x16x32xf32, #tpu.memory_space<vmem>>) attributes {dimension_semantics = [#tpu.dimension_semantics<parallel>], iteration_bounds = array<i64: 2>, scalar_prefetch = 0 : i64, scratch_operands = 0 : i64, tpu.core_type = #tpu.core_type<tc>, window_params = [{transform_indices = @transform_0, window_bounds = array<i64: 1, 8, 20>}, {transform_indices = @transform_1, window_bounds = array<i64: 1, 8, 24>}, {transform_indices = @transform_2, window_bounds = array<i64: 1, 16, 32>}, {transform_indices = @transform_3, window_bounds = array<i64: 1, 1, 16>}, {pipeline_mode = #tpu.pipeline_mode<synchronous>, transform_indices = @transform_4, window_bounds = array<i64: 1, 20>}, {pipeline_mode = #tpu.pipeline_mode<synchronous>, transform_indices = @transform_5, window_bounds = array<i64: 1, 20>}, {pipeline_mode = #tpu.pipeline_mode<synchronous>, transform_indices = @transform_6, window_bounds = array<i64: 20, 32>}, {pipeline_mode = #tpu.pipeline_mode<synchronous>, transform_indices = @transform_7, window_bounds = array<i64: 1, 32>}, {pipeline_mode = #tpu.pipeline_mode<synchronous>, transform_indices = @transform_8, window_bounds = array<i64: 1, 24>}, {pipeline_mode = #tpu.pipeline_mode<synchronous>, transform_indices = @transform_9, window_bounds = array<i64: 1, 24>}, {pipeline_mode = #tpu.pipeline_mode<synchronous>, transform_indices = @transform_10, window_bounds = array<i64: 24, 32>}, {pipeline_mode = #tpu.pipeline_mode<synchronous>, transform_indices = @transform_11, window_bounds = array<i64: 1, 32>}, {pipeline_mode = #tpu.pipeline_mode<synchronous>, transform_indices = @transform_12, window_bounds = array<i64: 1, 32>}, {pipeline_mode = #tpu.pipeline_mode<synchronous>, transform_indices = @transform_13, window_bounds = array<i64: 1, 32>}, {pipeline_mode = #tpu.pipeline_mode<synchronous>, transform_indices = @transform_14, window_bounds = array<i64: 2, 32, 96>}, {pipeline_mode = #tpu.pipeline_mode<synchronous>, transform_indices = @transform_15, window_bounds = array<i64: 2, 1, 96>}, {pipeline_mode = #tpu.pipeline_mode<synchronous>, transform_indices = @transform_16, window_bounds = array<i64: 2, 32, 32>}, {pipeline_mode = #tpu.pipeline_mode<synchronous>, transform_indices = @transform_17, window_bounds = array<i64: 2, 1, 32>}, {pipeline_mode = #tpu.pipeline_mode<synchronous>, transform_indices = @transform_18, window_bounds = array<i64: 2, 1, 32>}, {pipeline_mode = #tpu.pipeline_mode<synchronous>, transform_indices = @transform_19, window_bounds = array<i64: 2, 1, 32>}, {pipeline_mode = #tpu.pipeline_mode<synchronous>, transform_indices = @transform_20, window_bounds = array<i64: 2, 32, 64>}, {pipeline_mode = #tpu.pipeline_mode<synchronous>, transform_indices = @transform_21, window_bounds = array<i64: 2, 1, 64>}, {pipeline_mode = #tpu.pipeline_mode<synchronous>, transform_indices = @transform_22, window_bounds = array<i64: 2, 64, 32>}, {pipeline_mode = #tpu.pipeline_mode<synchronous>, transform_indices = @transform_23, window_bounds = array<i64: 2, 1, 32>}, {pipeline_mode = #tpu.pipeline_mode<synchronous>, transform_indices = @transform_24, window_bounds = array<i64: 2, 1, 32>}, {pipeline_mode = #tpu.pipeline_mode<synchronous>, transform_indices = @transform_25, window_bounds = array<i64: 2, 1, 32>}, {transform_indices = @transform_26, window_bounds = array<i64: 1, 16, 32>}]} {
    %c0 = arith.constant 0 : index
    %c0_0 = arith.constant 0 : index
    %c0_1 = arith.constant 0 : index
    %0 = vector.load %arg1[%c0, %c0_0, %c0_1] : memref<1x8x20xf32, #tpu.memory_space<vmem>>, vector<1x8x20xf32>
    %1 = vector.shape_cast %0 : vector<1x8x20xf32> to vector<8x20xf32>
    %c0_2 = arith.constant 0 : index
    %c0_3 = arith.constant 0 : index
    %2 = vector.load %arg5[%c0_2, %c0_3] : memref<1x20xf32, #tpu.memory_space<vmem>>, vector<1x20xf32>
    %c0_4 = arith.constant 0 : index
    %c0_5 = arith.constant 0 : index
    %3 = vector.load %arg6[%c0_4, %c0_5] : memref<1x20xf32, #tpu.memory_space<vmem>>, vector<1x20xf32>
    %cst = arith.constant dense<0.000000e+00> : vector<8xf32>
    %4 = vector.multi_reduction <add>, %1, %cst [1] : vector<8x20xf32> to vector<8xf32>
    %5 = vector.shape_cast %4 : vector<8xf32> to vector<8x1xf32>
    %cst_6 = arith.constant 2.000000e+01 : f32
    %6 = vector.broadcast %cst_6 : f32 to vector<8x1xf32>
    %7 = arith.divf %5, %6 : vector<8x1xf32>
    %8 = vector.broadcast %7 : vector<8x1xf32> to vector<8x20xf32>
    %9 = arith.subf %1, %8 : vector<8x20xf32>
    %10 = arith.mulf %9, %9 : vector<8x20xf32>
    %cst_7 = arith.constant dense<0.000000e+00> : vector<8xf32>
    %11 = vector.multi_reduction <add>, %10, %cst_7 [1] : vector<8x20xf32> to vector<8xf32>
    %12 = vector.shape_cast %11 : vector<8xf32> to vector<8x1xf32>
    %cst_8 = arith.constant 2.000000e+01 : f32
    %13 = vector.broadcast %cst_8 : f32 to vector<8x1xf32>
    %14 = arith.divf %12, %13 : vector<8x1xf32>
    %cst_9 = arith.constant 9.99999974E-6 : f32
    %15 = vector.broadcast %cst_9 : f32 to vector<8x1xf32>
    %16 = arith.addf %14, %15 : vector<8x1xf32>
    %17 = math.rsqrt %16 : vector<8x1xf32>
    %18 = vector.broadcast %7 : vector<8x1xf32> to vector<8x20xf32>
    %19 = arith.subf %1, %18 : vector<8x20xf32>
    %20 = vector.broadcast %17 : vector<8x1xf32> to vector<8x20xf32>
    %21 = arith.mulf %19, %20 : vector<8x20xf32>
    %22 = vector.broadcast %2 : vector<1x20xf32> to vector<8x20xf32>
    %23 = arith.mulf %21, %22 : vector<8x20xf32>
    %24 = vector.broadcast %3 : vector<1x20xf32> to vector<8x20xf32>
    %25 = arith.addf %23, %24 : vector<8x20xf32>
    %c0_10 = arith.constant 0 : index
    %c0_11 = arith.constant 0 : index
    %26 = vector.load %arg7[%c0_10, %c0_11] : memref<20x32xf32, #tpu.memory_space<vmem>>, vector<20x32xf32>
    %cst_12 = arith.constant dense<0.000000e+00> : vector<8x32xf32>
    %27 = tpu.matmul %25, %26, %cst_12 {dimension_numbers = #tpu.dot_dimension_numbers<[1], [0], [0], [1], [0, 0, 1, 1], [], []>} : vector<8x20xf32>, vector<20x32xf32>, vector<8x32xf32> -> vector<8x32xf32>
    %c0_13 = arith.constant 0 : index
    %c0_14 = arith.constant 0 : index
    %28 = vector.load %arg8[%c0_13, %c0_14] : memref<1x32xf32, #tpu.memory_space<vmem>>, vector<1x32xf32>
    %29 = vector.broadcast %28 : vector<1x32xf32> to vector<8x32xf32>
    %30 = arith.addf %27, %29 : vector<8x32xf32>
    %cst_15 = arith.constant 0.000000e+00 : f32
    %31 = vector.broadcast %cst_15 : f32 to vector<8x32xf32>
    %32 = arith.maximumf %30, %31 : vector<8x32xf32>
    %c0_16 = arith.constant 0 : index
    %c0_17 = arith.constant 0 : index
    %c0_18 = arith.constant 0 : index
    %33 = vector.load %arg2[%c0_16, %c0_17, %c0_18] : memref<1x8x24xf32, #tpu.memory_space<vmem>>, vector<1x8x24xf32>
    %34 = vector.shape_cast %33 : vector<1x8x24xf32> to vector<8x24xf32>
    %c0_19 = arith.constant 0 : index
    %c0_20 = arith.constant 0 : index
    %35 = vector.load %arg9[%c0_19, %c0_20] : memref<1x24xf32, #tpu.memory_space<vmem>>, vector<1x24xf32>
    %c0_21 = arith.constant 0 : index
    %c0_22 = arith.constant 0 : index
    %36 = vector.load %arg10[%c0_21, %c0_22] : memref<1x24xf32, #tpu.memory_space<vmem>>, vector<1x24xf32>
    %cst_23 = arith.constant dense<0.000000e+00> : vector<8xf32>
    %37 = vector.multi_reduction <add>, %34, %cst_23 [1] : vector<8x24xf32> to vector<8xf32>
    %38 = vector.shape_cast %37 : vector<8xf32> to vector<8x1xf32>
    %cst_24 = arith.constant 2.400000e+01 : f32
    %39 = vector.broadcast %cst_24 : f32 to vector<8x1xf32>
    %40 = arith.divf %38, %39 : vector<8x1xf32>
    %41 = vector.broadcast %40 : vector<8x1xf32> to vector<8x24xf32>
    %42 = arith.subf %34, %41 : vector<8x24xf32>
    %43 = arith.mulf %42, %42 : vector<8x24xf32>
    %cst_25 = arith.constant dense<0.000000e+00> : vector<8xf32>
    %44 = vector.multi_reduction <add>, %43, %cst_25 [1] : vector<8x24xf32> to vector<8xf32>
    %45 = vector.shape_cast %44 : vector<8xf32> to vector<8x1xf32>
    %cst_26 = arith.constant 2.400000e+01 : f32
    %46 = vector.broadcast %cst_26 : f32 to vector<8x1xf32>
    %47 = arith.divf %45, %46 : vector<8x1xf32>
    %cst_27 = arith.constant 9.99999974E-6 : f32
    %48 = vector.broadcast %cst_27 : f32 to vector<8x1xf32>
    %49 = arith.addf %47, %48 : vector<8x1xf32>
    %50 = math.rsqrt %49 : vector<8x1xf32>
    %51 = vector.broadcast %40 : vector<8x1xf32> to vector<8x24xf32>
    %52 = arith.subf %34, %51 : vector<8x24xf32>
    %53 = vector.broadcast %50 : vector<8x1xf32> to vector<8x24xf32>
    %54 = arith.mulf %52, %53 : vector<8x24xf32>
    %55 = vector.broadcast %35 : vector<1x24xf32> to vector<8x24xf32>
    %56 = arith.mulf %54, %55 : vector<8x24xf32>
    %57 = vector.broadcast %36 : vector<1x24xf32> to vector<8x24xf32>
    %58 = arith.addf %56, %57 : vector<8x24xf32>
    %c0_28 = arith.constant 0 : index
    %c0_29 = arith.constant 0 : index
    %59 = vector.load %arg11[%c0_28, %c0_29] : memref<24x32xf32, #tpu.memory_space<vmem>>, vector<24x32xf32>
    %cst_30 = arith.constant dense<0.000000e+00> : vector<8x32xf32>
    %60 = tpu.matmul %58, %59, %cst_30 {dimension_numbers = #tpu.dot_dimension_numbers<[1], [0], [0], [1], [0, 0, 1, 1], [], []>} : vector<8x24xf32>, vector<24x32xf32>, vector<8x32xf32> -> vector<8x32xf32>
    %c0_31 = arith.constant 0 : index
    %c0_32 = arith.constant 0 : index
    %61 = vector.load %arg12[%c0_31, %c0_32] : memref<1x32xf32, #tpu.memory_space<vmem>>, vector<1x32xf32>
    %62 = vector.broadcast %61 : vector<1x32xf32> to vector<8x32xf32>
    %63 = arith.addf %60, %62 : vector<8x32xf32>
    %cst_33 = arith.constant 0.000000e+00 : f32
    %64 = vector.broadcast %cst_33 : f32 to vector<8x32xf32>
    %65 = arith.maximumf %63, %64 : vector<8x32xf32>
    %66 = tpu.concatenate %32, %65 in 0 : vector<8x32xf32>, vector<8x32xf32> -> vector<16x32xf32>
    %c0_34 = arith.constant 0 : index
    %c0_35 = arith.constant 0 : index
    %c0_36 = arith.constant 0 : index
    %67 = vector.load %arg3[%c0_34, %c0_35, %c0_36] : memref<1x16x32xf32, #tpu.memory_space<vmem>>, vector<1x16x32xf32>
    %68 = vector.shape_cast %67 : vector<1x16x32xf32> to vector<16x32xf32>
    %69 = arith.addf %66, %68 : vector<16x32xf32>
    %c0_37 = arith.constant 0 : index
    %c0_38 = arith.constant 0 : index
    %70 = vector.load %arg13[%c0_37, %c0_38] : memref<1x32xf32, #tpu.memory_space<vmem>>, vector<1x32xf32>
    %c0_39 = arith.constant 0 : index
    %c0_40 = arith.constant 0 : index
    %71 = vector.load %arg14[%c0_39, %c0_40] : memref<1x32xf32, #tpu.memory_space<vmem>>, vector<1x32xf32>
    %cst_41 = arith.constant dense<0.000000e+00> : vector<16xf32>
    %72 = vector.multi_reduction <add>, %69, %cst_41 [1] : vector<16x32xf32> to vector<16xf32>
    %73 = vector.shape_cast %72 : vector<16xf32> to vector<16x1xf32>
    %cst_42 = arith.constant 3.200000e+01 : f32
    %74 = vector.broadcast %cst_42 : f32 to vector<16x1xf32>
    %75 = arith.divf %73, %74 : vector<16x1xf32>
    %76 = vector.broadcast %75 : vector<16x1xf32> to vector<16x32xf32>
    %77 = arith.subf %69, %76 : vector<16x32xf32>
    %78 = arith.mulf %77, %77 : vector<16x32xf32>
    %cst_43 = arith.constant dense<0.000000e+00> : vector<16xf32>
    %79 = vector.multi_reduction <add>, %78, %cst_43 [1] : vector<16x32xf32> to vector<16xf32>
    %80 = vector.shape_cast %79 : vector<16xf32> to vector<16x1xf32>
    %cst_44 = arith.constant 3.200000e+01 : f32
    %81 = vector.broadcast %cst_44 : f32 to vector<16x1xf32>
    %82 = arith.divf %80, %81 : vector<16x1xf32>
    %cst_45 = arith.constant 9.99999996E-13 : f32
    %83 = vector.broadcast %cst_45 : f32 to vector<16x1xf32>
    %84 = arith.addf %82, %83 : vector<16x1xf32>
    %85 = math.rsqrt %84 : vector<16x1xf32>
    %86 = vector.broadcast %75 : vector<16x1xf32> to vector<16x32xf32>
    %87 = arith.subf %69, %86 : vector<16x32xf32>
    %88 = vector.broadcast %85 : vector<16x1xf32> to vector<16x32xf32>
    %89 = arith.mulf %87, %88 : vector<16x32xf32>
    %90 = vector.broadcast %70 : vector<1x32xf32> to vector<16x32xf32>
    %91 = arith.mulf %89, %90 : vector<16x32xf32>
    %92 = vector.broadcast %71 : vector<1x32xf32> to vector<16x32xf32>
    %93 = arith.addf %91, %92 : vector<16x32xf32>
    %c0_46 = arith.constant 0 : index
    %c0_47 = arith.constant 0 : index
    %c0_48 = arith.constant 0 : index
    %94 = vector.load %arg4[%c0_46, %c0_47, %c0_48] : memref<1x1x16xf32, #tpu.memory_space<vmem>>, vector<1x1x16xf32>
    %95 = vector.shape_cast %94 : vector<1x1x16xf32> to vector<1x16xf32>
    %cst_49 = arith.constant 1.000000e+00 : f32
    %96 = vector.broadcast %cst_49 : f32 to vector<1x16xf32>
    %97 = arith.subf %96, %95 : vector<1x16xf32>
    %cst_50 = arith.constant -1.000000e+04 : f32
    %98 = vector.broadcast %cst_50 : f32 to vector<1x16xf32>
    %99 = arith.mulf %97, %98 : vector<1x16xf32>
    %100 = vector.shape_cast %99 : vector<1x16xf32> to vector<1x16xf32>
    %101 = vector.broadcast %100 : vector<1x16xf32> to vector<16x16xf32>
    %c0_51 = arith.constant 0 : index
    %c0_52 = arith.constant 0 : index
    %c0_53 = arith.constant 0 : index
    %102 = vector.load %arg15[%c0_51, %c0_52, %c0_53] : memref<2x32x96xf32, #tpu.memory_space<vmem>>, vector<1x32x96xf32>
    %103 = vector.shape_cast %102 : vector<1x32x96xf32> to vector<32x96xf32>
    %cst_54 = arith.constant dense<0.000000e+00> : vector<16x96xf32>
    %104 = tpu.matmul %93, %103, %cst_54 {dimension_numbers = #tpu.dot_dimension_numbers<[1], [0], [0], [1], [0, 0, 1, 1], [], []>} : vector<16x32xf32>, vector<32x96xf32>, vector<16x96xf32> -> vector<16x96xf32>
    %c0_55 = arith.constant 0 : index
    %c0_56 = arith.constant 0 : index
    %c0_57 = arith.constant 0 : index
    %105 = vector.load %arg16[%c0_55, %c0_56, %c0_57] : memref<2x1x96xf32, #tpu.memory_space<vmem>>, vector<1x1x96xf32>
    %106 = vector.shape_cast %105 : vector<1x1x96xf32> to vector<1x96xf32>
    %107 = vector.broadcast %106 : vector<1x96xf32> to vector<16x96xf32>
    %108 = arith.addf %104, %107 : vector<16x96xf32>
    %109 = vector.extract_strided_slice %108 {offsets = [0, 0], sizes = [16, 8], strides = [1, 1]} : vector<16x96xf32> to vector<16x8xf32>
    %110 = vector.extract_strided_slice %108 {offsets = [0, 32], sizes = [16, 8], strides = [1, 1]} : vector<16x96xf32> to vector<16x8xf32>
    %111 = vector.extract_strided_slice %108 {offsets = [0, 64], sizes = [16, 8], strides = [1, 1]} : vector<16x96xf32> to vector<16x8xf32>
    %cst_58 = arith.constant dense<0.000000e+00> : vector<16x16xf32>
    %112 = tpu.matmul %109, %110, %cst_58 {dimension_numbers = #tpu.dot_dimension_numbers<[1], [1], [0], [0], [0, 0, 1, 0], [], []>} : vector<16x8xf32>, vector<16x8xf32>, vector<16x16xf32> -> vector<16x16xf32>
    %113 = arith.addf %112, %101 : vector<16x16xf32>
    %cst_59 = arith.constant dense<0xFF800000> : vector<16xf32>
    %114 = vector.multi_reduction <maximumf>, %113, %cst_59 [1] : vector<16x16xf32> to vector<16xf32>
    %115 = vector.shape_cast %114 : vector<16xf32> to vector<16x1xf32>
    %116 = vector.broadcast %115 : vector<16x1xf32> to vector<16x16xf32>
    %117 = arith.subf %113, %116 : vector<16x16xf32>
    %118 = math.exp %117 : vector<16x16xf32>
    %cst_60 = arith.constant dense<0.000000e+00> : vector<16xf32>
    %119 = vector.multi_reduction <add>, %118, %cst_60 [1] : vector<16x16xf32> to vector<16xf32>
    %120 = vector.shape_cast %119 : vector<16xf32> to vector<16x1xf32>
    %121 = tpu.reciprocal %120 {approx = true} : vector<16x1xf32> -> vector<16x1xf32>
    %122 = vector.broadcast %121 : vector<16x1xf32> to vector<16x16xf32>
    %123 = arith.mulf %118, %122 : vector<16x16xf32>
    %cst_61 = arith.constant dense<0.000000e+00> : vector<16x8xf32>
    %124 = tpu.matmul %123, %111, %cst_61 {dimension_numbers = #tpu.dot_dimension_numbers<[1], [0], [0], [1], [0, 0, 1, 1], [], []>} : vector<16x16xf32>, vector<16x8xf32>, vector<16x8xf32> -> vector<16x8xf32>
    %125 = vector.extract_strided_slice %108 {offsets = [0, 8], sizes = [16, 8], strides = [1, 1]} : vector<16x96xf32> to vector<16x8xf32>
    %126 = vector.extract_strided_slice %108 {offsets = [0, 40], sizes = [16, 8], strides = [1, 1]} : vector<16x96xf32> to vector<16x8xf32>
    %127 = vector.extract_strided_slice %108 {offsets = [0, 72], sizes = [16, 8], strides = [1, 1]} : vector<16x96xf32> to vector<16x8xf32>
    %cst_62 = arith.constant dense<0.000000e+00> : vector<16x16xf32>
    %128 = tpu.matmul %125, %126, %cst_62 {dimension_numbers = #tpu.dot_dimension_numbers<[1], [1], [0], [0], [0, 0, 1, 0], [], []>} : vector<16x8xf32>, vector<16x8xf32>, vector<16x16xf32> -> vector<16x16xf32>
    %129 = arith.addf %128, %101 : vector<16x16xf32>
    %cst_63 = arith.constant dense<0xFF800000> : vector<16xf32>
    %130 = vector.multi_reduction <maximumf>, %129, %cst_63 [1] : vector<16x16xf32> to vector<16xf32>
    %131 = vector.shape_cast %130 : vector<16xf32> to vector<16x1xf32>
    %132 = vector.broadcast %131 : vector<16x1xf32> to vector<16x16xf32>
    %133 = arith.subf %129, %132 : vector<16x16xf32>
    %134 = math.exp %133 : vector<16x16xf32>
    %cst_64 = arith.constant dense<0.000000e+00> : vector<16xf32>
    %135 = vector.multi_reduction <add>, %134, %cst_64 [1] : vector<16x16xf32> to vector<16xf32>
    %136 = vector.shape_cast %135 : vector<16xf32> to vector<16x1xf32>
    %137 = tpu.reciprocal %136 {approx = true} : vector<16x1xf32> -> vector<16x1xf32>
    %138 = vector.broadcast %137 : vector<16x1xf32> to vector<16x16xf32>
    %139 = arith.mulf %134, %138 : vector<16x16xf32>
    %cst_65 = arith.constant dense<0.000000e+00> : vector<16x8xf32>
    %140 = tpu.matmul %139, %127, %cst_65 {dimension_numbers = #tpu.dot_dimension_numbers<[1], [0], [0], [1], [0, 0, 1, 1], [], []>} : vector<16x16xf32>, vector<16x8xf32>, vector<16x8xf32> -> vector<16x8xf32>
    %141 = vector.extract_strided_slice %108 {offsets = [0, 16], sizes = [16, 8], strides = [1, 1]} : vector<16x96xf32> to vector<16x8xf32>
    %142 = vector.extract_strided_slice %108 {offsets = [0, 48], sizes = [16, 8], strides = [1, 1]} : vector<16x96xf32> to vector<16x8xf32>
    %143 = vector.extract_strided_slice %108 {offsets = [0, 80], sizes = [16, 8], strides = [1, 1]} : vector<16x96xf32> to vector<16x8xf32>
    %cst_66 = arith.constant dense<0.000000e+00> : vector<16x16xf32>
    %144 = tpu.matmul %141, %142, %cst_66 {dimension_numbers = #tpu.dot_dimension_numbers<[1], [1], [0], [0], [0, 0, 1, 0], [], []>} : vector<16x8xf32>, vector<16x8xf32>, vector<16x16xf32> -> vector<16x16xf32>
    %145 = arith.addf %144, %101 : vector<16x16xf32>
    %cst_67 = arith.constant dense<0xFF800000> : vector<16xf32>
    %146 = vector.multi_reduction <maximumf>, %145, %cst_67 [1] : vector<16x16xf32> to vector<16xf32>
    %147 = vector.shape_cast %146 : vector<16xf32> to vector<16x1xf32>
    %148 = vector.broadcast %147 : vector<16x1xf32> to vector<16x16xf32>
    %149 = arith.subf %145, %148 : vector<16x16xf32>
    %150 = math.exp %149 : vector<16x16xf32>
    %cst_68 = arith.constant dense<0.000000e+00> : vector<16xf32>
    %151 = vector.multi_reduction <add>, %150, %cst_68 [1] : vector<16x16xf32> to vector<16xf32>
    %152 = vector.shape_cast %151 : vector<16xf32> to vector<16x1xf32>
    %153 = tpu.reciprocal %152 {approx = true} : vector<16x1xf32> -> vector<16x1xf32>
    %154 = vector.broadcast %153 : vector<16x1xf32> to vector<16x16xf32>
    %155 = arith.mulf %150, %154 : vector<16x16xf32>
    %cst_69 = arith.constant dense<0.000000e+00> : vector<16x8xf32>
    %156 = tpu.matmul %155, %143, %cst_69 {dimension_numbers = #tpu.dot_dimension_numbers<[1], [0], [0], [1], [0, 0, 1, 1], [], []>} : vector<16x16xf32>, vector<16x8xf32>, vector<16x8xf32> -> vector<16x8xf32>
    %157 = vector.extract_strided_slice %108 {offsets = [0, 24], sizes = [16, 8], strides = [1, 1]} : vector<16x96xf32> to vector<16x8xf32>
    %158 = vector.extract_strided_slice %108 {offsets = [0, 56], sizes = [16, 8], strides = [1, 1]} : vector<16x96xf32> to vector<16x8xf32>
    %159 = vector.extract_strided_slice %108 {offsets = [0, 88], sizes = [16, 8], strides = [1, 1]} : vector<16x96xf32> to vector<16x8xf32>
    %cst_70 = arith.constant dense<0.000000e+00> : vector<16x16xf32>
    %160 = tpu.matmul %157, %158, %cst_70 {dimension_numbers = #tpu.dot_dimension_numbers<[1], [1], [0], [0], [0, 0, 1, 0], [], []>} : vector<16x8xf32>, vector<16x8xf32>, vector<16x16xf32> -> vector<16x16xf32>
    %161 = arith.addf %160, %101 : vector<16x16xf32>
    %cst_71 = arith.constant dense<0xFF800000> : vector<16xf32>
    %162 = vector.multi_reduction <maximumf>, %161, %cst_71 [1] : vector<16x16xf32> to vector<16xf32>
    %163 = vector.shape_cast %162 : vector<16xf32> to vector<16x1xf32>
    %164 = vector.broadcast %163 : vector<16x1xf32> to vector<16x16xf32>
    %165 = arith.subf %161, %164 : vector<16x16xf32>
    %166 = math.exp %165 : vector<16x16xf32>
    %cst_72 = arith.constant dense<0.000000e+00> : vector<16xf32>
    %167 = vector.multi_reduction <add>, %166, %cst_72 [1] : vector<16x16xf32> to vector<16xf32>
    %168 = vector.shape_cast %167 : vector<16xf32> to vector<16x1xf32>
    %169 = tpu.reciprocal %168 {approx = true} : vector<16x1xf32> -> vector<16x1xf32>
    %170 = vector.broadcast %169 : vector<16x1xf32> to vector<16x16xf32>
    %171 = arith.mulf %166, %170 : vector<16x16xf32>
    %cst_73 = arith.constant dense<0.000000e+00> : vector<16x8xf32>
    %172 = tpu.matmul %171, %159, %cst_73 {dimension_numbers = #tpu.dot_dimension_numbers<[1], [0], [0], [1], [0, 0, 1, 1], [], []>} : vector<16x16xf32>, vector<16x8xf32>, vector<16x8xf32> -> vector<16x8xf32>
    %173 = tpu.concatenate %124, %140, %156, %172 in 1 : vector<16x8xf32>, vector<16x8xf32>, vector<16x8xf32>, vector<16x8xf32> -> vector<16x32xf32>
    %c0_74 = arith.constant 0 : index
    %c0_75 = arith.constant 0 : index
    %c0_76 = arith.constant 0 : index
    %174 = vector.load %arg17[%c0_74, %c0_75, %c0_76] : memref<2x32x32xf32, #tpu.memory_space<vmem>>, vector<1x32x32xf32>
    %175 = vector.shape_cast %174 : vector<1x32x32xf32> to vector<32x32xf32>
    %cst_77 = arith.constant dense<0.000000e+00> : vector<16x32xf32>
    %176 = tpu.matmul %173, %175, %cst_77 {dimension_numbers = #tpu.dot_dimension_numbers<[1], [0], [0], [1], [0, 0, 1, 1], [], []>} : vector<16x32xf32>, vector<32x32xf32>, vector<16x32xf32> -> vector<16x32xf32>
    %c0_78 = arith.constant 0 : index
    %c0_79 = arith.constant 0 : index
    %c0_80 = arith.constant 0 : index
    %177 = vector.load %arg18[%c0_78, %c0_79, %c0_80] : memref<2x1x32xf32, #tpu.memory_space<vmem>>, vector<1x1x32xf32>
    %178 = vector.shape_cast %177 : vector<1x1x32xf32> to vector<1x32xf32>
    %179 = vector.broadcast %178 : vector<1x32xf32> to vector<16x32xf32>
    %180 = arith.addf %176, %179 : vector<16x32xf32>
    %181 = arith.addf %180, %93 : vector<16x32xf32>
    %c0_81 = arith.constant 0 : index
    %c0_82 = arith.constant 0 : index
    %c0_83 = arith.constant 0 : index
    %182 = vector.load %arg19[%c0_81, %c0_82, %c0_83] : memref<2x1x32xf32, #tpu.memory_space<vmem>>, vector<1x1x32xf32>
    %183 = vector.shape_cast %182 : vector<1x1x32xf32> to vector<1x32xf32>
    %c0_84 = arith.constant 0 : index
    %c0_85 = arith.constant 0 : index
    %c0_86 = arith.constant 0 : index
    %184 = vector.load %arg20[%c0_84, %c0_85, %c0_86] : memref<2x1x32xf32, #tpu.memory_space<vmem>>, vector<1x1x32xf32>
    %185 = vector.shape_cast %184 : vector<1x1x32xf32> to vector<1x32xf32>
    %cst_87 = arith.constant dense<0.000000e+00> : vector<16xf32>
    %186 = vector.multi_reduction <add>, %181, %cst_87 [1] : vector<16x32xf32> to vector<16xf32>
    %187 = vector.shape_cast %186 : vector<16xf32> to vector<16x1xf32>
    %cst_88 = arith.constant 3.200000e+01 : f32
    %188 = vector.broadcast %cst_88 : f32 to vector<16x1xf32>
    %189 = arith.divf %187, %188 : vector<16x1xf32>
    %190 = vector.broadcast %189 : vector<16x1xf32> to vector<16x32xf32>
    %191 = arith.subf %181, %190 : vector<16x32xf32>
    %192 = arith.mulf %191, %191 : vector<16x32xf32>
    %cst_89 = arith.constant dense<0.000000e+00> : vector<16xf32>
    %193 = vector.multi_reduction <add>, %192, %cst_89 [1] : vector<16x32xf32> to vector<16xf32>
    %194 = vector.shape_cast %193 : vector<16xf32> to vector<16x1xf32>
    %cst_90 = arith.constant 3.200000e+01 : f32
    %195 = vector.broadcast %cst_90 : f32 to vector<16x1xf32>
    %196 = arith.divf %194, %195 : vector<16x1xf32>
    %cst_91 = arith.constant 9.99999996E-13 : f32
    %197 = vector.broadcast %cst_91 : f32 to vector<16x1xf32>
    %198 = arith.addf %196, %197 : vector<16x1xf32>
    %199 = math.rsqrt %198 : vector<16x1xf32>
    %200 = vector.broadcast %189 : vector<16x1xf32> to vector<16x32xf32>
    %201 = arith.subf %181, %200 : vector<16x32xf32>
    %202 = vector.broadcast %199 : vector<16x1xf32> to vector<16x32xf32>
    %203 = arith.mulf %201, %202 : vector<16x32xf32>
    %204 = vector.broadcast %183 : vector<1x32xf32> to vector<16x32xf32>
    %205 = arith.mulf %203, %204 : vector<16x32xf32>
    %206 = vector.broadcast %185 : vector<1x32xf32> to vector<16x32xf32>
    %207 = arith.addf %205, %206 : vector<16x32xf32>
    %c0_92 = arith.constant 0 : index
    %c0_93 = arith.constant 0 : index
    %c0_94 = arith.constant 0 : index
    %208 = vector.load %arg21[%c0_92, %c0_93, %c0_94] : memref<2x32x64xf32, #tpu.memory_space<vmem>>, vector<1x32x64xf32>
    %209 = vector.shape_cast %208 : vector<1x32x64xf32> to vector<32x64xf32>
    %cst_95 = arith.constant dense<0.000000e+00> : vector<16x64xf32>
    %210 = tpu.matmul %207, %209, %cst_95 {dimension_numbers = #tpu.dot_dimension_numbers<[1], [0], [0], [1], [0, 0, 1, 1], [], []>} : vector<16x32xf32>, vector<32x64xf32>, vector<16x64xf32> -> vector<16x64xf32>
    %c0_96 = arith.constant 0 : index
    %c0_97 = arith.constant 0 : index
    %c0_98 = arith.constant 0 : index
    %211 = vector.load %arg22[%c0_96, %c0_97, %c0_98] : memref<2x1x64xf32, #tpu.memory_space<vmem>>, vector<1x1x64xf32>
    %212 = vector.shape_cast %211 : vector<1x1x64xf32> to vector<1x64xf32>
    %213 = vector.broadcast %212 : vector<1x64xf32> to vector<16x64xf32>
    %214 = arith.addf %210, %213 : vector<16x64xf32>
    %215 = arith.mulf %214, %214 : vector<16x64xf32>
    %216 = arith.mulf %214, %215 : vector<16x64xf32>
    %cst_99 = arith.constant 4.471500e-02 : f32
    %217 = vector.broadcast %cst_99 : f32 to vector<16x64xf32>
    %218 = arith.mulf %217, %216 : vector<16x64xf32>
    %219 = arith.addf %214, %218 : vector<16x64xf32>
    %cst_100 = arith.constant 0.797884583 : f32
    %220 = vector.broadcast %cst_100 : f32 to vector<16x64xf32>
    %221 = arith.mulf %220, %219 : vector<16x64xf32>
    %222 = math.tanh %221 : vector<16x64xf32>
    %cst_101 = arith.constant 1.000000e+00 : f32
    %223 = vector.broadcast %cst_101 : f32 to vector<16x64xf32>
    %224 = arith.addf %223, %222 : vector<16x64xf32>
    %cst_102 = arith.constant 5.000000e-01 : f32
    %225 = vector.broadcast %cst_102 : f32 to vector<16x64xf32>
    %226 = arith.mulf %225, %224 : vector<16x64xf32>
    %227 = arith.mulf %214, %226 : vector<16x64xf32>
    %c0_103 = arith.constant 0 : index
    %c0_104 = arith.constant 0 : index
    %c0_105 = arith.constant 0 : index
    %228 = vector.load %arg23[%c0_103, %c0_104, %c0_105] : memref<2x64x32xf32, #tpu.memory_space<vmem>>, vector<1x64x32xf32>
    %229 = vector.shape_cast %228 : vector<1x64x32xf32> to vector<64x32xf32>
    %cst_106 = arith.constant dense<0.000000e+00> : vector<16x32xf32>
    %230 = tpu.matmul %227, %229, %cst_106 {dimension_numbers = #tpu.dot_dimension_numbers<[1], [0], [0], [1], [0, 0, 1, 1], [], []>} : vector<16x64xf32>, vector<64x32xf32>, vector<16x32xf32> -> vector<16x32xf32>
    %c0_107 = arith.constant 0 : index
    %c0_108 = arith.constant 0 : index
    %c0_109 = arith.constant 0 : index
    %231 = vector.load %arg24[%c0_107, %c0_108, %c0_109] : memref<2x1x32xf32, #tpu.memory_space<vmem>>, vector<1x1x32xf32>
    %232 = vector.shape_cast %231 : vector<1x1x32xf32> to vector<1x32xf32>
    %233 = vector.broadcast %232 : vector<1x32xf32> to vector<16x32xf32>
    %234 = arith.addf %230, %233 : vector<16x32xf32>
    %235 = arith.addf %234, %207 : vector<16x32xf32>
    %c0_110 = arith.constant 0 : index
    %c0_111 = arith.constant 0 : index
    %c0_112 = arith.constant 0 : index
    %236 = vector.load %arg25[%c0_110, %c0_111, %c0_112] : memref<2x1x32xf32, #tpu.memory_space<vmem>>, vector<1x1x32xf32>
    %237 = vector.shape_cast %236 : vector<1x1x32xf32> to vector<1x32xf32>
    %c0_113 = arith.constant 0 : index
    %c0_114 = arith.constant 0 : index
    %c0_115 = arith.constant 0 : index
    %238 = vector.load %arg26[%c0_113, %c0_114, %c0_115] : memref<2x1x32xf32, #tpu.memory_space<vmem>>, vector<1x1x32xf32>
    %239 = vector.shape_cast %238 : vector<1x1x32xf32> to vector<1x32xf32>
    %cst_116 = arith.constant dense<0.000000e+00> : vector<16xf32>
    %240 = vector.multi_reduction <add>, %235, %cst_116 [1] : vector<16x32xf32> to vector<16xf32>
    %241 = vector.shape_cast %240 : vector<16xf32> to vector<16x1xf32>
    %cst_117 = arith.constant 3.200000e+01 : f32
    %242 = vector.broadcast %cst_117 : f32 to vector<16x1xf32>
    %243 = arith.divf %241, %242 : vector<16x1xf32>
    %244 = vector.broadcast %243 : vector<16x1xf32> to vector<16x32xf32>
    %245 = arith.subf %235, %244 : vector<16x32xf32>
    %246 = arith.mulf %245, %245 : vector<16x32xf32>
    %cst_118 = arith.constant dense<0.000000e+00> : vector<16xf32>
    %247 = vector.multi_reduction <add>, %246, %cst_118 [1] : vector<16x32xf32> to vector<16xf32>
    %248 = vector.shape_cast %247 : vector<16xf32> to vector<16x1xf32>
    %cst_119 = arith.constant 3.200000e+01 : f32
    %249 = vector.broadcast %cst_119 : f32 to vector<16x1xf32>
    %250 = arith.divf %248, %249 : vector<16x1xf32>
    %cst_120 = arith.constant 9.99999996E-13 : f32
    %251 = vector.broadcast %cst_120 : f32 to vector<16x1xf32>
    %252 = arith.addf %250, %251 : vector<16x1xf32>
    %253 = math.rsqrt %252 : vector<16x1xf32>
    %254 = vector.broadcast %243 : vector<16x1xf32> to vector<16x32xf32>
    %255 = arith.subf %235, %254 : vector<16x32xf32>
    %256 = vector.broadcast %253 : vector<16x1xf32> to vector<16x32xf32>
    %257 = arith.mulf %255, %256 : vector<16x32xf32>
    %258 = vector.broadcast %237 : vector<1x32xf32> to vector<16x32xf32>
    %259 = arith.mulf %257, %258 : vector<16x32xf32>
    %260 = vector.broadcast %239 : vector<1x32xf32> to vector<16x32xf32>
    %261 = arith.addf %259, %260 : vector<16x32xf32>
    %c1 = arith.constant 1 : index
    %c0_121 = arith.constant 0 : index
    %c0_122 = arith.constant 0 : index
    %262 = vector.load %arg15[%c1, %c0_121, %c0_122] : memref<2x32x96xf32, #tpu.memory_space<vmem>>, vector<1x32x96xf32>
    %263 = vector.shape_cast %262 : vector<1x32x96xf32> to vector<32x96xf32>
    %cst_123 = arith.constant dense<0.000000e+00> : vector<16x96xf32>
    %264 = tpu.matmul %261, %263, %cst_123 {dimension_numbers = #tpu.dot_dimension_numbers<[1], [0], [0], [1], [0, 0, 1, 1], [], []>} : vector<16x32xf32>, vector<32x96xf32>, vector<16x96xf32> -> vector<16x96xf32>
    %c1_124 = arith.constant 1 : index
    %c0_125 = arith.constant 0 : index
    %c0_126 = arith.constant 0 : index
    %265 = vector.load %arg16[%c1_124, %c0_125, %c0_126] : memref<2x1x96xf32, #tpu.memory_space<vmem>>, vector<1x1x96xf32>
    %266 = vector.shape_cast %265 : vector<1x1x96xf32> to vector<1x96xf32>
    %267 = vector.broadcast %266 : vector<1x96xf32> to vector<16x96xf32>
    %268 = arith.addf %264, %267 : vector<16x96xf32>
    %269 = vector.extract_strided_slice %268 {offsets = [0, 0], sizes = [16, 8], strides = [1, 1]} : vector<16x96xf32> to vector<16x8xf32>
    %270 = vector.extract_strided_slice %268 {offsets = [0, 32], sizes = [16, 8], strides = [1, 1]} : vector<16x96xf32> to vector<16x8xf32>
    %271 = vector.extract_strided_slice %268 {offsets = [0, 64], sizes = [16, 8], strides = [1, 1]} : vector<16x96xf32> to vector<16x8xf32>
    %cst_127 = arith.constant dense<0.000000e+00> : vector<16x16xf32>
    %272 = tpu.matmul %269, %270, %cst_127 {dimension_numbers = #tpu.dot_dimension_numbers<[1], [1], [0], [0], [0, 0, 1, 0], [], []>} : vector<16x8xf32>, vector<16x8xf32>, vector<16x16xf32> -> vector<16x16xf32>
    %273 = arith.addf %272, %101 : vector<16x16xf32>
    %cst_128 = arith.constant dense<0xFF800000> : vector<16xf32>
    %274 = vector.multi_reduction <maximumf>, %273, %cst_128 [1] : vector<16x16xf32> to vector<16xf32>
    %275 = vector.shape_cast %274 : vector<16xf32> to vector<16x1xf32>
    %276 = vector.broadcast %275 : vector<16x1xf32> to vector<16x16xf32>
    %277 = arith.subf %273, %276 : vector<16x16xf32>
    %278 = math.exp %277 : vector<16x16xf32>
    %cst_129 = arith.constant dense<0.000000e+00> : vector<16xf32>
    %279 = vector.multi_reduction <add>, %278, %cst_129 [1] : vector<16x16xf32> to vector<16xf32>
    %280 = vector.shape_cast %279 : vector<16xf32> to vector<16x1xf32>
    %281 = tpu.reciprocal %280 {approx = true} : vector<16x1xf32> -> vector<16x1xf32>
    %282 = vector.broadcast %281 : vector<16x1xf32> to vector<16x16xf32>
    %283 = arith.mulf %278, %282 : vector<16x16xf32>
    %cst_130 = arith.constant dense<0.000000e+00> : vector<16x8xf32>
    %284 = tpu.matmul %283, %271, %cst_130 {dimension_numbers = #tpu.dot_dimension_numbers<[1], [0], [0], [1], [0, 0, 1, 1], [], []>} : vector<16x16xf32>, vector<16x8xf32>, vector<16x8xf32> -> vector<16x8xf32>
    %285 = vector.extract_strided_slice %268 {offsets = [0, 8], sizes = [16, 8], strides = [1, 1]} : vector<16x96xf32> to vector<16x8xf32>
    %286 = vector.extract_strided_slice %268 {offsets = [0, 40], sizes = [16, 8], strides = [1, 1]} : vector<16x96xf32> to vector<16x8xf32>
    %287 = vector.extract_strided_slice %268 {offsets = [0, 72], sizes = [16, 8], strides = [1, 1]} : vector<16x96xf32> to vector<16x8xf32>
    %cst_131 = arith.constant dense<0.000000e+00> : vector<16x16xf32>
    %288 = tpu.matmul %285, %286, %cst_131 {dimension_numbers = #tpu.dot_dimension_numbers<[1], [1], [0], [0], [0, 0, 1, 0], [], []>} : vector<16x8xf32>, vector<16x8xf32>, vector<16x16xf32> -> vector<16x16xf32>
    %289 = arith.addf %288, %101 : vector<16x16xf32>
    %cst_132 = arith.constant dense<0xFF800000> : vector<16xf32>
    %290 = vector.multi_reduction <maximumf>, %289, %cst_132 [1] : vector<16x16xf32> to vector<16xf32>
    %291 = vector.shape_cast %290 : vector<16xf32> to vector<16x1xf32>
    %292 = vector.broadcast %291 : vector<16x1xf32> to vector<16x16xf32>
    %293 = arith.subf %289, %292 : vector<16x16xf32>
    %294 = math.exp %293 : vector<16x16xf32>
    %cst_133 = arith.constant dense<0.000000e+00> : vector<16xf32>
    %295 = vector.multi_reduction <add>, %294, %cst_133 [1] : vector<16x16xf32> to vector<16xf32>
    %296 = vector.shape_cast %295 : vector<16xf32> to vector<16x1xf32>
    %297 = tpu.reciprocal %296 {approx = true} : vector<16x1xf32> -> vector<16x1xf32>
    %298 = vector.broadcast %297 : vector<16x1xf32> to vector<16x16xf32>
    %299 = arith.mulf %294, %298 : vector<16x16xf32>
    %cst_134 = arith.constant dense<0.000000e+00> : vector<16x8xf32>
    %300 = tpu.matmul %299, %287, %cst_134 {dimension_numbers = #tpu.dot_dimension_numbers<[1], [0], [0], [1], [0, 0, 1, 1], [], []>} : vector<16x16xf32>, vector<16x8xf32>, vector<16x8xf32> -> vector<16x8xf32>
    %301 = vector.extract_strided_slice %268 {offsets = [0, 16], sizes = [16, 8], strides = [1, 1]} : vector<16x96xf32> to vector<16x8xf32>
    %302 = vector.extract_strided_slice %268 {offsets = [0, 48], sizes = [16, 8], strides = [1, 1]} : vector<16x96xf32> to vector<16x8xf32>
    %303 = vector.extract_strided_slice %268 {offsets = [0, 80], sizes = [16, 8], strides = [1, 1]} : vector<16x96xf32> to vector<16x8xf32>
    %cst_135 = arith.constant dense<0.000000e+00> : vector<16x16xf32>
    %304 = tpu.matmul %301, %302, %cst_135 {dimension_numbers = #tpu.dot_dimension_numbers<[1], [1], [0], [0], [0, 0, 1, 0], [], []>} : vector<16x8xf32>, vector<16x8xf32>, vector<16x16xf32> -> vector<16x16xf32>
    %305 = arith.addf %304, %101 : vector<16x16xf32>
    %cst_136 = arith.constant dense<0xFF800000> : vector<16xf32>
    %306 = vector.multi_reduction <maximumf>, %305, %cst_136 [1] : vector<16x16xf32> to vector<16xf32>
    %307 = vector.shape_cast %306 : vector<16xf32> to vector<16x1xf32>
    %308 = vector.broadcast %307 : vector<16x1xf32> to vector<16x16xf32>
    %309 = arith.subf %305, %308 : vector<16x16xf32>
    %310 = math.exp %309 : vector<16x16xf32>
    %cst_137 = arith.constant dense<0.000000e+00> : vector<16xf32>
    %311 = vector.multi_reduction <add>, %310, %cst_137 [1] : vector<16x16xf32> to vector<16xf32>
    %312 = vector.shape_cast %311 : vector<16xf32> to vector<16x1xf32>
    %313 = tpu.reciprocal %312 {approx = true} : vector<16x1xf32> -> vector<16x1xf32>
    %314 = vector.broadcast %313 : vector<16x1xf32> to vector<16x16xf32>
    %315 = arith.mulf %310, %314 : vector<16x16xf32>
    %cst_138 = arith.constant dense<0.000000e+00> : vector<16x8xf32>
    %316 = tpu.matmul %315, %303, %cst_138 {dimension_numbers = #tpu.dot_dimension_numbers<[1], [0], [0], [1], [0, 0, 1, 1], [], []>} : vector<16x16xf32>, vector<16x8xf32>, vector<16x8xf32> -> vector<16x8xf32>
    %317 = vector.extract_strided_slice %268 {offsets = [0, 24], sizes = [16, 8], strides = [1, 1]} : vector<16x96xf32> to vector<16x8xf32>
    %318 = vector.extract_strided_slice %268 {offsets = [0, 56], sizes = [16, 8], strides = [1, 1]} : vector<16x96xf32> to vector<16x8xf32>
    %319 = vector.extract_strided_slice %268 {offsets = [0, 88], sizes = [16, 8], strides = [1, 1]} : vector<16x96xf32> to vector<16x8xf32>
    %cst_139 = arith.constant dense<0.000000e+00> : vector<16x16xf32>
    %320 = tpu.matmul %317, %318, %cst_139 {dimension_numbers = #tpu.dot_dimension_numbers<[1], [1], [0], [0], [0, 0, 1, 0], [], []>} : vector<16x8xf32>, vector<16x8xf32>, vector<16x16xf32> -> vector<16x16xf32>
    %321 = arith.addf %320, %101 : vector<16x16xf32>
    %cst_140 = arith.constant dense<0xFF800000> : vector<16xf32>
    %322 = vector.multi_reduction <maximumf>, %321, %cst_140 [1] : vector<16x16xf32> to vector<16xf32>
    %323 = vector.shape_cast %322 : vector<16xf32> to vector<16x1xf32>
    %324 = vector.broadcast %323 : vector<16x1xf32> to vector<16x16xf32>
    %325 = arith.subf %321, %324 : vector<16x16xf32>
    %326 = math.exp %325 : vector<16x16xf32>
    %cst_141 = arith.constant dense<0.000000e+00> : vector<16xf32>
    %327 = vector.multi_reduction <add>, %326, %cst_141 [1] : vector<16x16xf32> to vector<16xf32>
    %328 = vector.shape_cast %327 : vector<16xf32> to vector<16x1xf32>
    %329 = tpu.reciprocal %328 {approx = true} : vector<16x1xf32> -> vector<16x1xf32>
    %330 = vector.broadcast %329 : vector<16x1xf32> to vector<16x16xf32>
    %331 = arith.mulf %326, %330 : vector<16x16xf32>
    %cst_142 = arith.constant dense<0.000000e+00> : vector<16x8xf32>
    %332 = tpu.matmul %331, %319, %cst_142 {dimension_numbers = #tpu.dot_dimension_numbers<[1], [0], [0], [1], [0, 0, 1, 1], [], []>} : vector<16x16xf32>, vector<16x8xf32>, vector<16x8xf32> -> vector<16x8xf32>
    %333 = tpu.concatenate %284, %300, %316, %332 in 1 : vector<16x8xf32>, vector<16x8xf32>, vector<16x8xf32>, vector<16x8xf32> -> vector<16x32xf32>
    %c1_143 = arith.constant 1 : index
    %c0_144 = arith.constant 0 : index
    %c0_145 = arith.constant 0 : index
    %334 = vector.load %arg17[%c1_143, %c0_144, %c0_145] : memref<2x32x32xf32, #tpu.memory_space<vmem>>, vector<1x32x32xf32>
    %335 = vector.shape_cast %334 : vector<1x32x32xf32> to vector<32x32xf32>
    %cst_146 = arith.constant dense<0.000000e+00> : vector<16x32xf32>
    %336 = tpu.matmul %333, %335, %cst_146 {dimension_numbers = #tpu.dot_dimension_numbers<[1], [0], [0], [1], [0, 0, 1, 1], [], []>} : vector<16x32xf32>, vector<32x32xf32>, vector<16x32xf32> -> vector<16x32xf32>
    %c1_147 = arith.constant 1 : index
    %c0_148 = arith.constant 0 : index
    %c0_149 = arith.constant 0 : index
    %337 = vector.load %arg18[%c1_147, %c0_148, %c0_149] : memref<2x1x32xf32, #tpu.memory_space<vmem>>, vector<1x1x32xf32>
    %338 = vector.shape_cast %337 : vector<1x1x32xf32> to vector<1x32xf32>
    %339 = vector.broadcast %338 : vector<1x32xf32> to vector<16x32xf32>
    %340 = arith.addf %336, %339 : vector<16x32xf32>
    %341 = arith.addf %340, %261 : vector<16x32xf32>
    %c1_150 = arith.constant 1 : index
    %c0_151 = arith.constant 0 : index
    %c0_152 = arith.constant 0 : index
    %342 = vector.load %arg19[%c1_150, %c0_151, %c0_152] : memref<2x1x32xf32, #tpu.memory_space<vmem>>, vector<1x1x32xf32>
    %343 = vector.shape_cast %342 : vector<1x1x32xf32> to vector<1x32xf32>
    %c1_153 = arith.constant 1 : index
    %c0_154 = arith.constant 0 : index
    %c0_155 = arith.constant 0 : index
    %344 = vector.load %arg20[%c1_153, %c0_154, %c0_155] : memref<2x1x32xf32, #tpu.memory_space<vmem>>, vector<1x1x32xf32>
    %345 = vector.shape_cast %344 : vector<1x1x32xf32> to vector<1x32xf32>
    %cst_156 = arith.constant dense<0.000000e+00> : vector<16xf32>
    %346 = vector.multi_reduction <add>, %341, %cst_156 [1] : vector<16x32xf32> to vector<16xf32>
    %347 = vector.shape_cast %346 : vector<16xf32> to vector<16x1xf32>
    %cst_157 = arith.constant 3.200000e+01 : f32
    %348 = vector.broadcast %cst_157 : f32 to vector<16x1xf32>
    %349 = arith.divf %347, %348 : vector<16x1xf32>
    %350 = vector.broadcast %349 : vector<16x1xf32> to vector<16x32xf32>
    %351 = arith.subf %341, %350 : vector<16x32xf32>
    %352 = arith.mulf %351, %351 : vector<16x32xf32>
    %cst_158 = arith.constant dense<0.000000e+00> : vector<16xf32>
    %353 = vector.multi_reduction <add>, %352, %cst_158 [1] : vector<16x32xf32> to vector<16xf32>
    %354 = vector.shape_cast %353 : vector<16xf32> to vector<16x1xf32>
    %cst_159 = arith.constant 3.200000e+01 : f32
    %355 = vector.broadcast %cst_159 : f32 to vector<16x1xf32>
    %356 = arith.divf %354, %355 : vector<16x1xf32>
    %cst_160 = arith.constant 9.99999996E-13 : f32
    %357 = vector.broadcast %cst_160 : f32 to vector<16x1xf32>
    %358 = arith.addf %356, %357 : vector<16x1xf32>
    %359 = math.rsqrt %358 : vector<16x1xf32>
    %360 = vector.broadcast %349 : vector<16x1xf32> to vector<16x32xf32>
    %361 = arith.subf %341, %360 : vector<16x32xf32>
    %362 = vector.broadcast %359 : vector<16x1xf32> to vector<16x32xf32>
    %363 = arith.mulf %361, %362 : vector<16x32xf32>
    %364 = vector.broadcast %343 : vector<1x32xf32> to vector<16x32xf32>
    %365 = arith.mulf %363, %364 : vector<16x32xf32>
    %366 = vector.broadcast %345 : vector<1x32xf32> to vector<16x32xf32>
    %367 = arith.addf %365, %366 : vector<16x32xf32>
    %c1_161 = arith.constant 1 : index
    %c0_162 = arith.constant 0 : index
    %c0_163 = arith.constant 0 : index
    %368 = vector.load %arg21[%c1_161, %c0_162, %c0_163] : memref<2x32x64xf32, #tpu.memory_space<vmem>>, vector<1x32x64xf32>
    %369 = vector.shape_cast %368 : vector<1x32x64xf32> to vector<32x64xf32>
    %cst_164 = arith.constant dense<0.000000e+00> : vector<16x64xf32>
    %370 = tpu.matmul %367, %369, %cst_164 {dimension_numbers = #tpu.dot_dimension_numbers<[1], [0], [0], [1], [0, 0, 1, 1], [], []>} : vector<16x32xf32>, vector<32x64xf32>, vector<16x64xf32> -> vector<16x64xf32>
    %c1_165 = arith.constant 1 : index
    %c0_166 = arith.constant 0 : index
    %c0_167 = arith.constant 0 : index
    %371 = vector.load %arg22[%c1_165, %c0_166, %c0_167] : memref<2x1x64xf32, #tpu.memory_space<vmem>>, vector<1x1x64xf32>
    %372 = vector.shape_cast %371 : vector<1x1x64xf32> to vector<1x64xf32>
    %373 = vector.broadcast %372 : vector<1x64xf32> to vector<16x64xf32>
    %374 = arith.addf %370, %373 : vector<16x64xf32>
    %375 = arith.mulf %374, %374 : vector<16x64xf32>
    %376 = arith.mulf %374, %375 : vector<16x64xf32>
    %cst_168 = arith.constant 4.471500e-02 : f32
    %377 = vector.broadcast %cst_168 : f32 to vector<16x64xf32>
    %378 = arith.mulf %377, %376 : vector<16x64xf32>
    %379 = arith.addf %374, %378 : vector<16x64xf32>
    %cst_169 = arith.constant 0.797884583 : f32
    %380 = vector.broadcast %cst_169 : f32 to vector<16x64xf32>
    %381 = arith.mulf %380, %379 : vector<16x64xf32>
    %382 = math.tanh %381 : vector<16x64xf32>
    %cst_170 = arith.constant 1.000000e+00 : f32
    %383 = vector.broadcast %cst_170 : f32 to vector<16x64xf32>
    %384 = arith.addf %383, %382 : vector<16x64xf32>
    %cst_171 = arith.constant 5.000000e-01 : f32
    %385 = vector.broadcast %cst_171 : f32 to vector<16x64xf32>
    %386 = arith.mulf %385, %384 : vector<16x64xf32>
    %387 = arith.mulf %374, %386 : vector<16x64xf32>
    %c1_172 = arith.constant 1 : index
    %c0_173 = arith.constant 0 : index
    %c0_174 = arith.constant 0 : index
    %388 = vector.load %arg23[%c1_172, %c0_173, %c0_174] : memref<2x64x32xf32, #tpu.memory_space<vmem>>, vector<1x64x32xf32>
    %389 = vector.shape_cast %388 : vector<1x64x32xf32> to vector<64x32xf32>
    %cst_175 = arith.constant dense<0.000000e+00> : vector<16x32xf32>
    %390 = tpu.matmul %387, %389, %cst_175 {dimension_numbers = #tpu.dot_dimension_numbers<[1], [0], [0], [1], [0, 0, 1, 1], [], []>} : vector<16x64xf32>, vector<64x32xf32>, vector<16x32xf32> -> vector<16x32xf32>
    %c1_176 = arith.constant 1 : index
    %c0_177 = arith.constant 0 : index
    %c0_178 = arith.constant 0 : index
    %391 = vector.load %arg24[%c1_176, %c0_177, %c0_178] : memref<2x1x32xf32, #tpu.memory_space<vmem>>, vector<1x1x32xf32>
    %392 = vector.shape_cast %391 : vector<1x1x32xf32> to vector<1x32xf32>
    %393 = vector.broadcast %392 : vector<1x32xf32> to vector<16x32xf32>
    %394 = arith.addf %390, %393 : vector<16x32xf32>
    %395 = arith.addf %394, %367 : vector<16x32xf32>
    %c1_179 = arith.constant 1 : index
    %c0_180 = arith.constant 0 : index
    %c0_181 = arith.constant 0 : index
    %396 = vector.load %arg25[%c1_179, %c0_180, %c0_181] : memref<2x1x32xf32, #tpu.memory_space<vmem>>, vector<1x1x32xf32>
    %397 = vector.shape_cast %396 : vector<1x1x32xf32> to vector<1x32xf32>
    %c1_182 = arith.constant 1 : index
    %c0_183 = arith.constant 0 : index
    %c0_184 = arith.constant 0 : index
    %398 = vector.load %arg26[%c1_182, %c0_183, %c0_184] : memref<2x1x32xf32, #tpu.memory_space<vmem>>, vector<1x1x32xf32>
    %399 = vector.shape_cast %398 : vector<1x1x32xf32> to vector<1x32xf32>
    %cst_185 = arith.constant dense<0.000000e+00> : vector<16xf32>
    %400 = vector.multi_reduction <add>, %395, %cst_185 [1] : vector<16x32xf32> to vector<16xf32>
    %401 = vector.shape_cast %400 : vector<16xf32> to vector<16x1xf32>
    %cst_186 = arith.constant 3.200000e+01 : f32
    %402 = vector.broadcast %cst_186 : f32 to vector<16x1xf32>
    %403 = arith.divf %401, %402 : vector<16x1xf32>
    %404 = vector.broadcast %403 : vector<16x1xf32> to vector<16x32xf32>
    %405 = arith.subf %395, %404 : vector<16x32xf32>
    %406 = arith.mulf %405, %405 : vector<16x32xf32>
    %cst_187 = arith.constant dense<0.000000e+00> : vector<16xf32>
    %407 = vector.multi_reduction <add>, %406, %cst_187 [1] : vector<16x32xf32> to vector<16xf32>
    %408 = vector.shape_cast %407 : vector<16xf32> to vector<16x1xf32>
    %cst_188 = arith.constant 3.200000e+01 : f32
    %409 = vector.broadcast %cst_188 : f32 to vector<16x1xf32>
    %410 = arith.divf %408, %409 : vector<16x1xf32>
    %cst_189 = arith.constant 9.99999996E-13 : f32
    %411 = vector.broadcast %cst_189 : f32 to vector<16x1xf32>
    %412 = arith.addf %410, %411 : vector<16x1xf32>
    %413 = math.rsqrt %412 : vector<16x1xf32>
    %414 = vector.broadcast %403 : vector<16x1xf32> to vector<16x32xf32>
    %415 = arith.subf %395, %414 : vector<16x32xf32>
    %416 = vector.broadcast %413 : vector<16x1xf32> to vector<16x32xf32>
    %417 = arith.mulf %415, %416 : vector<16x32xf32>
    %418 = vector.broadcast %397 : vector<1x32xf32> to vector<16x32xf32>
    %419 = arith.mulf %417, %418 : vector<16x32xf32>
    %420 = vector.broadcast %399 : vector<1x32xf32> to vector<16x32xf32>
    %421 = arith.addf %419, %420 : vector<16x32xf32>
    %c0_190 = arith.constant 0 : index
    %c0_191 = arith.constant 0 : index
    %c0_192 = arith.constant 0 : index
    %422 = vector.load %arg27[%c0_190, %c0_191, %c0_192] : memref<1x16x32xf32, #tpu.memory_space<vmem>>, vector<1x16x32xf32>
    %423 = vector.shape_cast %422 : vector<1x16x32xf32> to vector<16x32xf32>
    %424 = vector.shape_cast %421 : vector<16x32xf32> to vector<1x16x32xf32>
    tpu.vector_store %arg27[%c0_190, %c0_191, %c0_192], %424 {strides = array<i32>} : memref<1x16x32xf32, #tpu.memory_space<vmem>>, vector<1x16x32xf32>,
    return
  }
  func.func @transform_0(%arg0: i32) -> (i32, i32, i32) {
    %c0_i32 = arith.constant 0 : i32
    %c0_i32_0 = arith.constant 0 : i32
    %c0_i32_1 = arith.constant 0 : i32
    return %arg0, %c0_i32, %c0_i32_0 : i32, i32, i32
  }
  func.func @transform_1(%arg0: i32) -> (i32, i32, i32) {
    %c0_i32 = arith.constant 0 : i32
    %c0_i32_0 = arith.constant 0 : i32
    %c0_i32_1 = arith.constant 0 : i32
    return %arg0, %c0_i32, %c0_i32_0 : i32, i32, i32
  }
  func.func @transform_2(%arg0: i32) -> (i32, i32, i32) {
    %c0_i32 = arith.constant 0 : i32
    %c0_i32_0 = arith.constant 0 : i32
    %c0_i32_1 = arith.constant 0 : i32
    return %arg0, %c0_i32, %c0_i32_0 : i32, i32, i32
  }
  func.func @transform_3(%arg0: i32) -> (i32, i32, i32) {
    %c0_i32 = arith.constant 0 : i32
    %c0_i32_0 = arith.constant 0 : i32
    %c0_i32_1 = arith.constant 0 : i32
    return %arg0, %c0_i32, %c0_i32_0 : i32, i32, i32
  }
  func.func @transform_4(%arg0: i32) -> (i32, i32) {
    %c0_i32 = arith.constant 0 : i32
    %c0_i32_0 = arith.constant 0 : i32
    %c0_i32_1 = arith.constant 0 : i32
    return %c0_i32, %c0_i32_0 : i32, i32
  }
  func.func @transform_5(%arg0: i32) -> (i32, i32) {
    %c0_i32 = arith.constant 0 : i32
    %c0_i32_0 = arith.constant 0 : i32
    %c0_i32_1 = arith.constant 0 : i32
    return %c0_i32, %c0_i32_0 : i32, i32
  }
  func.func @transform_6(%arg0: i32) -> (i32, i32) {
    %c0_i32 = arith.constant 0 : i32
    %c0_i32_0 = arith.constant 0 : i32
    %c0_i32_1 = arith.constant 0 : i32
    return %c0_i32, %c0_i32_0 : i32, i32
  }
  func.func @transform_7(%arg0: i32) -> (i32, i32) {
    %c0_i32 = arith.constant 0 : i32
    %c0_i32_0 = arith.constant 0 : i32
    %c0_i32_1 = arith.constant 0 : i32
    return %c0_i32, %c0_i32_0 : i32, i32
  }
  func.func @transform_8(%arg0: i32) -> (i32, i32) {
    %c0_i32 = arith.constant 0 : i32
    %c0_i32_0 = arith.constant 0 : i32
    %c0_i32_1 = arith.constant 0 : i32
    return %c0_i32, %c0_i32_0 : i32, i32
  }
  func.func @transform_9(%arg0: i32) -> (i32, i32) {
    %c0_i32 = arith.constant 0 : i32
    %c0_i32_0 = arith.constant 0 : i32
    %c0_i32_1 = arith.constant 0 : i32
    return %c0_i32, %c0_i32_0 : i32, i32
  }
  func.func @transform_10(%arg0: i32) -> (i32, i32) {
    %c0_i32 = arith.constant 0 : i32
    %c0_i32_0 = arith.constant 0 : i32
    %c0_i32_1 = arith.constant 0 : i32
    return %c0_i32, %c0_i32_0 : i32, i32
  }
  func.func @transform_11(%arg0: i32) -> (i32, i32) {
    %c0_i32 = arith.constant 0 : i32
    %c0_i32_0 = arith.constant 0 : i32
    %c0_i32_1 = arith.constant 0 : i32
    return %c0_i32, %c0_i32_0 : i32, i32
  }
  func.func @transform_12(%arg0: i32) -> (i32, i32) {
    %c0_i32 = arith.constant 0 : i32
    %c0_i32_0 = arith.constant 0 : i32
    %c0_i32_1 = arith.constant 0 : i32
    return %c0_i32, %c0_i32_0 : i32, i32
  }
  func.func @transform_13(%arg0: i32) -> (i32, i32) {
    %c0_i32 = arith.constant 0 : i32
    %c0_i32_0 = arith.constant 0 : i32
    %c0_i32_1 = arith.constant 0 : i32
    return %c0_i32, %c0_i32_0 : i32, i32
  }
  func.func @transform_14(%arg0: i32) -> (i32, i32, i32) {
    %c0_i32 = arith.constant 0 : i32
    %c0_i32_0 = arith.constant 0 : i32
    %c0_i32_1 = arith.constant 0 : i32
    %c0_i32_2 = arith.constant 0 : i32
    return %c0_i32, %c0_i32_0, %c0_i32_1 : i32, i32, i32
  }
  func.func @transform_15(%arg0: i32) -> (i32, i32, i32) {
    %c0_i32 = arith.constant 0 : i32
    %c0_i32_0 = arith.constant 0 : i32
    %c0_i32_1 = arith.constant 0 : i32
    %c0_i32_2 = arith.constant 0 : i32
    return %c0_i32, %c0_i32_0, %c0_i32_1 : i32, i32, i32
  }
  func.func @transform_16(%arg0: i32) -> (i32, i32, i32) {
    %c0_i32 = arith.constant 0 : i32
    %c0_i32_0 = arith.constant 0 : i32
    %c0_i32_1 = arith.constant 0 : i32
    %c0_i32_2 = arith.constant 0 : i32
    return %c0_i32, %c0_i32_0, %c0_i32_1 : i32, i32, i32
  }
  func.func @transform_17(%arg0: i32) -> (i32, i32, i32) {
    %c0_i32 = arith.constant 0 : i32
    %c0_i32_0 = arith.constant 0 : i32
    %c0_i32_1 = arith.constant 0 : i32
    %c0_i32_2 = arith.constant 0 : i32
    return %c0_i32, %c0_i32_0, %c0_i32_1 : i32, i32, i32
  }
  func.func @transform_18(%arg0: i32) -> (i32, i32, i32) {
    %c0_i32 = arith.constant 0 : i32
    %c0_i32_0 = arith.constant 0 : i32
    %c0_i32_1 = arith.constant 0 : i32
    %c0_i32_2 = arith.constant 0 : i32
    return %c0_i32, %c0_i32_0, %c0_i32_1 : i32, i32, i32
  }
  func.func @transform_19(%arg0: i32) -> (i32, i32, i32) {
    %c0_i32 = arith.constant 0 : i32
    %c0_i32_0 = arith.constant 0 : i32
    %c0_i32_1 = arith.constant 0 : i32
    %c0_i32_2 = arith.constant 0 : i32
    return %c0_i32, %c0_i32_0, %c0_i32_1 : i32, i32, i32
  }
  func.func @transform_20(%arg0: i32) -> (i32, i32, i32) {
    %c0_i32 = arith.constant 0 : i32
    %c0_i32_0 = arith.constant 0 : i32
    %c0_i32_1 = arith.constant 0 : i32
    %c0_i32_2 = arith.constant 0 : i32
    return %c0_i32, %c0_i32_0, %c0_i32_1 : i32, i32, i32
  }
  func.func @transform_21(%arg0: i32) -> (i32, i32, i32) {
    %c0_i32 = arith.constant 0 : i32
    %c0_i32_0 = arith.constant 0 : i32
    %c0_i32_1 = arith.constant 0 : i32
    %c0_i32_2 = arith.constant 0 : i32
    return %c0_i32, %c0_i32_0, %c0_i32_1 : i32, i32, i32
  }
  func.func @transform_22(%arg0: i32) -> (i32, i32, i32) {
    %c0_i32 = arith.constant 0 : i32
    %c0_i32_0 = arith.constant 0 : i32
    %c0_i32_1 = arith.constant 0 : i32
    %c0_i32_2 = arith.constant 0 : i32
    return %c0_i32, %c0_i32_0, %c0_i32_1 : i32, i32, i32
  }
  func.func @transform_23(%arg0: i32) -> (i32, i32, i32) {
    %c0_i32 = arith.constant 0 : i32
    %c0_i32_0 = arith.constant 0 : i32
    %c0_i32_1 = arith.constant 0 : i32
    %c0_i32_2 = arith.constant 0 : i32
    return %c0_i32, %c0_i32_0, %c0_i32_1 : i32, i32, i32
  }
  func.func @transform_24(%arg0: i32) -> (i32, i32, i32) {
    %c0_i32 = arith.constant 0 : i32
    %c0_i32_0 = arith.constant 0 : i32
    %c0_i32_1 = arith.constant 0 : i32
    %c0_i32_2 = arith.constant 0 : i32
    return %c0_i32, %c0_i32_0, %c0_i32_1 : i32, i32, i32
  }
  func.func @transform_25(%arg0: i32) -> (i32, i32, i32) {
    %c0_i32 = arith.constant 0 : i32
    %c0_i32_0 = arith.constant 0 : i32
    %c0_i32_1 = arith.constant 0 : i32
    %c0_i32_2 = arith.constant 0 : i32
    return %c0_i32, %c0_i32_0, %c0_i32_1 : i32, i32, i32
  }
  func.func @transform_26(%arg0: i32) -> (i32, i32, i32) {
    %c0_i32 = arith.constant 0 : i32
    %c0_i32_0 = arith.constant 0 : i32
    %c0_i32_1 = arith.constant 0 : i32
    return %arg0, %c0_i32, %c0_i32_0 : i32, i32, i32
  }
}

</mosaic_0001>

<llo_original>
// kernel: mma_forward.1
$region0: #{mma_forward.1}
  #allocation0 [shape = 'u32[]', space=smem, size = 0x4, offset = 0x4, fixed_abs, tag = 'smem constant byte address 0x4 - core index']
  #allocation1 [shape = 'u32[144,128]{1,0:T(1,128)}', space=vmem, size = 0x12000, scoped, tag = 'internal scratch']
  %s0 = inlined_call_operand.vmem [shape: f32[2,8,20], index: 0, kind: input, shape index: {}]
  %s1 = inlined_call_operand.vmem [shape: f32[2,8,24], index: 1, kind: input, shape index: {}]
  %s2 = inlined_call_operand.vmem [shape: f32[2,16,32], index: 2, kind: input, shape index: {}]
  %s3 = inlined_call_operand.vmem [shape: f32[2,1,16], index: 3, kind: input, shape index: {}]
  %s4 = inlined_call_operand.vmem [shape: f32[1,20], index: 4, kind: input, shape index: {}]
  %s5 = inlined_call_operand.vmem [shape: f32[1,20], index: 5, kind: input, shape index: {}]
  %s6 = inlined_call_operand.vmem [shape: f32[20,32], index: 6, kind: input, shape index: {}]
  %s7 = inlined_call_operand.vmem [shape: f32[1,32], index: 7, kind: input, shape index: {}]
  %s8 = inlined_call_operand.vmem [shape: f32[1,24], index: 8, kind: input, shape index: {}]
  %s9 = inlined_call_operand.vmem [shape: f32[1,24], index: 9, kind: input, shape index: {}]
  %s10 = inlined_call_operand.vmem [shape: f32[24,32], index: 10, kind: input, shape index: {}]
  %s11 = inlined_call_operand.vmem [shape: f32[1,32], index: 11, kind: input, shape index: {}]
  %s12 = inlined_call_operand.vmem [shape: f32[1,32], index: 12, kind: input, shape index: {}]
  %s13 = inlined_call_operand.vmem [shape: f32[1,32], index: 13, kind: input, shape index: {}]
  %s14 = inlined_call_operand.vmem [shape: f32[2,32,96], index: 14, kind: input, shape index: {}]
  %s15 = inlined_call_operand.vmem [shape: f32[2,1,96], index: 15, kind: input, shape index: {}]
  %s16 = inlined_call_operand.vmem [shape: f32[2,32,32], index: 16, kind: input, shape index: {}]
  %s17 = inlined_call_operand.vmem [shape: f32[2,1,32], index: 17, kind: input, shape index: {}]
  %s18 = inlined_call_operand.vmem [shape: f32[2,1,32], index: 18, kind: input, shape index: {}]
  %s19 = inlined_call_operand.vmem [shape: f32[2,1,32], index: 19, kind: input, shape index: {}]
  %s20 = inlined_call_operand.vmem [shape: f32[2,32,64], index: 20, kind: input, shape index: {}]
  %s21 = inlined_call_operand.vmem [shape: f32[2,1,64], index: 21, kind: input, shape index: {}]
  %s22 = inlined_call_operand.vmem [shape: f32[2,64,32], index: 22, kind: input, shape index: {}]
  %s23 = inlined_call_operand.vmem [shape: f32[2,1,32], index: 23, kind: input, shape index: {}]
  %s24 = inlined_call_operand.vmem [shape: f32[2,1,32], index: 24, kind: input, shape index: {}]
  %s25 = inlined_call_operand.vmem [shape: f32[2,1,32], index: 25, kind: input, shape index: {}]
  %s26 = inlined_call_operand.vmem [shape: f32[2,16,32], index: 26, kind: output, shape index: {}]
  %s27 = sld [smem:[#allocation0]]
  $region137: #{mma_forward.1} parent=0
    _
  %s29 = ssub.s32 1, %s27
  %s30 = scalar_select 0, %s29, %s27
  loop: start=0, step=1, limit=4
  $region2: #{mma_forward.1} parent=0 // loop_pre_header
    _
  $region3: #{mma_forward.1} parent=0 // loop_header
    %s32 = sphi 0, %s36
    %p33 = scmp.ge.s32.totalorder %s32, 4
    %s42 = sphi 0, %s44
    %s45 = sphi 0, %s42
    %s46 = sphi 0, %s45
    %s62 = sphi 0, %s46
    %s68 = sphi 0, %s70
    %s71 = sphi 0, %s68
    %s72 = sphi 0, %s71
    %s88 = sphi 0, %s72
    %s94 = sphi 0, %s96
    %s97 = sphi 0, %s94
    %s98 = sphi 0, %s97
    %s114 = sphi 0, %s98
    %s120 = sphi 0, %s122
    %s123 = sphi 0, %s120
    %s124 = sphi 0, %s123
    %s140 = sphi 0, %s124
    %s144 = sphi 0, %s144
    %s146 = sphi 0, %s144
    %s147 = sphi 0, %s146
    %s161 = sphi 0, %s147
    %s165 = sphi 0, %s165
    %s167 = sphi 0, %s165
    %s168 = sphi 0, %s167
    %s182 = sphi 0, %s168
    %s186 = sphi 0, %s186
    %s188 = sphi 0, %s186
    %s189 = sphi 0, %s188
    %s203 = sphi 0, %s189
    %s207 = sphi 0, %s207
    %s209 = sphi 0, %s207
    %s210 = sphi 0, %s209
    %s224 = sphi 0, %s210
    %s228 = sphi 0, %s228
    %s230 = sphi 0, %s228
    %s231 = sphi 0, %s230
    %s245 = sphi 0, %s231
    %s249 = sphi 0, %s249
    %s251 = sphi 0, %s249
    %s252 = sphi 0, %s251
    %s266 = sphi 0, %s252
    %s270 = sphi 0, %s270
    %s272 = sphi 0, %s270
    %s273 = sphi 0, %s272
    %s287 = sphi 0, %s273
    %s291 = sphi 0, %s291
    %s293 = sphi 0, %s291
    %s294 = sphi 0, %s293
    %s308 = sphi 0, %s294
    %s312 = sphi 0, %s312
    %s314 = sphi 0, %s312
    %s315 = sphi 0, %s314
    %s329 = sphi 0, %s315
    %s333 = sphi 0, %s333
    %s335 = sphi 0, %s333
    %s336 = sphi 0, %s335
    %s350 = sphi 0, %s336
    %s354 = sphi 0, %s354
    %s356 = sphi 0, %s354
    %s357 = sphi 0, %s356
    %s371 = sphi 0, %s357
    %s375 = sphi 0, %s375
    %s377 = sphi 0, %s375
    %s378 = sphi 0, %s377
    %s392 = sphi 0, %s378
    %s396 = sphi 0, %s396
    %s398 = sphi 0, %s396
    %s399 = sphi 0, %s398
    %s413 = sphi 0, %s399
    %s417 = sphi 0, %s417
    %s419 = sphi 0, %s417
    %s420 = sphi 0, %s419
    %s434 = sphi 0, %s420
    %s438 = sphi 0, %s438
    %s440 = sphi 0, %s438
    %s441 = sphi 0, %s440
    %s455 = sphi 0, %s441
    %s459 = sphi 0, %s459
    %s461 = sphi 0, %s459
    %s462 = sphi 0, %s461
    %s476 = sphi 0, %s462
    %s480 = sphi 0, %s480
    %s482 = sphi 0, %s480
    %s483 = sphi 0, %s482
    %s497 = sphi 0, %s483
    %s501 = sphi 0, %s501
    %s503 = sphi 0, %s501
    %s504 = sphi 0, %s503
    %s518 = sphi 0, %s504
    %s522 = sphi 0, %s522
    %s524 = sphi 0, %s522
    %s525 = sphi 0, %s524
    %s539 = sphi 0, %s525
    %s543 = sphi 0, %s543
    %s545 = sphi 0, %s543
    %s546 = sphi 0, %s545
    %s560 = sphi 0, %s546
    %s564 = sphi 0, %s564
    %s566 = sphi 0, %s564
    %s567 = sphi 0, %s566
    %s581 = sphi 0, %s567
    %s585 = sphi 0, %s585
    %s587 = sphi 0, %s585
    %s588 = sphi 0, %s587
    %s602 = sphi 0, %s588
    %s608 = sphi 0, %s610
    %s611 = sphi 0, %s608
    %s612 = sphi 0, %s611
    %s628 = sphi 0, %s612
  $region4: #{mma_forward.1} parent=0 // loop_header_branch
    %35 = sbr.rel (%p33) target = $region8
  $region5: #{mma_forward.1} parent=0 // loop_body
    %s37 = ssub.s32 %s32, 1
    %s38 = ssub.s32 %s32, 2
    %s39 = sadd.s32 %s32, 1
    %s40 = ssub.s32 %s32, %s39
    %p41 = scmp.eq.s32.totalorder %s40, 0
    %s43 = sadd.s32 %s42, 1
    %s44 = scalar_select %p41, %s42, %s43
    %p47 = pneg %p41
    %p48 = scmp.eq.s32.totalorder %s32, 1
    %p49 = por %p47, %p48
    %p50 = scmp.ne.s32.totalorder %s42, %s45
    %p51 = scmp.eq.s32.totalorder %s32, 0
    %p52 = por %p50, %p51
    %p53 = scmp.ne.s32.totalorder %s42, %s45
    %p54 = scmp.eq.s32.totalorder %s37, 1
    %p55 = por %p53, %p54
    %p56 = scmp.ne.s32.totalorder %s45, %s46
    %p57 = scmp.eq.s32.totalorder %s37, 0
    %p58 = por %p56, %p57
    %p59 = scmp.ne.s32.totalorder %s45, %s46
    %p60 = scmp.eq.s32.totalorder %s38, 1
    %p61 = por %p59, %p60
    %p63 = scmp.ne.s32.totalorder %s46, %s62
    %p64 = scmp.eq.s32.totalorder %s38, 0
    %p65 = por %p63, %p64
    %s66 = ssub.s32 %s32, %s39
    %p67 = scmp.eq.s32.totalorder %s66, 0
    %s69 = sadd.s32 %s68, 1
    %s70 = scalar_select %p67, %s68, %s69
    %p73 = pneg %p67
    %p74 = scmp.eq.s32.totalorder %s32, 1
    %p75 = por %p73, %p74
    %p76 = scmp.ne.s32.totalorder %s68, %s71
    %p77 = scmp.eq.s32.totalorder %s32, 0
    %p78 = por %p76, %p77
    %p79 = scmp.ne.s32.totalorder %s68, %s71
    %p80 = scmp.eq.s32.totalorder %s37, 1
    %p81 = por %p79, %p80
    %p82 = scmp.ne.s32.totalorder %s71, %s72
    %p83 = scmp.eq.s32.totalorder %s37, 0
    %p84 = por %p82, %p83
    %p85 = scmp.ne.s32.totalorder %s71, %s72
    %p86 = scmp.eq.s32.totalorder %s38, 1
    %p87 = por %p85, %p86
    %p89 = scmp.ne.s32.totalorder %s72, %s88
    %p90 = scmp.eq.s32.totalorder %s38, 0
    %p91 = por %p89, %p90
    %s92 = ssub.s32 %s32, %s39
    %p93 = scmp.eq.s32.totalorder %s92, 0
    %s95 = sadd.s32 %s94, 1
    %s96 = scalar_select %p93, %s94, %s95
    %p99 = pneg %p93
    %p100 = scmp.eq.s32.totalorder %s32, 1
    %p101 = por %p99, %p100
    %p102 = scmp.ne.s32.totalorder %s94, %s97
    %p103 = scmp.eq.s32.totalorder %s32, 0
    %p104 = por %p102, %p103
    %p105 = scmp.ne.s32.totalorder %s94, %s97
    %p106 = scmp.eq.s32.totalorder %s37, 1
    %p107 = por %p105, %p106
    %p108 = scmp.ne.s32.totalorder %s97, %s98
    %p109 = scmp.eq.s32.totalorder %s37, 0
    %p110 = por %p108, %p109
    %p111 = scmp.ne.s32.totalorder %s97, %s98
    %p112 = scmp.eq.s32.totalorder %s38, 1
    %p113 = por %p111, %p112
    %p115 = scmp.ne.s32.totalorder %s98, %s114
    %p116 = scmp.eq.s32.totalorder %s38, 0
    %p117 = por %p115, %p116
    %s118 = ssub.s32 %s32, %s39
    %p119 = scmp.eq.s32.totalorder %s118, 0
    %s121 = sadd.s32 %s120, 1
    %s122 = scalar_select %p119, %s120, %s121
    %p125 = pneg %p119
    %p126 = scmp.eq.s32.totalorder %s32, 1
    %p127 = por %p125, %p126
    %p128 = scmp.ne.s32.totalorder %s120, %s123
    %p129 = scmp.eq.s32.totalorder %s32, 0
    %p130 = por %p128, %p129
    %p131 = scmp.ne.s32.totalorder %s120, %s123
    %p132 = scmp.eq.s32.totalorder %s37, 1
    %p133 = por %p131, %p132
    %p134 = scmp.ne.s32.totalorder %s123, %s124
    %p135 = scmp.eq.s32.totalorder %s37, 0
    %p136 = por %p134, %p135
    %p137 = scmp.ne.s32.totalorder %s123, %s124
    %p138 = scmp.eq.s32.totalorder %s38, 1
    %p139 = por %p137, %p138
    %p141 = scmp.ne.s32.totalorder %s124, %s140
    %p142 = scmp.eq.s32.totalorder %s38, 0
    %p143 = por %p141, %p142
    %s145 = sadd.s32 %s144, 1
    %p148 = scmp.eq.s32.totalorder %s32, 1
    %p149 = scmp.ne.s32.totalorder %s144, %s146
    %p150 = scmp.eq.s32.totalorder %s32, 0
    %p151 = por %p149, %p150
    %p152 = scmp.ne.s32.totalorder %s144, %s146
    %p153 = scmp.eq.s32.totalorder %s37, 1
    %p154 = por %p152, %p153
    %p155 = scmp.ne.s32.totalorder %s146, %s147
    %p156 = scmp.eq.s32.totalorder %s37, 0
    %p157 = por %p155, %p156
    %p158 = scmp.ne.s32.totalorder %s146, %s147
    %p159 = scmp.eq.s32.totalorder %s38, 1
    %p160 = por %p158, %p159
    %p162 = scmp.ne.s32.totalorder %s147, %s161
    %p163 = scmp.eq.s32.totalorder %s38, 0
    %p164 = por %p162, %p163
    %s166 = sadd.s32 %s165, 1
    %p169 = scmp.eq.s32.totalorder %s32, 1
    %p170 = scmp.ne.s32.totalorder %s165, %s167
    %p171 = scmp.eq.s32.totalorder %s32, 0
    %p172 = por %p170, %p171
    %p173 = scmp.ne.s32.totalorder %s165, %s167
    %p174 = scmp.eq.s32.totalorder %s37, 1
    %p175 = por %p173, %p174
    %p176 = scmp.ne.s32.totalorder %s167, %s168
    %p177 = scmp.eq.s32.totalorder %s37, 0
    %p178 = por %p176, %p177
    %p179 = scmp.ne.s32.totalorder %s167, %s168
    %p180 = scmp.eq.s32.totalorder %s38, 1
    %p181 = por %p179, %p180
    %p183 = scmp.ne.s32.totalorder %s168, %s182
    %p184 = scmp.eq.s32.totalorder %s38, 0
    %p185 = por %p183, %p184
    %s187 = sadd.s32 %s186, 1
    %p190 = scmp.eq.s32.totalorder %s32, 1
    %p191 = scmp.ne.s32.totalorder %s186, %s188
    %p192 = scmp.eq.s32.totalorder %s32, 0
    %p193 = por %p191, %p192
    %p194 = scmp.ne.s32.totalorder %s186, %s188
    %p195 = scmp.eq.s32.totalorder %s37, 1
    %p196 = por %p194, %p195
    %p197 = scmp.ne.s32.totalorder %s188, %s189
    %p198 = scmp.eq.s32.totalorder %s37, 0
    %p199 = por %p197, %p198
    %p200 = scmp.ne.s32.totalorder %s188, %s189
    %p201 = scmp.eq.s32.totalorder %s38, 1
    %p202 = por %p200, %p201
    %p204 = scmp.ne.s32.totalorder %s189, %s203
    %p205 = scmp.eq.s32.totalorder %s38, 0
    %p206 = por %p204, %p205
    %s208 = sadd.s32 %s207, 1
    %p211 = scmp.eq.s32.totalorder %s32, 1
    %p212 = scmp.ne.s32.totalorder %s207, %s209
    %p213 = scmp.eq.s32.totalorder %s32, 0
    %p214 = por %p212, %p213
    %p215 = scmp.ne.s32.totalorder %s207, %s209
    %p216 = scmp.eq.s32.totalorder %s37, 1
    %p217 = por %p215, %p216
    %p218 = scmp.ne.s32.totalorder %s209, %s210
    %p219 = scmp.eq.s32.totalorder %s37, 0
    %p220 = por %p218, %p219
    %p221 = scmp.ne.s32.totalorder %s209, %s210
    %p222 = scmp.eq.s32.totalorder %s38, 1
    %p223 = por %p221, %p222
    %p225 = scmp.ne.s32.totalorder %s210, %s224
    %p226 = scmp.eq.s32.totalorder %s38, 0
    %p227 = por %p225, %p226
    %s229 = sadd.s32 %s228, 1
    %p232 = scmp.eq.s32.totalorder %s32, 1
    %p233 = scmp.ne.s32.totalorder %s228, %s230
    %p234 = scmp.eq.s32.totalorder %s32, 0
    %p235 = por %p233, %p234
    %p236 = scmp.ne.s32.totalorder %s228, %s230
    %p237 = scmp.eq.s32.totalorder %s37, 1
    %p238 = por %p236, %p237
    %p239 = scmp.ne.s32.totalorder %s230, %s231
    %p240 = scmp.eq.s32.totalorder %s37, 0
    %p241 = por %p239, %p240
    %p242 = scmp.ne.s32.totalorder %s230, %s231
    %p243 = scmp.eq.s32.totalorder %s38, 1
    %p244 = por %p242, %p243
    %p246 = scmp.ne.s32.totalorder %s231, %s245
    %p247 = scmp.eq.s32.totalorder %s38, 0
    %p248 = por %p246, %p247
    %s250 = sadd.s32 %s249, 1
    %p253 = scmp.eq.s32.totalorder %s32, 1
    %p254 = scmp.ne.s32.totalorder %s249, %s251
    %p255 = scmp.eq.s32.totalorder %s32, 0
    %p256 = por %p254, %p255
    %p257 = scmp.ne.s32.totalorder %s249, %s251
    %p258 = scmp.eq.s32.totalorder %s37, 1
    %p259 = por %p257, %p258
    %p260 = scmp.ne.s32.totalorder %s251, %s252
    %p261 = scmp.eq.s32.totalorder %s37, 0
    %p262 = por %p260, %p261
    %p263 = scmp.ne.s32.totalorder %s251, %s252
    %p264 = scmp.eq.s32.totalorder %s38, 1
    %p265 = por %p263, %p264
    %p267 = scmp.ne.s32.totalorder %s252, %s266
    %p268 = scmp.eq.s32.totalorder %s38, 0
    %p269 = por %p267, %p268
    %s271 = sadd.s32 %s270, 1
    %p274 = scmp.eq.s32.totalorder %s32, 1
    %p275 = scmp.ne.s32.totalorder %s270, %s272
    %p276 = scmp.eq.s32.totalorder %s32, 0
    %p277 = por %p275, %p276
    %p278 = scmp.ne.s32.totalorder %s270, %s272
    %p279 = scmp.eq.s32.totalorder %s37, 1
    %p280 = por %p278, %p279
    %p281 = scmp.ne.s32.totalorder %s272, %s273
    %p282 = scmp.eq.s32.totalorder %s37, 0
    %p283 = por %p281, %p282
    %p284 = scmp.ne.s32.totalorder %s272, %s273
    %p285 = scmp.eq.s32.totalorder %s38, 1
    %p286 = por %p284, %p285
    %p288 = scmp.ne.s32.totalorder %s273, %s287
    %p289 = scmp.eq.s32.totalorder %s38, 0
    %p290 = por %p288, %p289
    %s292 = sadd.s32 %s291, 1
    %p295 = scmp.eq.s32.totalorder %s32, 1
    %p296 = scmp.ne.s32.totalorder %s291, %s293
    %p297 = scmp.eq.s32.totalorder %s32, 0
    %p298 = por %p296, %p297
    %p299 = scmp.ne.s32.totalorder %s291, %s293
    %p300 = scmp.eq.s32.totalorder %s37, 1
    %p301 = por %p299, %p300
    %p302 = scmp.ne.s32.totalorder %s293, %s294
    %p303 = scmp.eq.s32.totalorder %s37, 0
    %p304 = por %p302, %p303
    %p305 = scmp.ne.s32.totalorder %s293, %s294
    %p306 = scmp.eq.s32.totalorder %s38, 1
    %p307 = por %p305, %p306
    %p309 = scmp.ne.s32.totalorder %s294, %s308
    %p310 = scmp.eq.s32.totalorder %s38, 0
    %p311 = por %p309, %p310
    %s313 = sadd.s32 %s312, 1
    %p316 = scmp.eq.s32.totalorder %s32, 1
    %p317 = scmp.ne.s32.totalorder %s312, %s314
    %p318 = scmp.eq.s32.totalorder %s32, 0
    %p319 = por %p317, %p318
    %p320 = scmp.ne.s32.totalorder %s312, %s314
    %p321 = scmp.eq.s32.totalorder %s37, 1
    %p322 = por %p320, %p321
    %p323 = scmp.ne.s32.totalorder %s314, %s315
    %p324 = scmp.eq.s32.totalorder %s37, 0
    %p325 = por %p323, %p324
    %p326 = scmp.ne.s32.totalorder %s314, %s315
    %p327 = scmp.eq.s32.totalorder %s38, 1
    %p328 = por %p326, %p327
    %p330 = scmp.ne.s32.totalorder %s315, %s329
    %p331 = scmp.eq.s32.totalorder %s38, 0
    %p332 = por %p330, %p331
    %s334 = sadd.s32 %s333, 1
    %p337 = scmp.eq.s32.totalorder %s32, 1
    %p338 = scmp.ne.s32.totalorder %s333, %s335
    %p339 = scmp.eq.s32.totalorder %s32, 0
    %p340 = por %p338, %p339
    %p341 = scmp.ne.s32.totalorder %s333, %s335
    %p342 = scmp.eq.s32.totalorder %s37, 1
    %p343 = por %p341, %p342
    %p344 = scmp.ne.s32.totalorder %s335, %s336
    %p345 = scmp.eq.s32.totalorder %s37, 0
    %p346 = por %p344, %p345
    %p347 = scmp.ne.s32.totalorder %s335, %s336
    %p348 = scmp.eq.s32.totalorder %s38, 1
    %p349 = por %p347, %p348
    %p351 = scmp.ne.s32.totalorder %s336, %s350
    %p352 = scmp.eq.s32.totalorder %s38, 0
    %p353 = por %p351, %p352
    %s355 = sadd.s32 %s354, 1
    %p358 = scmp.eq.s32.totalorder %s32, 1
    %p359 = scmp.ne.s32.totalorder %s354, %s356
    %p360 = scmp.eq.s32.totalorder %s32, 0
    %p361 = por %p359, %p360
    %p362 = scmp.ne.s32.totalorder %s354, %s356
    %p363 = scmp.eq.s32.totalorder %s37, 1
    %p364 = por %p362, %p363
    %p365 = scmp.ne.s32.totalorder %s356, %s357
    %p366 = scmp.eq.s32.totalorder %s37, 0
    %p367 = por %p365, %p366
    %p368 = scmp.ne.s32.totalorder %s356, %s357
    %p369 = scmp.eq.s32.totalorder %s38, 1
    %p370 = por %p368, %p369
    %p372 = scmp.ne.s32.totalorder %s357, %s371
    %p373 = scmp.eq.s32.totalorder %s38, 0
    %p374 = por %p372, %p373
    %s376 = sadd.s32 %s375, 1
    %p379 = scmp.eq.s32.totalorder %s32, 1
    %p380 = scmp.ne.s32.totalorder %s375, %s377
    %p381 = scmp.eq.s32.totalorder %s32, 0
    %p382 = por %p380, %p381
    %p383 = scmp.ne.s32.totalorder %s375, %s377
    %p384 = scmp.eq.s32.totalorder %s37, 1
    %p385 = por %p383, %p384
    %p386 = scmp.ne.s32.totalorder %s377, %s378
    %p387 = scmp.eq.s32.totalorder %s37, 0
    %p388 = por %p386, %p387
    %p389 = scmp.ne.s32.totalorder %s377, %s378
    %p390 = scmp.eq.s32.totalorder %s38, 1
    %p391 = por %p389, %p390
    %p393 = scmp.ne.s32.totalorder %s378, %s392
    %p394 = scmp.eq.s32.totalorder %s38, 0
    %p395 = por %p393, %p394
    %s397 = sadd.s32 %s396, 1
    %p400 = scmp.eq.s32.totalorder %s32, 1
    %p401 = scmp.ne.s32.totalorder %s396, %s398
    %p402 = scmp.eq.s32.totalorder %s32, 0
    %p403 = por %p401, %p402
    %p404 = scmp.ne.s32.totalorder %s396, %s398
    %p405 = scmp.eq.s32.totalorder %s37, 1
    %p406 = por %p404, %p405
    %p407 = scmp.ne.s32.totalorder %s398, %s399
    %p408 = scmp.eq.s32.totalorder %s37, 0
    %p409 = por %p407, %p408
    %p410 = scmp.ne.s32.totalorder %s398, %s399
    %p411 = scmp.eq.s32.totalorder %s38, 1
    %p412 = por %p410, %p411
    %p414 = scmp.ne.s32.totalorder %s399, %s413
    %p415 = scmp.eq.s32.totalorder %s38, 0
    %p416 = por %p414, %p415
    %s418 = sadd.s32 %s417, 1
    %p421 = scmp.eq.s32.totalorder %s32, 1
    %p422 = scmp.ne.s32.totalorder %s417, %s419
    %p423 = scmp.eq.s32.totalorder %s32, 0
    %p424 = por %p422, %p423
    %p425 = scmp.ne.s32.totalorder %s417, %s419
    %p426 = scmp.eq.s32.totalorder %s37, 1
    %p427 = por %p425, %p426
    %p428 = scmp.ne.s32.totalorder %s419, %s420
    %p429 = scmp.eq.s32.totalorder %s37, 0
    %p430 = por %p428, %p429
    %p431 = scmp.ne.s32.totalorder %s419, %s420
    %p432 = scmp.eq.s32.totalorder %s38, 1
    %p433 = por %p431, %p432
    %p435 = scmp.ne.s32.totalorder %s420, %s434
    %p436 = scmp.eq.s32.totalorder %s38, 0
    %p437 = por %p435, %p436
    %s439 = sadd.s32 %s438, 1
    %p442 = scmp.eq.s32.totalorder %s32, 1
    %p443 = scmp.ne.s32.totalorder %s438, %s440
    %p444 = scmp.eq.s32.totalorder %s32, 0
    %p445 = por %p443, %p444
    %p446 = scmp.ne.s32.totalorder %s438, %s440
    %p447 = scmp.eq.s32.totalorder %s37, 1
    %p448 = por %p446, %p447
    %p449 = scmp.ne.s32.totalorder %s440, %s441
    %p450 = scmp.eq.s32.totalorder %s37, 0
    %p451 = por %p449, %p450
    %p452 = scmp.ne.s32.totalorder %s440, %s441
    %p453 = scmp.eq.s32.totalorder %s38, 1
    %p454 = por %p452, %p453
    %p456 = scmp.ne.s32.totalorder %s441, %s455
    %p457 = scmp.eq.s32.totalorder %s38, 0
    %p458 = por %p456, %p457
    %s460 = sadd.s32 %s459, 1
    %p463 = scmp.eq.s32.totalorder %s32, 1
    %p464 = scmp.ne.s32.totalorder %s459, %s461
    %p465 = scmp.eq.s32.totalorder %s32, 0
    %p466 = por %p464, %p465
    %p467 = scmp.ne.s32.totalorder %s459, %s461
    %p468 = scmp.eq.s32.totalorder %s37, 1
    %p469 = por %p467, %p468
    %p470 = scmp.ne.s32.totalorder %s461, %s462
    %p471 = scmp.eq.s32.totalorder %s37, 0
    %p472 = por %p470, %p471
    %p473 = scmp.ne.s32.totalorder %s461, %s462
    %p474 = scmp.eq.s32.totalorder %s38, 1
    %p475 = por %p473, %p474
    %p477 = scmp.ne.s32.totalorder %s462, %s476
    %p478 = scmp.eq.s32.totalorder %s38, 0
    %p479 = por %p477, %p478
    %s481 = sadd.s32 %s480, 1
    %p484 = scmp.eq.s32.totalorder %s32, 1
    %p485 = scmp.ne.s32.totalorder %s480, %s482
    %p486 = scmp.eq.s32.totalorder %s32, 0
    %p487 = por %p485, %p486
    %p488 = scmp.ne.s32.totalorder %s480, %s482
    %p489 = scmp.eq.s32.totalorder %s37, 1
    %p490 = por %p488, %p489
    %p491 = scmp.ne.s32.totalorder %s482, %s483
    %p492 = scmp.eq.s32.totalorder %s37, 0
    %p493 = por %p491, %p492
    %p494 = scmp.ne.s32.totalorder %s482, %s483
    %p495 = scmp.eq.s32.totalorder %s38, 1
    %p496 = por %p494, %p495
    %p498 = scmp.ne.s32.totalorder %s483, %s497
    %p499 = scmp.eq.s32.totalorder %s38, 0
    %p500 = por %p498, %p499
    %s502 = sadd.s32 %s501, 1
    %p505 = scmp.eq.s32.totalorder %s32, 1
    %p506 = scmp.ne.s32.totalorder %s501, %s503
    %p507 = scmp.eq.s32.totalorder %s32, 0
    %p508 = por %p506, %p507
    %p509 = scmp.ne.s32.totalorder %s501, %s503
    %p510 = scmp.eq.s32.totalorder %s37, 1
    %p511 = por %p509, %p510
    %p512 = scmp.ne.s32.totalorder %s503, %s504
    %p513 = scmp.eq.s32.totalorder %s37, 0
    %p514 = por %p512, %p513
    %p515 = scmp.ne.s32.totalorder %s503, %s504
    %p516 = scmp.eq.s32.totalorder %s38, 1
    %p517 = por %p515, %p516
    %p519 = scmp.ne.s32.totalorder %s504, %s518
    %p520 = scmp.eq.s32.totalorder %s38, 0
    %p521 = por %p519, %p520
    %s523 = sadd.s32 %s522, 1
    %p526 = scmp.eq.s32.totalorder %s32, 1
    %p527 = scmp.ne.s32.totalorder %s522, %s524
    %p528 = scmp.eq.s32.totalorder %s32, 0
    %p529 = por %p527, %p528
    %p530 = scmp.ne.s32.totalorder %s522, %s524
    %p531 = scmp.eq.s32.totalorder %s37, 1
    %p532 = por %p530, %p531
    %p533 = scmp.ne.s32.totalorder %s524, %s525
    %p534 = scmp.eq.s32.totalorder %s37, 0
    %p535 = por %p533, %p534
    %p536 = scmp.ne.s32.totalorder %s524, %s525
    %p537 = scmp.eq.s32.totalorder %s38, 1
    %p538 = por %p536, %p537
    %p540 = scmp.ne.s32.totalorder %s525, %s539
    %p541 = scmp.eq.s32.totalorder %s38, 0
    %p542 = por %p540, %p541
    %s544 = sadd.s32 %s543, 1
    %p547 = scmp.eq.s32.totalorder %s32, 1
    %p548 = scmp.ne.s32.totalorder %s543, %s545
    %p549 = scmp.eq.s32.totalorder %s32, 0
    %p550 = por %p548, %p549
    %p551 = scmp.ne.s32.totalorder %s543, %s545
    %p552 = scmp.eq.s32.totalorder %s37, 1
    %p553 = por %p551, %p552
    %p554 = scmp.ne.s32.totalorder %s545, %s546
    %p555 = scmp.eq.s32.totalorder %s37, 0
    %p556 = por %p554, %p555
    %p557 = scmp.ne.s32.totalorder %s545, %s546
    %p558 = scmp.eq.s32.totalorder %s38, 1
    %p559 = por %p557, %p558
    %p561 = scmp.ne.s32.totalorder %s546, %s560
    %p562 = scmp.eq.s32.totalorder %s38, 0
    %p563 = por %p561, %p562
    %s565 = sadd.s32 %s564, 1
    %p568 = scmp.eq.s32.totalorder %s32, 1
    %p569 = scmp.ne.s32.totalorder %s564, %s566
    %p570 = scmp.eq.s32.totalorder %s32, 0
    %p571 = por %p569, %p570
    %p572 = scmp.ne.s32.totalorder %s564, %s566
    %p573 = scmp.eq.s32.totalorder %s37, 1
    %p574 = por %p572, %p573
    %p575 = scmp.ne.s32.totalorder %s566, %s567
    %p576 = scmp.eq.s32.totalorder %s37, 0
    %p577 = por %p575, %p576
    %p578 = scmp.ne.s32.totalorder %s566, %s567
    %p579 = scmp.eq.s32.totalorder %s38, 1
    %p580 = por %p578, %p579
    %p582 = scmp.ne.s32.totalorder %s567, %s581
    %p583 = scmp.eq.s32.totalorder %s38, 0
    %p584 = por %p582, %p583
    %s586 = sadd.s32 %s585, 1
    %p589 = scmp.eq.s32.totalorder %s32, 1
    %p590 = scmp.ne.s32.totalorder %s585, %s587
    %p591 = scmp.eq.s32.totalorder %s32, 0
    %p592 = por %p590, %p591
    %p593 = scmp.ne.s32.totalorder %s585, %s587
    %p594 = scmp.eq.s32.totalorder %s37, 1
    %p595 = por %p593, %p594
    %p596 = scmp.ne.s32.totalorder %s587, %s588
    %p597 = scmp.eq.s32.totalorder %s37, 0
    %p598 = por %p596, %p597
    %p599 = scmp.ne.s32.totalorder %s587, %s588
    %p600 = scmp.eq.s32.totalorder %s38, 1
    %p601 = por %p599, %p600
    %p603 = scmp.ne.s32.totalorder %s588, %s602
    %p604 = scmp.eq.s32.totalorder %s38, 0
    %p605 = por %p603, %p604
    %s606 = ssub.s32 %s32, %s39
    %p607 = scmp.eq.s32.totalorder %s606, 0
    %s609 = sadd.s32 %s608, 1
    %s610 = scalar_select %p607, %s608, %s609
    %p613 = pneg %p607
    %p614 = scmp.eq.s32.totalorder %s32, 1
    %p615 = por %p613, %p614
    %p616 = scmp.ne.s32.totalorder %s608, %s611
    %p617 = scmp.eq.s32.totalorder %s32, 0
    %p618 = por %p616, %p617
    %p619 = scmp.ne.s32.totalorder %s608, %s611
    %p620 = scmp.eq.s32.totalorder %s37, 1
    %p621 = por %p619, %p620
    %p622 = scmp.ne.s32.totalorder %s611, %s612
    %p623 = scmp.eq.s32.totalorder %s37, 0
    %p624 = por %p622, %p623
    %p625 = scmp.ne.s32.totalorder %s611, %s612
    %p626 = scmp.eq.s32.totalorder %s38, 1
    %p627 = por %p625, %p626
    %p629 = scmp.ne.s32.totalorder %s612, %s628
    %p630 = scmp.eq.s32.totalorder %s38, 0
    %p631 = por %p629, %p630
    %p632 = scmp.le.s32.totalorder 1, %s32
    %p633 = scmp.lt.s32.totalorder %s32, 3
    %p634 = pnand %p632, %p633
    %p635 = pneg %p634
    // Predicated region
    $region9: #{mma_forward.1} parent=5 // pred_check
      _
    $region10: #{mma_forward.1} parent=5 // pred_check_branch
      %637 = sbr.rel (%p634) target = $region12
    $region11: #{mma_forward.1} parent=5 // pred_region
      %s638 = ssub.s32 %s32, 1
      // Predicated region
      $region13: #{mma_forward.1} parent=11 // pred_check
        %p639 = pneg %p157
      $region14: #{mma_forward.1} parent=11 // pred_check_branch
        %641 = sbr.rel (%p639) target = $region16
      $region15: #{mma_forward.1} parent=11 // pred_region
        _
      $region16: #{mma_forward.1} parent=11 // pred_fallthru
        _
      // Predicated region
      $region17: #{mma_forward.1} parent=11 // pred_check
        %p642 = pneg %p178
      $region18: #{mma_forward.1} parent=11 // pred_check_branch
        %644 = sbr.rel (%p642) target = $region20
      $region19: #{mma_forward.1} parent=11 // pred_region
        _
      $region20: #{mma_forward.1} parent=11 // pred_fallthru
        _
      // Predicated region
      $region21: #{mma_forward.1} parent=11 // pred_check
        %p645 = pneg %p199
      $region22: #{mma_forward.1} parent=11 // pred_check_branch
        %647 = sbr.rel (%p645) target = $region24
      $region23: #{mma_forward.1} parent=11 // pred_region
        _
      $region24: #{mma_forward.1} parent=11 // pred_fallthru
        _
      // Predicated region
      $region25: #{mma_forward.1} parent=11 // pred_check
        %p648 = pneg %p220
      $region26: #{mma_forward.1} parent=11 // pred_check_branch
        %650 = sbr.rel (%p648) target = $region28
      $region27: #{mma_forward.1} parent=11 // pred_region
        _
      $region28: #{mma_forward.1} parent=11 // pred_fallthru
        _
      // Predicated region
      $region29: #{mma_forward.1} parent=11 // pred_check
        %p651 = pneg %p241
      $region30: #{mma_forward.1} parent=11 // pred_check_branch
        %653 = sbr.rel (%p651) target = $region32
      $region31: #{mma_forward.1} parent=11 // pred_region
        _
      $region32: #{mma_forward.1} parent=11 // pred_fallthru
        _
      // Predicated region
      $region33: #{mma_forward.1} parent=11 // pred_check
        %p654 = pneg %p262
      $region34: #{mma_forward.1} parent=11 // pred_check_branch
        %656 = sbr.rel (%p654) target = $region36
      $region35: #{mma_forward.1} parent=11 // pred_region
        _
      $region36: #{mma_forward.1} parent=11 // pred_fallthru
        _
      // Predicated region
      $region37: #{mma_forward.1} parent=11 // pred_check
        %p657 = pneg %p283
      $region38: #{mma_forward.1} parent=11 // pred_check_branch
        %659 = sbr.rel (%p657) target = $region40
      $region39: #{mma_forward.1} parent=11 // pred_region
        _
      $region40: #{mma_forward.1} parent=11 // pred_fallthru
        _
      // Predicated region
      $region41: #{mma_forward.1} parent=11 // pred_check
        %p660 = pneg %p304
      $region42: #{mma_forward.1} parent=11 // pred_check_branch
        %662 = sbr.rel (%p660) target = $region44
      $region43: #{mma_forward.1} parent=11 // pred_region
        _
      $region44: #{mma_forward.1} parent=11 // pred_fallthru
        _
      // Predicated region
      $region45: #{mma_forward.1} parent=11 // pred_check
        %p663 = pneg %p325
      $region46: #{mma_forward.1} parent=11 // pred_check_branch
        %665 = sbr.rel (%p663) target = $region48
      $region47: #{mma_forward.1} parent=11 // pred_region
        _
      $region48: #{mma_forward.1} parent=11 // pred_fallthru
        _
      // Predicated region
      $region49: #{mma_forward.1} parent=11 // pred_check
        %p666 = pneg %p346
      $region50: #{mma_forward.1} parent=11 // pred_check_branch
        %668 = sbr.rel (%p666) target = $region52
      $region51: #{mma_forward.1} parent=11 // pred_region
        _
      $region52: #{mma_forward.1} parent=11 // pred_fallthru
        _
      // Predicated region
      $region53: #{mma_forward.1} parent=11 // pred_check
        %p669 = pneg %p367
      $region54: #{mma_forward.1} parent=11 // pred_check_branch
        %671 = sbr.rel (%p669) target = $region56
      $region55: #{mma_forward.1} parent=11 // pred_region
        _
      $region56: #{mma_forward.1} parent=11 // pred_fallthru
        _
      // Predicated region
      $region57: #{mma_forward.1} parent=11 // pred_check
        %p672 = pneg %p388
      $region58: #{mma_forward.1} parent=11 // pred_check_branch
        %674 = sbr.rel (%p672) target = $region60
      $region59: #{mma_forward.1} parent=11 // pred_region
        _
      $region60: #{mma_forward.1} parent=11 // pred_fallthru
        _
      // Predicated region
      $region61: #{mma_forward.1} parent=11 // pred_check
        %p675 = pneg %p409
      $region62: #{mma_forward.1} parent=11 // pred_check_branch
        %677 = sbr.rel (%p675) target = $region64
      $region63: #{mma_forward.1} parent=11 // pred_region
        _
      $region64: #{mma_forward.1} parent=11 // pred_fallthru
        _
      // Predicated region
      $region65: #{mma_forward.1} parent=11 // pred_check
        %p678 = pneg %p430
      $region66: #{mma_forward.1} parent=11 // pred_check_branch
        %680 = sbr.rel (%p678) target = $region68
      $region67: #{mma_forward.1} parent=11 // pred_region
        _
      $region68: #{mma_forward.1} parent=11 // pred_fallthru
        _
      // Predicated region
      $region69: #{mma_forward.1} parent=11 // pred_check
        %p681 = pneg %p451
      $region70: #{mma_forward.1} parent=11 // pred_check_branch
        %683 = sbr.rel (%p681) target = $region72
      $region71: #{mma_forward.1} parent=11 // pred_region
        _
      $region72: #{mma_forward.1} parent=11 // pred_fallthru
        _
      // Predicated region
      $region73: #{mma_forward.1} parent=11 // pred_check
        %p684 = pneg %p472
      $region74: #{mma_forward.1} parent=11 // pred_check_branch
        %686 = sbr.rel (%p684) target = $region76
      $region75: #{mma_forward.1} parent=11 // pred_region
        _
      $region76: #{mma_forward.1} parent=11 // pred_fallthru
        _
      // Predicated region
      $region77: #{mma_forward.1} parent=11 // pred_check
        %p687 = pneg %p493
      $region78: #{mma_forward.1} parent=11 // pred_check_branch
        %689 = sbr.rel (%p687) target = $region80
      $region79: #{mma_forward.1} parent=11 // pred_region
        _
      $region80: #{mma_forward.1} parent=11 // pred_fallthru
        _
      // Predicated region
      $region81: #{mma_forward.1} parent=11 // pred_check
        %p690 = pneg %p514
      $region82: #{mma_forward.1} parent=11 // pred_check_branch
        %692 = sbr.rel (%p690) target = $region84
      $region83: #{mma_forward.1} parent=11 // pred_region
        _
      $region84: #{mma_forward.1} parent=11 // pred_fallthru
        _
      // Predicated region
      $region85: #{mma_forward.1} parent=11 // pred_check
        %p693 = pneg %p535
      $region86: #{mma_forward.1} parent=11 // pred_check_branch
        %695 = sbr.rel (%p693) target = $region88
      $region87: #{mma_forward.1} parent=11 // pred_region
        _
      $region88: #{mma_forward.1} parent=11 // pred_fallthru
        _
      // Predicated region
      $region89: #{mma_forward.1} parent=11 // pred_check
        %p696 = pneg %p556
      $region90: #{mma_forward.1} parent=11 // pred_check_branch
        %698 = sbr.rel (%p696) target = $region92
      $region91: #{mma_forward.1} parent=11 // pred_region
        _
      $region92: #{mma_forward.1} parent=11 // pred_fallthru
        _
      // Predicated region
      $region93: #{mma_forward.1} parent=11 // pred_check
        %p699 = pneg %p577
      $region94: #{mma_forward.1} parent=11 // pred_check_branch
        %701 = sbr.rel (%p699) target = $region96
      $region95: #{mma_forward.1} parent=11 // pred_region
        _
      $region96: #{mma_forward.1} parent=11 // pred_fallthru
        _
      // Predicated region
      $region97: #{mma_forward.1} parent=11 // pred_check
        %p702 = pneg %p598
      $region98: #{mma_forward.1} parent=11 // pred_check_branch
        %704 = sbr.rel (%p702) target = $region100
      $region99: #{mma_forward.1} parent=11 // pred_region
        _
      $region100: #{mma_forward.1} parent=11 // pred_fallthru
        _
    $region12: #{mma_forward.1} parent=5 // pred_fallthru
      _
    %p705 = scmp.lt.s32.totalorder %s32, 2
    // Predicated region
    $region101: #{mma_forward.1} parent=5 // pred_check
      %p706 = pneg %p705
    $region102: #{mma_forward.1} parent=5 // pred_check_branch
      %708 = sbr.rel (%p706) target = $region104
    $region103: #{mma_forward.1} parent=5 // pred_region
      // Predicated region
      $region105: #{mma_forward.1} parent=103 // pred_check
        %p709 = pneg %p52
      $region106: #{mma_forward.1} parent=103 // pred_check_branch
        %711 = sbr.rel (%p709) target = $region108
      $region107: #{mma_forward.1} parent=103 // pred_region
        %p712 = scmp.lt.s32.totalorder %s32, 1
        %s713 = scalar_select %p712, %s32, 1
        %s714 = smul.addr %s713, 8
        %s715 = scalar_lea.vmem %s0, %s714
      $region108: #{mma_forward.1} parent=103 // pred_fallthru
        _
      // Predicated region
      $region109: #{mma_forward.1} parent=103 // pred_check
        %p716 = pneg %p78
      $region110: #{mma_forward.1} parent=103 // pred_check_branch
        %718 = sbr.rel (%p716) target = $region112
      $region111: #{mma_forward.1} parent=103 // pred_region
        %p719 = scmp.lt.s32.totalorder %s32, 1
        %s720 = scalar_select %p719, %s32, 1
        %s721 = smul.addr %s720, 8
        %s722 = scalar_lea.vmem %s1, %s721
      $region112: #{mma_forward.1} parent=103 // pred_fallthru
        _
      // Predicated region
      $region113: #{mma_forward.1} parent=103 // pred_check
        %p723 = pneg %p104
      $region114: #{mma_forward.1} parent=103 // pred_check_branch
        %725 = sbr.rel (%p723) target = $region116
      $region115: #{mma_forward.1} parent=103 // pred_region
        %p726 = scmp.lt.s32.totalorder %s32, 1
        %s727 = scalar_select %p726, %s32, 1
        %s728 = smul.addr %s727, 2
        %s729 = smul.addr %s728, 8
        %s730 = scalar_lea.vmem %s2, %s729
      $region116: #{mma_forward.1} parent=103 // pred_fallthru
        _
      // Predicated region
      $region117: #{mma_forward.1} parent=103 // pred_check
        %p731 = pneg %p130
      $region118: #{mma_forward.1} parent=103 // pred_check_branch
        %733 = sbr.rel (%p731) target = $region120
      $region119: #{mma_forward.1} parent=103 // pred_region
        %p734 = scmp.lt.s32.totalorder %s32, 1
        %s735 = scalar_select %p734, %s32, 1
        %s736 = scalar_lea.vmem %s3, %s735
      $region120: #{mma_forward.1} parent=103 // pred_fallthru
        _
    $region104: #{mma_forward.1} parent=5 // pred_fallthru
      _
    %p737 = scmp.le.s32.totalorder 1, %s32
    %p738 = scmp.lt.s32.totalorder %s32, 3
    %p739 = pnand %p737, %p738
    %p740 = pneg %p739
    // Predicated region
    $region121: #{mma_forward.1} parent=5 // pred_check
      _
    $region122: #{mma_forward.1} parent=5 // pred_check_branch
      %742 = sbr.rel (%p739) target = $region124
    $region123: #{mma_forward.1} parent=5 // pred_region
      %s743 = ssub.s32 %s32, 1
      %p744 = scmp.lt.s32.totalorder %s37, 1
      %s745 = scalar_select %p744, %s37, 1
      %s746 = smul.addr %s745, 8
      %s747 = scalar_lea.vmem %s0, %s746
      %p748 = pneg %p58
      %p749 = pneg %p55
      %p750 = scmp.lt.s32.totalorder %s37, 1
      %s751 = scalar_select %p750, %s37, 1
      %s752 = smul.addr %s751, 8
      %s753 = scalar_lea.vmem %s1, %s752
      %p754 = pneg %p84
      %p755 = pneg %p81
      %p756 = scmp.lt.s32.totalorder %s37, 1
      %s757 = scalar_select %p756, %s37, 1
      %s758 = smul.addr %s757, 2
      %s759 = smul.addr %s758, 8
      %s760 = scalar_lea.vmem %s2, %s759
      %p761 = pneg %p110
      %p762 = pneg %p107
      %p763 = scmp.lt.s32.totalorder %s37, 1
      %s764 = scalar_select %p763, %s37, 1
      %s765 = scalar_lea.vmem %s3, %s764
      %p766 = pneg %p136
      %p767 = pneg %p133
      %p768 = pneg %p157
      %p769 = pneg %p154
      %p770 = pneg %p178
      %p771 = pneg %p175
      %p772 = pneg %p199
      %p773 = pneg %p196
      %p774 = pneg %p220
      %p775 = pneg %p217
      %p776 = pneg %p241
      %p777 = pneg %p238
      %p778 = pneg %p262
      %p779 = pneg %p259
      %p780 = pneg %p283
      %p781 = pneg %p280
      %p782 = pneg %p304
      %p783 = pneg %p301
      %p784 = pneg %p325
      %p785 = pneg %p322
      %p786 = pneg %p346
      %p787 = pneg %p343
      %p788 = pneg %p367
      %p789 = pneg %p364
      %p790 = pneg %p388
      %p791 = pneg %p385
      %p792 = pneg %p409
      %p793 = pneg %p406
      %p794 = pneg %p430
      %p795 = pneg %p427
      %p796 = pneg %p451
      %p797 = pneg %p448
      %p798 = pneg %p472
      %p799 = pneg %p469
      %p800 = pneg %p493
      %p801 = pneg %p490
      %p802 = pneg %p514
      %p803 = pneg %p511
      %p804 = pneg %p535
      %p805 = pneg %p532
      %p806 = pneg %p556
      %p807 = pneg %p553
      %p808 = pneg %p577
      %p809 = pneg %p574
      %p810 = pneg %p598
      %p811 = pneg %p595
      %p812 = pneg %p624
      %p813 = pneg %p621
      %p814 = scmp.lt.s32.totalorder %s37, 1
      %s815 = scalar_select %p814, %s37, 1
      %s816 = smul.addr %s815, 2
      %s817 = smul.addr %s816, 8
      %s818 = scalar_lea.vmem %s26, %s817
      %p819 = scmp.lt.s32.totalorder %s37, 1
      %s820 = scalar_select %p819, %s37, 1
      %s821 = smul.addr %s820, 8
      %s822 = scalar_lea.vmem %s0, %s821
      %p823 = scmp.lt.s32.totalorder %s37, 1
      %s824 = scalar_select %p823, %s37, 1
      %s825 = smul.addr %s824, 8
      %s826 = scalar_lea.vmem %s1, %s825
      %p827 = scmp.lt.s32.totalorder %s37, 1
      %s828 = scalar_select %p827, %s37, 1
      %s829 = smul.addr %s828, 2
      %s830 = smul.addr %s829, 8
      %s831 = scalar_lea.vmem %s2, %s830
      %p832 = scmp.lt.s32.totalorder %s37, 1
      %s833 = scalar_select %p832, %s37, 1
      %s834 = scalar_lea.vmem %s3, %s833
      %p835 = scmp.lt.s32.totalorder %s37, 1
      %s836 = scalar_select %p835, %s37, 1
      %s837 = smul.addr %s836, 2
      %s838 = smul.addr %s837, 8
      %s839 = scalar_lea.vmem %s26, %s838
      %v840 = vld [vmem:[%s822] sm:$0xff]
      %v841 = vld [vmem:[%s4] sm:$0x1]
      %v842 = vld [vmem:[%s5] sm:$0x1]
      %vm843 = vcmask 162816
      %v844 = vsel %vm843, %v840, 0.0
      %845 = vadd.xlane.f32.xlu0 %v844
      %v846 = vpop.xlane.xlu0 %845
      %v847 = vrcp.pop 20.0
      %v848 = vmul.f32 %v846, %v847
      %v849 = vsub.f32 %v840, %v848
      %v850 = vmul.f32 %v849, %v849
      %v851 = vsel %vm843, %v850, 0.0
      %852 = vadd.xlane.f32.xlu0 %v851
      %v853 = vpop.xlane.xlu0 %852
      %v854 = vmul.f32 %v853, %v847
      %v855 = vadd.f32 %v854, 1e-05
      %v856 = vrsqrt.pop %v855
      %v857 = vmul.f32 %v849, %v856
      %v859 = vlaneseq
      %v860 = vshrl.u32 %v859, 7
      %v861 = vsub.s32 0, %v860
      %v862 = vrot.slane %v841, %v861
      %v864 = vmul.f32 %v857, %v862
      %v866 = vlaneseq
      %v867 = vshrl.u32 %v866, 7
      %v868 = vsub.s32 0, %v867
      %v869 = vrot.slane %v842, %v868
      %v871 = vadd.f32 %v864, %v869
      %v872 = vld [vmem:[%s6] sm:$0xff]
      %v873 = vld [vmem:[%s6 + $0x8] sm:$0xff]
      %v874 = vld [vmem:[%s6 + $0x10] sm:$0xf]
      %v875 = vld [vmem:[%s7] sm:$0x1]
      %v877 = vlaneseq
      %v878 = vshrl.u32 %v877, 7
      %v879 = vsub.s32 0, %v878
      %v880 = vrot.slane %v875, %v879
      %v883 = vsel %vm843, %v871, 0
      %vm885 = vcmask 1043456
      %v887 = vsel %vm885, %v874, 0
      %889 = vmatprep.subr.mxu0 0.0
      %890 = vmatpush1.msra.mxu0 0.0
      %891 = vmatprep.subr.mxu0 0.0
      %892 = vmatpush1.msra.mxu0 0.0
      %893 = vmatprep.subr.mxu0 0.0
      %894 = vmatpush1.msra.mxu0 0.0
      %895 = vmatprep.subr.mxu0 0.0
      %896 = vmatpush1.msra.mxu0 0.0
      %897 = vmatprep.subr.mxu0 0.0
      %898 = vmatpush1.msra.mxu0 0.0
      %899 = vmatprep.subr.mxu0 0.0
      %900 = vmatpush1.msra.mxu0 0.0
      %901 = vmatprep.subr.mxu0 0.0
      %902 = vmatpush1.msra.mxu0 0.0
      %903 = vmatprep.subr.mxu0 0.0
      %904 = vmatpush1.msra.mxu0 0.0
      %905 = vmatprep.subr.mxu0 0.0
      %906 = vmatpush1.msra.mxu0 0.0
      %907 = vmatprep.subr.mxu0 0.0
      %908 = vmatpush1.msra.mxu0 0.0
      %909 = vmatprep.subr.mxu0 0.0
      %910 = vmatpush1.msra.mxu0 0.0
      %911 = vmatprep.subr.mxu0 0.0
      %912 = vmatpush1.msra.mxu0 0.0
      %913 = vmatprep.subr.mxu0 0.0
      %914 = vmatpush1.msra.mxu0 0.0
      %915 = vmatprep.subr.mxu0 0.0
      %916 = vmatpush1.msra.mxu0 %v887
      %917 = vmatprep.subr.mxu0 0.0
      %918 = vmatpush1.msra.mxu0 %v873
      %919 = vmatprep.subr.mxu0 0.0
      %920 = vmatpush1.msra.mxu0 %v872
      %921 = vmatprep.subr.mxu0 0.0
      %922 = vmatpush2.msra.mxu0 0.0
      %923 = vmatprep.subr.mxu0 0.0
      %924 = vmatpush2.msra.mxu0 0.0
      %925 = vmatprep.subr.mxu0 0.0
      %926 = vmatpush2.msra.mxu0 0.0
      %927 = vmatprep.subr.mxu0 0.0
      %928 = vmatpush2.msra.mxu0 0.0
      %929 = vmatprep.subr.mxu0 0.0
      %930 = vmatpush2.msra.mxu0 0.0
      %931 = vmatprep.subr.mxu0 0.0
      %932 = vmatpush2.msra.mxu0 0.0
      %933 = vmatprep.subr.mxu0 0.0
      %934 = vmatpush2.msra.mxu0 0.0
      %935 = vmatprep.subr.mxu0 0.0
      %936 = vmatpush2.msra.mxu0 0.0
      %937 = vmatprep.subr.mxu0 0.0
      %938 = vmatpush2.msra.mxu0 0.0
      %939 = vmatprep.subr.mxu0 0.0
      %940 = vmatpush2.msra.mxu0 0.0
      %941 = vmatprep.subr.mxu0 0.0
      %942 = vmatpush2.msra.mxu0 0.0
      %943 = vmatprep.subr.mxu0 0.0
      %944 = vmatpush2.msra.mxu0 0.0
      %945 = vmatprep.subr.mxu0 0.0
      %946 = vmatpush2.msra.mxu0 0.0
      %947 = vmatprep.subr.mxu0 0.0
      %948 = vmatpush2.msra.mxu0 0.0
      %949 = vmatprep.subr.mxu0 0.0
      %950 = vmatpush2.msra.mxu0 0.0
      %951 = vmatprep.subr.mxu0 0.0
      %952 = vmatpush2.msra.mxu0 0.0
      %953 = vmatprep.mubr.f32.mxu0 0.0
      %954 = vmatmul.mubr.f32.gmra.mxu0 %v883
      %v955 = vpop.f32.mrf.mxu0
      %v956 = vadd.f32 %v880, %v955
      %v957 = vpop.f32.mrf.mxu0
      %958 = vdwg.mxu0
      %v959 = vmax.f32 %v956, 0.0
      %v960 = vld [vmem:[%s826] sm:$0xff]
      %v961 = vld [vmem:[%s8] sm:$0x1]
      %v962 = vld [vmem:[%s9] sm:$0x1]
      %vm963 = vcmask 195584
      %v964 = vsel %vm963, %v960, 0.0
      %965 = vadd.xlane.f32.xlu0 %v964
      %v966 = vpop.xlane.xlu0 %965
      %v967 = vrcp.pop 24.0
      %v968 = vmul.f32 %v966, %v967
      %v969 = vsub.f32 %v960, %v968
      %v970 = vmul.f32 %v969, %v969
      %v971 = vsel %vm963, %v970, 0.0
      %972 = vadd.xlane.f32.xlu0 %v971
      %v973 = vpop.xlane.xlu0 %972
      %v974 = vmul.f32 %v973, %v967
      %v975 = vadd.f32 %v974, 1e-05
      %v976 = vrsqrt.pop %v975
      %v977 = vmul.f32 %v969, %v976
      %v979 = vlaneseq
      %v980 = vshrl.u32 %v979, 7
      %v981 = vsub.s32 0, %v980
      %v982 = vrot.slane %v961, %v981
      %v984 = vmul.f32 %v977, %v982
      %v986 = vlaneseq
      %v987 = vshrl.u32 %v986, 7
      %v988 = vsub.s32 0, %v987
      %v989 = vrot.slane %v962, %v988
      %v991 = vadd.f32 %v984, %v989
      %v992 = vld [vmem:[%s10] sm:$0xff]
      %v993 = vld [vmem:[%s10 + $0x8] sm:$0xff]
      %v994 = vld [vmem:[%s10 + $0x10] sm:$0xff]
      %v995 = vld [vmem:[%s11] sm:$0x1]
      %v997 = vlaneseq
      %v998 = vshrl.u32 %v997, 7
      %v999 = vsub.s32 0, %v998
      %v1000 = vrot.slane %v995, %v999
      %v1003 = vsel %vm963, %v991, 0
      %1005 = vmatprep.subr.mxu0 0.0
      %1006 = vmatpush1.msra.mxu0 0.0
      %1007 = vmatprep.subr.mxu0 0.0
      %1008 = vmatpush1.msra.mxu0 0.0
      %1009 = vmatprep.subr.mxu0 0.0
      %1010 = vmatpush1.msra.mxu0 0.0
      %1011 = vmatprep.subr.mxu0 0.0
      %1012 = vmatpush1.msra.mxu0 0.0
      %1013 = vmatprep.subr.mxu0 0.0
      %1014 = vmatpush1.msra.mxu0 0.0
      %1015 = vmatprep.subr.mxu0 0.0
      %1016 = vmatpush1.msra.mxu0 0.0
      %1017 = vmatprep.subr.mxu0 0.0
      %1018 = vmatpush1.msra.mxu0 0.0
      %1019 = vmatprep.subr.mxu0 0.0
      %1020 = vmatpush1.msra.mxu0 0.0
      %1021 = vmatprep.subr.mxu0 0.0
      %1022 = vmatpush1.msra.mxu0 0.0
      %1023 = vmatprep.subr.mxu0 0.0
      %1024 = vmatpush1.msra.mxu0 0.0
      %1025 = vmatprep.subr.mxu0 0.0
      %1026 = vmatpush1.msra.mxu0 0.0
      %1027 = vmatprep.subr.mxu0 0.0
      %1028 = vmatpush1.msra.mxu0 0.0
      %1029 = vmatprep.subr.mxu0 0.0
      %1030 = vmatpush1.msra.mxu0 0.0
      %1031 = vmatprep.subr.mxu0 0.0
      %1032 = vmatpush1.msra.mxu0 %v994
      %1033 = vmatprep.subr.mxu0 0.0
      %1034 = vmatpush1.msra.mxu0 %v993
      %1035 = vmatprep.subr.mxu0 0.0
      %1036 = vmatpush1.msra.mxu0 %v992
      %1037 = vmatprep.subr.mxu0 0.0
      %1038 = vmatpush2.msra.mxu0 0.0
      %1039 = vmatprep.subr.mxu0 0.0
      %1040 = vmatpush2.msra.mxu0 0.0
      %1041 = vmatprep.subr.mxu0 0.0
      %1042 = vmatpush2.msra.mxu0 0.0
      %1043 = vmatprep.subr.mxu0 0.0
      %1044 = vmatpush2.msra.mxu0 0.0
      %1045 = vmatprep.subr.mxu0 0.0
      %1046 = vmatpush2.msra.mxu0 0.0
      %1047 = vmatprep.subr.mxu0 0.0
      %1048 = vmatpush2.msra.mxu0 0.0
      %1049 = vmatprep.subr.mxu0 0.0
      %1050 = vmatpush2.msra.mxu0 0.0
      %1051 = vmatprep.subr.mxu0 0.0
      %1052 = vmatpush2.msra.mxu0 0.0
      %1053 = vmatprep.subr.mxu0 0.0
      %1054 = vmatpush2.msra.mxu0 0.0
      %1055 = vmatprep.subr.mxu0 0.0
      %1056 = vmatpush2.msra.mxu0 0.0
      %1057 = vmatprep.subr.mxu0 0.0
      %1058 = vmatpush2.msra.mxu0 0.0
      %1059 = vmatprep.subr.mxu0 0.0
      %1060 = vmatpush2.msra.mxu0 0.0
      %1061 = vmatprep.subr.mxu0 0.0
      %1062 = vmatpush2.msra.mxu0 0.0
      %1063 = vmatprep.subr.mxu0 0.0
      %1064 = vmatpush2.msra.mxu0 0.0
      %1065 = vmatprep.subr.mxu0 0.0
      %1066 = vmatpush2.msra.mxu0 0.0
      %1067 = vmatprep.subr.mxu0 0.0
      %1068 = vmatpush2.msra.mxu0 0.0
      %1069 = vmatprep.mubr.f32.mxu0 0.0
      %1070 = vmatmul.mubr.f32.gmra.mxu0 %v1003
      %v1071 = vpop.f32.mrf.mxu0
      %v1072 = vadd.f32 %v1000, %v1071
      %v1073 = vpop.f32.mrf.mxu0
      %1074 = vdwg.mxu0
      %v1075 = vmax.f32 %v1072, 0.0
      %v1076 = vld [vmem:[%s831] sm:$0xff]
      %v1077 = vld [vmem:[%s831 + $0x8] sm:$0xff]
      %v1078 = vadd.f32 %v959, %v1076
      %v1079 = vadd.f32 %v1075, %v1077
      %v1080 = vld [vmem:[%s12] sm:$0x1]
      %v1081 = vld [vmem:[%s13] sm:$0x1]
      %vm1082 = vcmask 261120
      %v1083 = vsel %vm1082, %v1078, 0.0
      %1084 = vadd.xlane.f32.xlu0 %v1083
      %v1085 = vpop.xlane.xlu0 %1084
      %v1086 = vsel %vm1082, %v1079, 0.0
      %1087 = vadd.xlane.f32.xlu0 %v1086
      %v1088 = vpop.xlane.xlu0 %1087
      %v1089 = vrcp.pop 32.0
      %v1090 = vmul.f32 %v1085, %v1089
      %v1091 = vmul.f32 %v1088, %v1089
      %v1092 = vsub.f32 %v1078, %v1090
      %v1093 = vsub.f32 %v1079, %v1091
      %v1094 = vmul.f32 %v1092, %v1092
      %v1095 = vmul.f32 %v1093, %v1093
      %v1096 = vsel %vm1082, %v1094, 0.0
      %1097 = vadd.xlane.f32.xlu0 %v1096
      %v1098 = vpop.xlane.xlu0 %1097
      %v1099 = vsel %vm1082, %v1095, 0.0
      %1100 = vadd.xlane.f32.xlu0 %v1099
      %v1101 = vpop.xlane.xlu0 %1100
      %v1102 = vmul.f32 %v1098, %v1089
      %v1103 = vmul.f32 %v1101, %v1089
      %v1104 = vadd.f32 %v1102, 1e-12
      %v1105 = vadd.f32 %v1103, 1e-12
      %v1106 = vrsqrt.pop %v1104
      %v1107 = vrsqrt.pop %v1105
      %v1108 = vmul.f32 %v1092, %v1106
      %v1109 = vmul.f32 %v1093, %v1107
      %v1111 = vlaneseq
      %v1112 = vshrl.u32 %v1111, 7
      %v1113 = vsub.s32 0, %v1112
      %v1114 = vrot.slane %v1080, %v1113
      %v1116 = vmul.f32 %v1108, %v1114
      %v1117 = vmul.f32 %v1109, %v1114
      %v1119 = vlaneseq
      %v1120 = vshrl.u32 %v1119, 7
      %v1121 = vsub.s32 0, %v1120
      %v1122 = vrot.slane %v1081, %v1121
      %v1124 = vadd.f32 %v1116, %v1122
      %v1125 = vadd.f32 %v1117, %v1122
      %v1126 = vld [vmem:[%s834] sm:$0x1]
      %v1127 = vsub.f32 1.0, %v1126
      %v1128 = vmul.f32 %v1127, -10000.0
      %v1130 = vlaneseq
      %v1131 = vshrl.u32 %v1130, 7
      %v1132 = vsub.s32 0, %v1131
      %v1133 = vrot.slane %v1128, %v1132
      %v1135 = vld [vmem:[%s14] sm:$0xff]
      %v1136 = vld [vmem:[%s14 + $0x8] sm:$0xff]
      %v1137 = vld [vmem:[%s14 + $0x10] sm:$0xff]
      %v1138 = vld [vmem:[%s14 + $0x18] sm:$0xff]
      %v1139 = vld [vmem:[%s15] sm:$0x1]
      %v1141 = vlaneseq
      %v1142 = vshrl.u32 %v1141, 7
      %v1143 = vsub.s32 0, %v1142
      %v1144 = vrot.slane %v1139, %v1143
      %v1147 = vsel %vm1082, %v1124, 0
      %v1150 = vsel %vm1082, %v1125, 0
      %1152 = vmatprep.subr.mxu0 0.0
      %1153 = vmatpush1.msra.mxu0 0.0
      %1154 = vmatprep.subr.mxu0 0.0
      %1155 = vmatpush1.msra.mxu0 0.0
      %1156 = vmatprep.subr.mxu0 0.0
      %1157 = vmatpush1.msra.mxu0 0.0
      %1158 = vmatprep.subr.mxu0 0.0
      %1159 = vmatpush1.msra.mxu0 0.0
      %1160 = vmatprep.subr.mxu0 0.0
      %1161 = vmatpush1.msra.mxu0 0.0
      %1162 = vmatprep.subr.mxu0 0.0
      %1163 = vmatpush1.msra.mxu0 0.0
      %1164 = vmatprep.subr.mxu0 0.0
      %1165 = vmatpush1.msra.mxu0 0.0
      %1166 = vmatprep.subr.mxu0 0.0
      %1167 = vmatpush1.msra.mxu0 0.0
      %1168 = vmatprep.subr.mxu0 0.0
      %1169 = vmatpush1.msra.mxu0 0.0
      %1170 = vmatprep.subr.mxu0 0.0
      %1171 = vmatpush1.msra.mxu0 0.0
      %1172 = vmatprep.subr.mxu0 0.0
      %1173 = vmatpush1.msra.mxu0 0.0
      %1174 = vmatprep.subr.mxu0 0.0
      %1175 = vmatpush1.msra.mxu0 0.0
      %1176 = vmatprep.subr.mxu0 0.0
      %1177 = vmatpush1.msra.mxu0 %v1138
      %1178 = vmatprep.subr.mxu0 0.0
      %1179 = vmatpush1.msra.mxu0 %v1137
      %1180 = vmatprep.subr.mxu0 0.0
      %1181 = vmatpush1.msra.mxu0 %v1136
      %1182 = vmatprep.subr.mxu0 0.0
      %1183 = vmatpush1.msra.mxu0 %v1135
      %1184 = vmatprep.subr.mxu0 0.0
      %1185 = vmatpush2.msra.mxu0 0.0
      %1186 = vmatprep.subr.mxu0 0.0
      %1187 = vmatpush2.msra.mxu0 0.0
      %1188 = vmatprep.subr.mxu0 0.0
      %1189 = vmatpush2.msra.mxu0 0.0
      %1190 = vmatprep.subr.mxu0 0.0
      %1191 = vmatpush2.msra.mxu0 0.0
      %1192 = vmatprep.subr.mxu0 0.0
      %1193 = vmatpush2.msra.mxu0 0.0
      %1194 = vmatprep.subr.mxu0 0.0
      %1195 = vmatpush2.msra.mxu0 0.0
      %1196 = vmatprep.subr.mxu0 0.0
      %1197 = vmatpush2.msra.mxu0 0.0
      %1198 = vmatprep.subr.mxu0 0.0
      %1199 = vmatpush2.msra.mxu0 0.0
      %1200 = vmatprep.subr.mxu0 0.0
      %1201 = vmatpush2.msra.mxu0 0.0
      %1202 = vmatprep.subr.mxu0 0.0
      %1203 = vmatpush2.msra.mxu0 0.0
      %1204 = vmatprep.subr.mxu0 0.0
      %1205 = vmatpush2.msra.mxu0 0.0
      %1206 = vmatprep.subr.mxu0 0.0
      %1207 = vmatpush2.msra.mxu0 0.0
      %1208 = vmatprep.subr.mxu0 0.0
      %1209 = vmatpush2.msra.mxu0 0.0
      %1210 = vmatprep.subr.mxu0 0.0
      %1211 = vmatpush2.msra.mxu0 0.0
      %1212 = vmatprep.subr.mxu0 0.0
      %1213 = vmatpush2.msra.mxu0 0.0
      %1214 = vmatprep.subr.mxu0 0.0
      %1215 = vmatpush2.msra.mxu0 0.0
      %1216 = vmatprep.mubr.f32.mxu0 0.0
      %1217 = vmatmul.mubr.f32.gmra.mxu0 %v1147
      %v1218 = vpop.f32.mrf.mxu0
      %v1219 = vadd.f32 %v1144, %v1218
      %v1220 = vpop.f32.mrf.mxu0
      %1221 = vmatprep.mubr.f32.mxu0 0.0
      %1222 = vmatmul.mubr.f32.gmra.mxu0 %v1150
      %v1223 = vpop.f32.mrf.mxu0
      %v1224 = vadd.f32 %v1144, %v1223
      %v1225 = vpop.f32.mrf.mxu0
      %1226 = vdwg.mxu0
      %1229 = vrot.lane.b32.xlu0 %v1219, 96
      %v1230 = vpop.permute.xlu0 %1229
      %1231 = vrot.lane.b32.xlu0 %v1224, 96
      %v1232 = vpop.permute.xlu0 %1231
      %vm1233 = vcmask 64512
      %v1234 = vsel %vm1233, %v1219, 0
      %v1236 = vsel %vm1233, %v1224, 0
      %v1238 = vsel %vm1233, %v1230, 0
      %v1240 = vsel %vm1233, %v1232, 0
      %1242 = vmatprep.subr.mxu0 0.0
      %1243 = vmatpush1.xpose.msra.mxu0 0.0
      %1244 = vmatprep.subr.mxu0 0.0
      %1245 = vmatpush1.xpose.msra.mxu0 0.0
      %1246 = vmatprep.subr.mxu0 0.0
      %1247 = vmatpush1.xpose.msra.mxu0 0.0
      %1248 = vmatprep.subr.mxu0 0.0
      %1249 = vmatpush1.xpose.msra.mxu0 0.0
      %1250 = vmatprep.subr.mxu0 0.0
      %1251 = vmatpush1.xpose.msra.mxu0 0.0
      %1252 = vmatprep.subr.mxu0 0.0
      %1253 = vmatpush1.xpose.msra.mxu0 0.0
      %1254 = vmatprep.subr.mxu0 0.0
      %1255 = vmatpush1.xpose.msra.mxu0 0.0
      %1256 = vmatprep.subr.mxu0 0.0
      %1257 = vmatpush1.xpose.msra.mxu0 0.0
      %1258 = vmatprep.subr.mxu0 0.0
      %1259 = vmatpush1.xpose.msra.mxu0 0.0
      %1260 = vmatprep.subr.mxu0 0.0
      %1261 = vmatpush1.xpose.msra.mxu0 0.0
      %1262 = vmatprep.subr.mxu0 0.0
      %1263 = vmatpush1.xpose.msra.mxu0 0.0
      %1264 = vmatprep.subr.mxu0 0.0
      %1265 = vmatpush1.xpose.msra.mxu0 0.0
      %1266 = vmatprep.subr.mxu0 0.0
      %1267 = vmatpush1.xpose.msra.mxu0 0.0
      %1268 = vmatprep.subr.mxu0 0.0
      %1269 = vmatpush1.xpose.msra.mxu0 0.0
      %1270 = vmatprep.subr.mxu0 0.0
      %1271 = vmatpush1.xpose.msra.mxu0 %v1240
      %1272 = vmatprep.subr.mxu0 0.0
      %1273 = vmatpush1.xpose.msra.mxu0 %v1238
      %1274 = vmatprep.subr.mxu0 0.0
      %1275 = vmatpush2.xpose.msra.mxu0 0.0
      %1276 = vmatprep.subr.mxu0 0.0
      %1277 = vmatpush2.xpose.msra.mxu0 0.0
      %1278 = vmatprep.subr.mxu0 0.0
      %1279 = vmatpush2.xpose.msra.mxu0 0.0
      %1280 = vmatprep.subr.mxu0 0.0
      %1281 = vmatpush2.xpose.msra.mxu0 0.0
      %1282 = vmatprep.subr.mxu0 0.0
      %1283 = vmatpush2.xpose.msra.mxu0 0.0
      %1284 = vmatprep.subr.mxu0 0.0
      %1285 = vmatpush2.xpose.msra.mxu0 0.0
      %1286 = vmatprep.subr.mxu0 0.0
      %1287 = vmatpush2.xpose.msra.mxu0 0.0
      %1288 = vmatprep.subr.mxu0 0.0
      %1289 = vmatpush2.xpose.msra.mxu0 0.0
      %1290 = vmatprep.subr.mxu0 0.0
      %1291 = vmatpush2.xpose.msra.mxu0 0.0
      %1292 = vmatprep.subr.mxu0 0.0
      %1293 = vmatpush2.xpose.msra.mxu0 0.0
      %1294 = vmatprep.subr.mxu0 0.0
      %1295 = vmatpush2.xpose.msra.mxu0 0.0
      %1296 = vmatprep.subr.mxu0 0.0
      %1297 = vmatpush2.xpose.msra.mxu0 0.0
      %1298 = vmatprep.subr.mxu0 0.0
      %1299 = vmatpush2.xpose.msra.mxu0 0.0
      %1300 = vmatprep.subr.mxu0 0.0
      %1301 = vmatpush2.xpose.msra.mxu0 0.0
      %1302 = vmatprep.subr.mxu0 0.0
      %1303 = vmatpush2.xpose.msra.mxu0 0.0
      %1304 = vmatprep.subr.mxu0 0.0
      %1305 = vmatpush2.xpose.msra.mxu0 0.0
      %1306 = vmatprep.mubr.f32.mxu0 0.0
      %1307 = vmatmul.mubr.f32.gmra.mxu0 %v1234
      %v1308 = vpop.f32.mrf.mxu0
      %v1309 = vadd.f32 %v1133, %v1308
      %v1310 = vpop.f32.mrf.mxu0
      %1311 = vmatprep.mubr.f32.mxu0 0.0
      %1312 = vmatmul.mubr.f32.gmra.mxu0 %v1236
      %v1313 = vpop.f32.mrf.mxu0
      %v1314 = vadd.f32 %v1133, %v1313
      %v1315 = vpop.f32.mrf.mxu0
      %1316 = vdwg.mxu0
      %vm1317 = vcmask 130048
      %v1318 = vsel %vm1317, %v1309, -inf
      %1319 = vmax.xlane.f32.xlu0 %v1318
      %v1320 = vpop.xlane.xlu0 %1319
      %v1321 = vsel %vm1317, %v1314, -inf
      %1322 = vmax.xlane.f32.xlu0 %v1321
      %v1323 = vpop.xlane.xlu0 %1322
      %v1324 = vsub.f32 %v1309, %v1320
      %v1325 = vsub.f32 %v1314, %v1323
      %v1326 = vmul.f32 %v1324, 1.442695
      %v1327 = vpow.pop %v1326
      %v1328 = vmul.f32 %v1325, 1.442695
      %v1329 = vpow.pop %v1328
      %v1330 = vsel %vm1317, %v1327, 0.0
      %1331 = vadd.xlane.f32.xlu0 %v1330
      %v1332 = vpop.xlane.xlu0 %1331
      %v1333 = vsel %vm1317, %v1329, 0.0
      %1334 = vadd.xlane.f32.xlu0 %v1333
      %v1335 = vpop.xlane.xlu0 %1334
      %v1336 = vrcp.pop %v1332
      %v1337 = vrcp.pop %v1335
      %v1338 = vmul.f32 %v1327, %v1336
      %v1339 = vmul.f32 %v1329, %v1337
      %1340 = vrot.lane.b32.xlu0 %v1219, 64
      %v1341 = vpop.permute.xlu0 %1340
      %1342 = vrot.lane.b32.xlu0 %v1224, 64
      %v1343 = vpop.permute.xlu0 %1342
      %v1347 = vsel %vm1317, %v1338, 0
      %v1350 = vsel %vm1317, %v1339, 0
      %1352 = vmatprep.subr.mxu0 0.0
      %1353 = vmatpush1.msra.mxu0 0.0
      %1354 = vmatprep.subr.mxu0 0.0
      %1355 = vmatpush1.msra.mxu0 0.0
      %1356 = vmatprep.subr.mxu0 0.0
      %1357 = vmatpush1.msra.mxu0 0.0
      %1358 = vmatprep.subr.mxu0 0.0
      %1359 = vmatpush1.msra.mxu0 0.0
      %1360 = vmatprep.subr.mxu0 0.0
      %1361 = vmatpush1.msra.mxu0 0.0
      %1362 = vmatprep.subr.mxu0 0.0
      %1363 = vmatpush1.msra.mxu0 0.0
      %1364 = vmatprep.subr.mxu0 0.0
      %1365 = vmatpush1.msra.mxu0 0.0
      %1366 = vmatprep.subr.mxu0 0.0
      %1367 = vmatpush1.msra.mxu0 0.0
      %1368 = vmatprep.subr.mxu0 0.0
      %1369 = vmatpush1.msra.mxu0 0.0
      %1370 = vmatprep.subr.mxu0 0.0
      %1371 = vmatpush1.msra.mxu0 0.0
      %1372 = vmatprep.subr.mxu0 0.0
      %1373 = vmatpush1.msra.mxu0 0.0
      %1374 = vmatprep.subr.mxu0 0.0
      %1375 = vmatpush1.msra.mxu0 0.0
      %1376 = vmatprep.subr.mxu0 0.0
      %1377 = vmatpush1.msra.mxu0 0.0
      %1378 = vmatprep.subr.mxu0 0.0
      %1379 = vmatpush1.msra.mxu0 0.0
      %1380 = vmatprep.subr.mxu0 0.0
      %1381 = vmatpush1.msra.mxu0 %v1343
      %1382 = vmatprep.subr.mxu0 0.0
      %1383 = vmatpush1.msra.mxu0 %v1341
      %1384 = vmatprep.subr.mxu0 0.0
      %1385 = vmatpush2.msra.mxu0 0.0
      %1386 = vmatprep.subr.mxu0 0.0
      %1387 = vmatpush2.msra.mxu0 0.0
      %1388 = vmatprep.subr.mxu0 0.0
      %1389 = vmatpush2.msra.mxu0 0.0
      %1390 = vmatprep.subr.mxu0 0.0
      %1391 = vmatpush2.msra.mxu0 0.0
      %1392 = vmatprep.subr.mxu0 0.0
      %1393 = vmatpush2.msra.mxu0 0.0
      %1394 = vmatprep.subr.mxu0 0.0
      %1395 = vmatpush2.msra.mxu0 0.0
      %1396 = vmatprep.subr.mxu0 0.0
      %1397 = vmatpush2.msra.mxu0 0.0
      %1398 = vmatprep.subr.mxu0 0.0
      %1399 = vmatpush2.msra.mxu0 0.0
      %1400 = vmatprep.subr.mxu0 0.0
      %1401 = vmatpush2.msra.mxu0 0.0
      %1402 = vmatprep.subr.mxu0 0.0
      %1403 = vmatpush2.msra.mxu0 0.0
      %1404 = vmatprep.subr.mxu0 0.0
      %1405 = vmatpush2.msra.mxu0 0.0
      %1406 = vmatprep.subr.mxu0 0.0
      %1407 = vmatpush2.msra.mxu0 0.0
      %1408 = vmatprep.subr.mxu0 0.0
      %1409 = vmatpush2.msra.mxu0 0.0
      %1410 = vmatprep.subr.mxu0 0.0
      %1411 = vmatpush2.msra.mxu0 0.0
      %1412 = vmatprep.subr.mxu0 0.0
      %1413 = vmatpush2.msra.mxu0 0.0
      %1414 = vmatprep.subr.mxu0 0.0
      %1415 = vmatpush2.msra.mxu0 0.0
      %1416 = vmatprep.mubr.f32.mxu0 0.0
      %1417 = vmatmul.mubr.f32.gmra.mxu0 %v1347
      %v1418 = vpop.f32.mrf.mxu0
      %v1419 = vadd.f32 0.0, %v1418
      %v1420 = vpop.f32.mrf.mxu0
      %1421 = vmatprep.mubr.f32.mxu0 0.0
      %1422 = vmatmul.mubr.f32.gmra.mxu0 %v1350
      %v1423 = vpop.f32.mrf.mxu0
      %v1424 = vadd.f32 0.0, %v1423
      %v1425 = vpop.f32.mrf.mxu0
      %1426 = vdwg.mxu0
      %1427 = vrot.lane.b32.xlu0 %v1219, 120
      %v1428 = vpop.permute.xlu0 %1427
      %1429 = vrot.lane.b32.xlu0 %v1224, 120
      %v1430 = vpop.permute.xlu0 %1429
      %1431 = vrot.lane.b32.xlu0 %v1219, 88
      %v1432 = vpop.permute.xlu0 %1431
      %1433 = vrot.lane.b32.xlu0 %v1224, 88
      %v1434 = vpop.permute.xlu0 %1433
      %v1435 = vsel %vm1233, %v1428, 0
      %v1437 = vsel %vm1233, %v1430, 0
      %v1439 = vsel %vm1233, %v1432, 0
      %v1441 = vsel %vm1233, %v1434, 0
      %1443 = vmatprep.subr.mxu0 0.0
      %1444 = vmatpush1.xpose.msra.mxu0 0.0
      %1445 = vmatprep.subr.mxu0 0.0
      %1446 = vmatpush1.xpose.msra.mxu0 0.0
      %1447 = vmatprep.subr.mxu0 0.0
      %1448 = vmatpush1.xpose.msra.mxu0 0.0
      %1449 = vmatprep.subr.mxu0 0.0
      %1450 = vmatpush1.xpose.msra.mxu0 0.0
      %1451 = vmatprep.subr.mxu0 0.0
      %1452 = vmatpush1.xpose.msra.mxu0 0.0
      %1453 = vmatprep.subr.mxu0 0.0
      %1454 = vmatpush1.xpose.msra.mxu0 0.0
      %1455 = vmatprep.subr.mxu0 0.0
      %1456 = vmatpush1.xpose.msra.mxu0 0.0
      %1457 = vmatprep.subr.mxu0 0.0
      %1458 = vmatpush1.xpose.msra.mxu0 0.0
      %1459 = vmatprep.subr.mxu0 0.0
      %1460 = vmatpush1.xpose.msra.mxu0 0.0
      %1461 = vmatprep.subr.mxu0 0.0
      %1462 = vmatpush1.xpose.msra.mxu0 0.0
      %1463 = vmatprep.subr.mxu0 0.0
      %1464 = vmatpush1.xpose.msra.mxu0 0.0
      %1465 = vmatprep.subr.mxu0 0.0
      %1466 = vmatpush1.xpose.msra.mxu0 0.0
      %1467 = vmatprep.subr.mxu0 0.0
      %1468 = vmatpush1.xpose.msra.mxu0 0.0
      %1469 = vmatprep.subr.mxu0 0.0
      %1470 = vmatpush1.xpose.msra.mxu0 0.0
      %1471 = vmatprep.subr.mxu0 0.0
      %1472 = vmatpush1.xpose.msra.mxu0 %v1441
      %1473 = vmatprep.subr.mxu0 0.0
      %1474 = vmatpush1.xpose.msra.mxu0 %v1439
      %1475 = vmatprep.subr.mxu0 0.0
      %1476 = vmatpush2.xpose.msra.mxu0 0.0
      %1477 = vmatprep.subr.mxu0 0.0
      %1478 = vmatpush2.xpose.msra.mxu0 0.0
      %1479 = vmatprep.subr.mxu0 0.0
      %1480 = vmatpush2.xpose.msra.mxu0 0.0
      %1481 = vmatprep.subr.mxu0 0.0
      %1482 = vmatpush2.xpose.msra.mxu0 0.0
      %1483 = vmatprep.subr.mxu0 0.0
      %1484 = vmatpush2.xpose.msra.mxu0 0.0
      %1485 = vmatprep.subr.mxu0 0.0
      %1486 = vmatpush2.xpose.msra.mxu0 0.0
      %1487 = vmatprep.subr.mxu0 0.0
      %1488 = vmatpush2.xpose.msra.mxu0 0.0
      %1489 = vmatprep.subr.mxu0 0.0
      %1490 = vmatpush2.xpose.msra.mxu0 0.0
      %1491 = vmatprep.subr.mxu0 0.0
      %1492 = vmatpush2.xpose.msra.mxu0 0.0
      %1493 = vmatprep.subr.mxu0 0.0
      %1494 = vmatpush2.xpose.msra.mxu0 0.0
      %1495 = vmatprep.subr.mxu0 0.0
      %1496 = vmatpush2.xpose.msra.mxu0 0.0
      %1497 = vmatprep.subr.mxu0 0.0
      %1498 = vmatpush2.xpose.msra.mxu0 0.0
      %1499 = vmatprep.subr.mxu0 0.0
      %1500 = vmatpush2.xpose.msra.mxu0 0.0
      %1501 = vmatprep.subr.mxu0 0.0
      %1502 = vmatpush2.xpose.msra.mxu0 0.0
      %1503 = vmatprep.subr.mxu0 0.0
      %1504 = vmatpush2.xpose.msra.mxu0 0.0
      %1505 = vmatprep.subr.mxu0 0.0
      %1506 = vmatpush2.xpose.msra.mxu0 0.0
      %1507 = vmatprep.mubr.f32.mxu0 0.0
      %1508 = vmatmul.mubr.f32.gmra.mxu0 %v1435
      %v1509 = vpop.f32.mrf.mxu0
      %v1510 = vadd.f32 %v1133, %v1509
      %v1511 = vpop.f32.mrf.mxu0
      %1512 = vmatprep.mubr.f32.mxu0 0.0
      %1513 = vmatmul.mubr.f32.gmra.mxu0 %v1437
      %v1514 = vpop.f32.mrf.mxu0
      %v1515 = vadd.f32 %v1133, %v1514
      %v1516 = vpop.f32.mrf.mxu0
      %1517 = vdwg.mxu0
      %v1518 = vsel %vm1317, %v1510, -inf
      %1519 = vmax.xlane.f32.xlu0 %v1518
      %v1520 = vpop.xlane.xlu0 %1519
      %v1521 = vsel %vm1317, %v1515, -inf
      %1522 = vmax.xlane.f32.xlu0 %v1521
      %v1523 = vpop.xlane.xlu0 %1522
      %v1524 = vsub.f32 %v1510, %v1520
      %v1525 = vsub.f32 %v1515, %v1523
      %v1526 = vmul.f32 %v1524, 1.442695
      %v1527 = vpow.pop %v1526
      %v1528 = vmul.f32 %v1525, 1.442695
      %v1529 = vpow.pop %v1528
      %v1530 = vsel %vm1317, %v1527, 0.0
      %1531 = vadd.xlane.f32.xlu0 %v1530
      %v1532 = vpop.xlane.xlu0 %1531
      %v1533 = vsel %vm1317, %v1529, 0.0
      %1534 = vadd.xlane.f32.xlu0 %v1533
      %v1535 = vpop.xlane.xlu0 %1534
      %v1536 = vrcp.pop %v1532
      %v1537 = vrcp.pop %v1535
      %v1538 = vmul.f32 %v1527, %v1536
      %v1539 = vmul.f32 %v1529, %v1537
      %1540 = vrot.lane.b32.xlu0 %v1219, 56
      %v1541 = vpop.permute.xlu0 %1540
      %1542 = vrot.lane.b32.xlu0 %v1224, 56
      %v1543 = vpop.permute.xlu0 %1542
      %v1547 = vsel %vm1317, %v1538, 0
      %v1550 = vsel %vm1317, %v1539, 0
      %1552 = vmatprep.subr.mxu0 0.0
      %1553 = vmatpush1.msra.mxu0 0.0
      %1554 = vmatprep.subr.mxu0 0.0
      %1555 = vmatpush1.msra.mxu0 0.0
      %1556 = vmatprep.subr.mxu0 0.0
      %1557 = vmatpush1.msra.mxu0 0.0
      %1558 = vmatprep.subr.mxu0 0.0
      %1559 = vmatpush1.msra.mxu0 0.0
      %1560 = vmatprep.subr.mxu0 0.0
      %1561 = vmatpush1.msra.mxu0 0.0
      %1562 = vmatprep.subr.mxu0 0.0
      %1563 = vmatpush1.msra.mxu0 0.0
      %1564 = vmatprep.subr.mxu0 0.0
      %1565 = vmatpush1.msra.mxu0 0.0
      %1566 = vmatprep.subr.mxu0 0.0
      %1567 = vmatpush1.msra.mxu0 0.0
      %1568 = vmatprep.subr.mxu0 0.0
      %1569 = vmatpush1.msra.mxu0 0.0
      %1570 = vmatprep.subr.mxu0 0.0
      %1571 = vmatpush1.msra.mxu0 0.0
      %1572 = vmatprep.subr.mxu0 0.0
      %1573 = vmatpush1.msra.mxu0 0.0
      %1574 = vmatprep.subr.mxu0 0.0
      %1575 = vmatpush1.msra.mxu0 0.0
      %1576 = vmatprep.subr.mxu0 0.0
      %1577 = vmatpush1.msra.mxu0 0.0
      %1578 = vmatprep.subr.mxu0 0.0
      %1579 = vmatpush1.msra.mxu0 0.0
      %1580 = vmatprep.subr.mxu0 0.0
      %1581 = vmatpush1.msra.mxu0 %v1543
      %1582 = vmatprep.subr.mxu0 0.0
      %1583 = vmatpush1.msra.mxu0 %v1541
      %1584 = vmatprep.subr.mxu0 0.0
      %1585 = vmatpush2.msra.mxu0 0.0
      %1586 = vmatprep.subr.mxu0 0.0
      %1587 = vmatpush2.msra.mxu0 0.0
      %1588 = vmatprep.subr.mxu0 0.0
      %1589 = vmatpush2.msra.mxu0 0.0
      %1590 = vmatprep.subr.mxu0 0.0
      %1591 = vmatpush2.msra.mxu0 0.0
      %1592 = vmatprep.subr.mxu0 0.0
      %1593 = vmatpush2.msra.mxu0 0.0
      %1594 = vmatprep.subr.mxu0 0.0
      %1595 = vmatpush2.msra.mxu0 0.0
      %1596 = vmatprep.subr.mxu0 0.0
      %1597 = vmatpush2.msra.mxu0 0.0
      %1598 = vmatprep.subr.mxu0 0.0
      %1599 = vmatpush2.msra.mxu0 0.0
      %1600 = vmatprep.subr.mxu0 0.0
      %1601 = vmatpush2.msra.mxu0 0.0
      %1602 = vmatprep.subr.mxu0 0.0
      %1603 = vmatpush2.msra.mxu0 0.0
      %1604 = vmatprep.subr.mxu0 0.0
      %1605 = vmatpush2.msra.mxu0 0.0
      %1606 = vmatprep.subr.mxu0 0.0
      %1607 = vmatpush2.msra.mxu0 0.0
      %1608 = vmatprep.subr.mxu0 0.0
      %1609 = vmatpush2.msra.mxu0 0.0
      %1610 = vmatprep.subr.mxu0 0.0
      %1611 = vmatpush2.msra.mxu0 0.0
      %1612 = vmatprep.subr.mxu0 0.0
      %1613 = vmatpush2.msra.mxu0 0.0
      %1614 = vmatprep.subr.mxu0 0.0
      %1615 = vmatpush2.msra.mxu0 0.0
      %1616 = vmatprep.mubr.f32.mxu0 0.0
      %1617 = vmatmul.mubr.f32.gmra.mxu0 %v1547
      %v1618 = vpop.f32.mrf.mxu0
      %v1619 = vadd.f32 0.0, %v1618
      %v1620 = vpop.f32.mrf.mxu0
      %1621 = vmatprep.mubr.f32.mxu0 0.0
      %1622 = vmatmul.mubr.f32.gmra.mxu0 %v1550
      %v1623 = vpop.f32.mrf.mxu0
      %v1624 = vadd.f32 0.0, %v1623
      %v1625 = vpop.f32.mrf.mxu0
      %1626 = vdwg.mxu0
      %1627 = vrot.lane.b32.xlu0 %v1219, 112
      %v1628 = vpop.permute.xlu0 %1627
      %1629 = vrot.lane.b32.xlu0 %v1224, 112
      %v1630 = vpop.permute.xlu0 %1629
      %1631 = vrot.lane.b32.xlu0 %v1219, 80
      %v1632 = vpop.permute.xlu0 %1631
      %1633 = vrot.lane.b32.xlu0 %v1224, 80
      %v1634 = vpop.permute.xlu0 %1633
      %v1635 = vsel %vm1233, %v1628, 0
      %v1637 = vsel %vm1233, %v1630, 0
      %v1639 = vsel %vm1233, %v1632, 0
      %v1641 = vsel %vm1233, %v1634, 0
      %1643 = vmatprep.subr.mxu0 0.0
      %1644 = vmatpush1.xpose.msra.mxu0 0.0
      %1645 = vmatprep.subr.mxu0 0.0
      %1646 = vmatpush1.xpose.msra.mxu0 0.0
      %1647 = vmatprep.subr.mxu0 0.0
      %1648 = vmatpush1.xpose.msra.mxu0 0.0
      %1649 = vmatprep.subr.mxu0 0.0
      %1650 = vmatpush1.xpose.msra.mxu0 0.0
      %1651 = vmatprep.subr.mxu0 0.0
      %1652 = vmatpush1.xpose.msra.mxu0 0.0
      %1653 = vmatprep.subr.mxu0 0.0
      %1654 = vmatpush1.xpose.msra.mxu0 0.0
      %1655 = vmatprep.subr.mxu0 0.0
      %1656 = vmatpush1.xpose.msra.mxu0 0.0
      %1657 = vmatprep.subr.mxu0 0.0
      %1658 = vmatpush1.xpose.msra.mxu0 0.0
      %1659 = vmatprep.subr.mxu0 0.0
      %1660 = vmatpush1.xpose.msra.mxu0 0.0
      %1661 = vmatprep.subr.mxu0 0.0
      %1662 = vmatpush1.xpose.msra.mxu0 0.0
      %1663 = vmatprep.subr.mxu0 0.0
      %1664 = vmatpush1.xpose.msra.mxu0 0.0
      %1665 = vmatprep.subr.mxu0 0.0
      %1666 = vmatpush1.xpose.msra.mxu0 0.0
      %1667 = vmatprep.subr.mxu0 0.0
      %1668 = vmatpush1.xpose.msra.mxu0 0.0
      %1669 = vmatprep.subr.mxu0 0.0
      %1670 = vmatpush1.xpose.msra.mxu0 0.0
      %1671 = vmatprep.subr.mxu0 0.0
      %1672 = vmatpush1.xpose.msra.mxu0 %v1641
      %1673 = vmatprep.subr.mxu0 0.0
      %1674 = vmatpush1.xpose.msra.mxu0 %v1639
      %1675 = vmatprep.subr.mxu0 0.0
      %1676 = vmatpush2.xpose.msra.mxu0 0.0
      %1677 = vmatprep.subr.mxu0 0.0
      %1678 = vmatpush2.xpose.msra.mxu0 0.0
      %1679 = vmatprep.subr.mxu0 0.0
      %1680 = vmatpush2.xpose.msra.mxu0 0.0
      %1681 = vmatprep.subr.mxu0 0.0
      %1682 = vmatpush2.xpose.msra.mxu0 0.0
      %1683 = vmatprep.subr.mxu0 0.0
      %1684 = vmatpush2.xpose.msra.mxu0 0.0
      %1685 = vmatprep.subr.mxu0 0.0
      %1686 = vmatpush2.xpose.msra.mxu0 0.0
      %1687 = vmatprep.subr.mxu0 0.0
      %1688 = vmatpush2.xpose.msra.mxu0 0.0
      %1689 = vmatprep.subr.mxu0 0.0
      %1690 = vmatpush2.xpose.msra.mxu0 0.0
      %1691 = vmatprep.subr.mxu0 0.0
      %1692 = vmatpush2.xpose.msra.mxu0 0.0
      %1693 = vmatprep.subr.mxu0 0.0
      %1694 = vmatpush2.xpose.msra.mxu0 0.0
      %1695 = vmatprep.subr.mxu0 0.0
      %1696 = vmatpush2.xpose.msra.mxu0 0.0
      %1697 = vmatprep.subr.mxu0 0.0
      %1698 = vmatpush2.xpose.msra.mxu0 0.0
      %1699 = vmatprep.subr.mxu0 0.0
      %1700 = vmatpush2.xpose.msra.mxu0 0.0
      %1701 = vmatprep.subr.mxu0 0.0
      %1702 = vmatpush2.xpose.msra.mxu0 0.0
      %1703 = vmatprep.subr.mxu0 0.0
      %1704 = vmatpush2.xpose.msra.mxu0 0.0
      %1705 = vmatprep.subr.mxu0 0.0
      %1706 = vmatpush2.xpose.msra.mxu0 0.0
      %1707 = vmatprep.mubr.f32.mxu0 0.0
      %1708 = vmatmul.mubr.f32.gmra.mxu0 %v1635
      %v1709 = vpop.f32.mrf.mxu0
      %v1710 = vadd.f32 %v1133, %v1709
      %v1711 = vpop.f32.mrf.mxu0
      %1712 = vmatprep.mubr.f32.mxu0 0.0
      %1713 = vmatmul.mubr.f32.gmra.mxu0 %v1637
      %v1714 = vpop.f32.mrf.mxu0
      %v1715 = vadd.f32 %v1133, %v1714
      %v1716 = vpop.f32.mrf.mxu0
      %1717 = vdwg.mxu0
      %v1718 = vsel %vm1317, %v1710, -inf
      %1719 = vmax.xlane.f32.xlu0 %v1718
      %v1720 = vpop.xlane.xlu0 %1719
      %v1721 = vsel %vm1317, %v1715, -inf
      %1722 = vmax.xlane.f32.xlu0 %v1721
      %v1723 = vpop.xlane.xlu0 %1722
      %v1724 = vsub.f32 %v1710, %v1720
      %v1725 = vsub.f32 %v1715, %v1723
      %v1726 = vmul.f32 %v1724, 1.442695
      %v1727 = vpow.pop %v1726
      %v1728 = vmul.f32 %v1725, 1.442695
      %v1729 = vpow.pop %v1728
      %v1730 = vsel %vm1317, %v1727, 0.0
      %1731 = vadd.xlane.f32.xlu0 %v1730
      %v1732 = vpop.xlane.xlu0 %1731
      %v1733 = vsel %vm1317, %v1729, 0.0
      %1734 = vadd.xlane.f32.xlu0 %v1733
      %v1735 = vpop.xlane.xlu0 %1734
      %v1736 = vrcp.pop %v1732
      %v1737 = vrcp.pop %v1735
      %v1738 = vmul.f32 %v1727, %v1736
      %v1739 = vmul.f32 %v1729, %v1737
      %1740 = vrot.lane.b32.xlu0 %v1219, 48
      %v1741 = vpop.permute.xlu0 %1740
      %1742 = vrot.lane.b32.xlu0 %v1224, 48
      %v1743 = vpop.permute.xlu0 %1742
      %v1747 = vsel %vm1317, %v1738, 0
      %v1750 = vsel %vm1317, %v1739, 0
      %1752 = vmatprep.subr.mxu0 0.0
      %1753 = vmatpush1.msra.mxu0 0.0
      %1754 = vmatprep.subr.mxu0 0.0
      %1755 = vmatpush1.msra.mxu0 0.0
      %1756 = vmatprep.subr.mxu0 0.0
      %1757 = vmatpush1.msra.mxu0 0.0
      %1758 = vmatprep.subr.mxu0 0.0
      %1759 = vmatpush1.msra.mxu0 0.0
      %1760 = vmatprep.subr.mxu0 0.0
      %1761 = vmatpush1.msra.mxu0 0.0
      %1762 = vmatprep.subr.mxu0 0.0
      %1763 = vmatpush1.msra.mxu0 0.0
      %1764 = vmatprep.subr.mxu0 0.0
      %1765 = vmatpush1.msra.mxu0 0.0
      %1766 = vmatprep.subr.mxu0 0.0
      %1767 = vmatpush1.msra.mxu0 0.0
      %1768 = vmatprep.subr.mxu0 0.0
      %1769 = vmatpush1.msra.mxu0 0.0
      %1770 = vmatprep.subr.mxu0 0.0
      %1771 = vmatpush1.msra.mxu0 0.0
      %1772 = vmatprep.subr.mxu0 0.0
      %1773 = vmatpush1.msra.mxu0 0.0
      %1774 = vmatprep.subr.mxu0 0.0
      %1775 = vmatpush1.msra.mxu0 0.0
      %1776 = vmatprep.subr.mxu0 0.0
      %1777 = vmatpush1.msra.mxu0 0.0
      %1778 = vmatprep.subr.mxu0 0.0
      %1779 = vmatpush1.msra.mxu0 0.0
      %1780 = vmatprep.subr.mxu0 0.0
      %1781 = vmatpush1.msra.mxu0 %v1743
      %1782 = vmatprep.subr.mxu0 0.0
      %1783 = vmatpush1.msra.mxu0 %v1741
      %1784 = vmatprep.subr.mxu0 0.0
      %1785 = vmatpush2.msra.mxu0 0.0
      %1786 = vmatprep.subr.mxu0 0.0
      %1787 = vmatpush2.msra.mxu0 0.0
      %1788 = vmatprep.subr.mxu0 0.0
      %1789 = vmatpush2.msra.mxu0 0.0
      %1790 = vmatprep.subr.mxu0 0.0
      %1791 = vmatpush2.msra.mxu0 0.0
      %1792 = vmatprep.subr.mxu0 0.0
      %1793 = vmatpush2.msra.mxu0 0.0
      %1794 = vmatprep.subr.mxu0 0.0
      %1795 = vmatpush2.msra.mxu0 0.0
      %1796 = vmatprep.subr.mxu0 0.0
      %1797 = vmatpush2.msra.mxu0 0.0
      %1798 = vmatprep.subr.mxu0 0.0
      %1799 = vmatpush2.msra.mxu0 0.0
      %1800 = vmatprep.subr.mxu0 0.0
      %1801 = vmatpush2.msra.mxu0 0.0
      %1802 = vmatprep.subr.mxu0 0.0
      %1803 = vmatpush2.msra.mxu0 0.0
      %1804 = vmatprep.subr.mxu0 0.0
      %1805 = vmatpush2.msra.mxu0 0.0
      %1806 = vmatprep.subr.mxu0 0.0
      %1807 = vmatpush2.msra.mxu0 0.0
      %1808 = vmatprep.subr.mxu0 0.0
      %1809 = vmatpush2.msra.mxu0 0.0
      %1810 = vmatprep.subr.mxu0 0.0
      %1811 = vmatpush2.msra.mxu0 0.0
      %1812 = vmatprep.subr.mxu0 0.0
      %1813 = vmatpush2.msra.mxu0 0.0
      %1814 = vmatprep.subr.mxu0 0.0
      %1815 = vmatpush2.msra.mxu0 0.0
      %1816 = vmatprep.mubr.f32.mxu0 0.0
      %1817 = vmatmul.mubr.f32.gmra.mxu0 %v1747
      %v1818 = vpop.f32.mrf.mxu0
      %v1819 = vadd.f32 0.0, %v1818
      %v1820 = vpop.f32.mrf.mxu0
      %1821 = vmatprep.mubr.f32.mxu0 0.0
      %1822 = vmatmul.mubr.f32.gmra.mxu0 %v1750
      %v1823 = vpop.f32.mrf.mxu0
      %v1824 = vadd.f32 0.0, %v1823
      %v1825 = vpop.f32.mrf.mxu0
      %1826 = vdwg.mxu0
      %1827 = vrot.lane.b32.xlu0 %v1219, 104
      %v1828 = vpop.permute.xlu0 %1827
      %1829 = vrot.lane.b32.xlu0 %v1224, 104
      %v1830 = vpop.permute.xlu0 %1829
      %1831 = vrot.lane.b32.xlu0 %v1219, 72
      %v1832 = vpop.permute.xlu0 %1831
      %1833 = vrot.lane.b32.xlu0 %v1224, 72
      %v1834 = vpop.permute.xlu0 %1833
      %v1835 = vsel %vm1233, %v1828, 0
      %v1837 = vsel %vm1233, %v1830, 0
      %v1839 = vsel %vm1233, %v1832, 0
      %v1841 = vsel %vm1233, %v1834, 0
      %1843 = vmatprep.subr.mxu0 0.0
      %1844 = vmatpush1.xpose.msra.mxu0 0.0
      %1845 = vmatprep.subr.mxu0 0.0
      %1846 = vmatpush1.xpose.msra.mxu0 0.0
      %1847 = vmatprep.subr.mxu0 0.0
      %1848 = vmatpush1.xpose.msra.mxu0 0.0
      %1849 = vmatprep.subr.mxu0 0.0
      %1850 = vmatpush1.xpose.msra.mxu0 0.0
      %1851 = vmatprep.subr.mxu0 0.0
      %1852 = vmatpush1.xpose.msra.mxu0 0.0
      %1853 = vmatprep.subr.mxu0 0.0
      %1854 = vmatpush1.xpose.msra.mxu0 0.0
      %1855 = vmatprep.subr.mxu0 0.0
      %1856 = vmatpush1.xpose.msra.mxu0 0.0
      %1857 = vmatprep.subr.mxu0 0.0
      %1858 = vmatpush1.xpose.msra.mxu0 0.0
      %1859 = vmatprep.subr.mxu0 0.0
      %1860 = vmatpush1.xpose.msra.mxu0 0.0
      %1861 = vmatprep.subr.mxu0 0.0
      %1862 = vmatpush1.xpose.msra.mxu0 0.0
      %1863 = vmatprep.subr.mxu0 0.0
      %1864 = vmatpush1.xpose.msra.mxu0 0.0
      %1865 = vmatprep.subr.mxu0 0.0
      %1866 = vmatpush1.xpose.msra.mxu0 0.0
      %1867 = vmatprep.subr.mxu0 0.0
      %1868 = vmatpush1.xpose.msra.mxu0 0.0
      %1869 = vmatprep.subr.mxu0 0.0
      %1870 = vmatpush1.xpose.msra.mxu0 0.0
      %1871 = vmatprep.subr.mxu0 0.0
      %1872 = vmatpush1.xpose.msra.mxu0 %v1841
      %1873 = vmatprep.subr.mxu0 0.0
      %1874 = vmatpush1.xpose.msra.mxu0 %v1839
      %1875 = vmatprep.subr.mxu0 0.0
      %1876 = vmatpush2.xpose.msra.mxu0 0.0
      %1877 = vmatprep.subr.mxu0 0.0
      %1878 = vmatpush2.xpose.msra.mxu0 0.0
      %1879 = vmatprep.subr.mxu0 0.0
      %1880 = vmatpush2.xpose.msra.mxu0 0.0
      %1881 = vmatprep.subr.mxu0 0.0
      %1882 = vmatpush2.xpose.msra.mxu0 0.0
      %1883 = vmatprep.subr.mxu0 0.0
      %1884 = vmatpush2.xpose.msra.mxu0 0.0
      %1885 = vmatprep.subr.mxu0 0.0
      %1886 = vmatpush2.xpose.msra.mxu0 0.0
      %1887 = vmatprep.subr.mxu0 0.0
      %1888 = vmatpush2.xpose.msra.mxu0 0.0
      %1889 = vmatprep.subr.mxu0 0.0
      %1890 = vmatpush2.xpose.msra.mxu0 0.0
      %1891 = vmatprep.subr.mxu0 0.0
      %1892 = vmatpush2.xpose.msra.mxu0 0.0
      %1893 = vmatprep.subr.mxu0 0.0
      %1894 = vmatpush2.xpose.msra.mxu0 0.0
      %1895 = vmatprep.subr.mxu0 0.0
      %1896 = vmatpush2.xpose.msra.mxu0 0.0
      %1897 = vmatprep.subr.mxu0 0.0
      %1898 = vmatpush2.xpose.msra.mxu0 0.0
      %1899 = vmatprep.subr.mxu0 0.0
      %1900 = vmatpush2.xpose.msra.mxu0 0.0
      %1901 = vmatprep.subr.mxu0 0.0
      %1902 = vmatpush2.xpose.msra.mxu0 0.0
      %1903 = vmatprep.subr.mxu0 0.0
      %1904 = vmatpush2.xpose.msra.mxu0 0.0
      %1905 = vmatprep.subr.mxu0 0.0
      %1906 = vmatpush2.xpose.msra.mxu0 0.0
      %1907 = vmatprep.mubr.f32.mxu0 0.0
      %1908 = vmatmul.mubr.f32.gmra.mxu0 %v1835
      %v1909 = vpop.f32.mrf.mxu0
      %v1910 = vadd.f32 %v1133, %v1909
      %v1911 = vpop.f32.mrf.mxu0
      %1912 = vmatprep.mubr.f32.mxu0 0.0
      %1913 = vmatmul.mubr.f32.gmra.mxu0 %v1837
      %v1914 = vpop.f32.mrf.mxu0
      %v1915 = vadd.f32 %v1133, %v1914
      %v1916 = vpop.f32.mrf.mxu0
      %1917 = vdwg.mxu0
      %v1918 = vsel %vm1317, %v1910, -inf
      %1919 = vmax.xlane.f32.xlu0 %v1918
      %v1920 = vpop.xlane.xlu0 %1919
      %v1921 = vsel %vm1317, %v1915, -inf
      %1922 = vmax.xlane.f32.xlu0 %v1921
      %v1923 = vpop.xlane.xlu0 %1922
      %v1924 = vsub.f32 %v1910, %v1920
      %v1925 = vsub.f32 %v1915, %v1923
      %v1926 = vmul.f32 %v1924, 1.442695
      %v1927 = vpow.pop %v1926
      %v1928 = vmul.f32 %v1925, 1.442695
      %v1929 = vpow.pop %v1928
      %v1930 = vsel %vm1317, %v1927, 0.0
      %1931 = vadd.xlane.f32.xlu0 %v1930
      %v1932 = vpop.xlane.xlu0 %1931
      %v1933 = vsel %vm1317, %v1929, 0.0
      %1934 = vadd.xlane.f32.xlu0 %v1933
      %v1935 = vpop.xlane.xlu0 %1934
      %v1936 = vrcp.pop %v1932
      %v1937 = vrcp.pop %v1935
      %v1938 = vmul.f32 %v1927, %v1936
      %v1939 = vmul.f32 %v1929, %v1937
      %1940 = vrot.lane.b32.xlu0 %v1219, 40
      %v1941 = vpop.permute.xlu0 %1940
      %1942 = vrot.lane.b32.xlu0 %v1224, 40
      %v1943 = vpop.permute.xlu0 %1942
      %v1947 = vsel %vm1317, %v1938, 0
      %v1950 = vsel %vm1317, %v1939, 0
      %1952 = vmatprep.subr.mxu0 0.0
      %1953 = vmatpush1.msra.mxu0 0.0
      %1954 = vmatprep.subr.mxu0 0.0
      %1955 = vmatpush1.msra.mxu0 0.0
      %1956 = vmatprep.subr.mxu0 0.0
      %1957 = vmatpush1.msra.mxu0 0.0
      %1958 = vmatprep.subr.mxu0 0.0
      %1959 = vmatpush1.msra.mxu0 0.0
      %1960 = vmatprep.subr.mxu0 0.0
      %1961 = vmatpush1.msra.mxu0 0.0
      %1962 = vmatprep.subr.mxu0 0.0
      %1963 = vmatpush1.msra.mxu0 0.0
      %1964 = vmatprep.subr.mxu0 0.0
      %1965 = vmatpush1.msra.mxu0 0.0
      %1966 = vmatprep.subr.mxu0 0.0
      %1967 = vmatpush1.msra.mxu0 0.0
      %1968 = vmatprep.subr.mxu0 0.0
      %1969 = vmatpush1.msra.mxu0 0.0
      %1970 = vmatprep.subr.mxu0 0.0
      %1971 = vmatpush1.msra.mxu0 0.0
      %1972 = vmatprep.subr.mxu0 0.0
      %1973 = vmatpush1.msra.mxu0 0.0
      %1974 = vmatprep.subr.mxu0 0.0
      %1975 = vmatpush1.msra.mxu0 0.0
      %1976 = vmatprep.subr.mxu0 0.0
      %1977 = vmatpush1.msra.mxu0 0.0
      %1978 = vmatprep.subr.mxu0 0.0
      %1979 = vmatpush1.msra.mxu0 0.0
      %1980 = vmatprep.subr.mxu0 0.0
      %1981 = vmatpush1.msra.mxu0 %v1943
      %1982 = vmatprep.subr.mxu0 0.0
      %1983 = vmatpush1.msra.mxu0 %v1941
      %1984 = vmatprep.subr.mxu0 0.0
      %1985 = vmatpush2.msra.mxu0 0.0
      %1986 = vmatprep.subr.mxu0 0.0
      %1987 = vmatpush2.msra.mxu0 0.0
      %1988 = vmatprep.subr.mxu0 0.0
      %1989 = vmatpush2.msra.mxu0 0.0
      %1990 = vmatprep.subr.mxu0 0.0
      %1991 = vmatpush2.msra.mxu0 0.0
      %1992 = vmatprep.subr.mxu0 0.0
      %1993 = vmatpush2.msra.mxu0 0.0
      %1994 = vmatprep.subr.mxu0 0.0
      %1995 = vmatpush2.msra.mxu0 0.0
      %1996 = vmatprep.subr.mxu0 0.0
      %1997 = vmatpush2.msra.mxu0 0.0
      %1998 = vmatprep.subr.mxu0 0.0
      %1999 = vmatpush2.msra.mxu0 0.0
      %2000 = vmatprep.subr.mxu0 0.0
      %2001 = vmatpush2.msra.mxu0 0.0
      %2002 = vmatprep.subr.mxu0 0.0
      %2003 = vmatpush2.msra.mxu0 0.0
      %2004 = vmatprep.subr.mxu0 0.0
      %2005 = vmatpush2.msra.mxu0 0.0
      %2006 = vmatprep.subr.mxu0 0.0
      %2007 = vmatpush2.msra.mxu0 0.0
      %2008 = vmatprep.subr.mxu0 0.0
      %2009 = vmatpush2.msra.mxu0 0.0
      %2010 = vmatprep.subr.mxu0 0.0
      %2011 = vmatpush2.msra.mxu0 0.0
      %2012 = vmatprep.subr.mxu0 0.0
      %2013 = vmatpush2.msra.mxu0 0.0
      %2014 = vmatprep.subr.mxu0 0.0
      %2015 = vmatpush2.msra.mxu0 0.0
      %2016 = vmatprep.mubr.f32.mxu0 0.0
      %2017 = vmatmul.mubr.f32.gmra.mxu0 %v1947
      %v2018 = vpop.f32.mrf.mxu0
      %v2019 = vadd.f32 0.0, %v2018
      %v2020 = vpop.f32.mrf.mxu0
      %2021 = vmatprep.mubr.f32.mxu0 0.0
      %2022 = vmatmul.mubr.f32.gmra.mxu0 %v1950
      %v2023 = vpop.f32.mrf.mxu0
      %v2024 = vadd.f32 0.0, %v2023
      %v2025 = vpop.f32.mrf.mxu0
      %2026 = vdwg.mxu0
      %2029 = vrot.lane.b32.xlu0 %v1619, 8
      %v2030 = vpop.permute.xlu0 %2029
      %2031 = vrot.lane.b32.xlu0 %v1624, 8
      %v2032 = vpop.permute.xlu0 %2031
      %2037 = vrot.lane.b32.xlu0 %v1819, 16
      %v2038 = vpop.permute.xlu0 %2037
      %2039 = vrot.lane.b32.xlu0 %v1824, 16
      %v2040 = vpop.permute.xlu0 %2039
      %2045 = vrot.lane.b32.xlu0 %v2019, 24
      %v2046 = vpop.permute.xlu0 %2045
      %2047 = vrot.lane.b32.xlu0 %v2024, 24
      %v2048 = vpop.permute.xlu0 %2047
      %v2051 = vsel %vm1233, %v1419, %v2030
      %v2052 = vsel %vm1233, %v1424, %v2032
      %v2053 = vsel %vm1317, %v2051, %v2038
      %v2054 = vsel %vm1317, %v2052, %v2040
      %v2055 = vsel %vm963, %v2053, %v2046
      %v2056 = vsel %vm963, %v2054, %v2048
      %v2057 = vld [vmem:[%s16] sm:$0xff]
      %v2058 = vld [vmem:[%s16 + $0x8] sm:$0xff]
      %v2059 = vld [vmem:[%s16 + $0x10] sm:$0xff]
      %v2060 = vld [vmem:[%s16 + $0x18] sm:$0xff]
      %v2061 = vld [vmem:[%s17] sm:$0x1]
      %v2063 = vlaneseq
      %v2064 = vshrl.u32 %v2063, 7
      %v2065 = vsub.s32 0, %v2064
      %v2066 = vrot.slane %v2061, %v2065
      %v2069 = vsel %vm1082, %v2055, 0
      %v2072 = vsel %vm1082, %v2056, 0
      %2074 = vmatprep.subr.mxu0 0.0
      %2075 = vmatpush1.msra.mxu0 0.0
      %2076 = vmatprep.subr.mxu0 0.0
      %2077 = vmatpush1.msra.mxu0 0.0
      %2078 = vmatprep.subr.mxu0 0.0
      %2079 = vmatpush1.msra.mxu0 0.0
      %2080 = vmatprep.subr.mxu0 0.0
      %2081 = vmatpush1.msra.mxu0 0.0
      %2082 = vmatprep.subr.mxu0 0.0
      %2083 = vmatpush1.msra.mxu0 0.0
      %2084 = vmatprep.subr.mxu0 0.0
      %2085 = vmatpush1.msra.mxu0 0.0
      %2086 = vmatprep.subr.mxu0 0.0
      %2087 = vmatpush1.msra.mxu0 0.0
      %2088 = vmatprep.subr.mxu0 0.0
      %2089 = vmatpush1.msra.mxu0 0.0
      %2090 = vmatprep.subr.mxu0 0.0
      %2091 = vmatpush1.msra.mxu0 0.0
      %2092 = vmatprep.subr.mxu0 0.0
      %2093 = vmatpush1.msra.mxu0 0.0
      %2094 = vmatprep.subr.mxu0 0.0
      %2095 = vmatpush1.msra.mxu0 0.0
      %2096 = vmatprep.subr.mxu0 0.0
      %2097 = vmatpush1.msra.mxu0 0.0
      %2098 = vmatprep.subr.mxu0 0.0
      %2099 = vmatpush1.msra.mxu0 %v2060
      %2100 = vmatprep.subr.mxu0 0.0
      %2101 = vmatpush1.msra.mxu0 %v2059
      %2102 = vmatprep.subr.mxu0 0.0
      %2103 = vmatpush1.msra.mxu0 %v2058
      %2104 = vmatprep.subr.mxu0 0.0
      %2105 = vmatpush1.msra.mxu0 %v2057
      %2106 = vmatprep.subr.mxu0 0.0
      %2107 = vmatpush2.msra.mxu0 0.0
      %2108 = vmatprep.subr.mxu0 0.0
      %2109 = vmatpush2.msra.mxu0 0.0
      %2110 = vmatprep.subr.mxu0 0.0
      %2111 = vmatpush2.msra.mxu0 0.0
      %2112 = vmatprep.subr.mxu0 0.0
      %2113 = vmatpush2.msra.mxu0 0.0
      %2114 = vmatprep.subr.mxu0 0.0
      %2115 = vmatpush2.msra.mxu0 0.0
      %2116 = vmatprep.subr.mxu0 0.0
      %2117 = vmatpush2.msra.mxu0 0.0
      %2118 = vmatprep.subr.mxu0 0.0
      %2119 = vmatpush2.msra.mxu0 0.0
      %2120 = vmatprep.subr.mxu0 0.0
      %2121 = vmatpush2.msra.mxu0 0.0
      %2122 = vmatprep.subr.mxu0 0.0
      %2123 = vmatpush2.msra.mxu0 0.0
      %2124 = vmatprep.subr.mxu0 0.0
      %2125 = vmatpush2.msra.mxu0 0.0
      %2126 = vmatprep.subr.mxu0 0.0
      %2127 = vmatpush2.msra.mxu0 0.0
      %2128 = vmatprep.subr.mxu0 0.0
      %2129 = vmatpush2.msra.mxu0 0.0
      %2130 = vmatprep.subr.mxu0 0.0
      %2131 = vmatpush2.msra.mxu0 0.0
      %2132 = vmatprep.subr.mxu0 0.0
      %2133 = vmatpush2.msra.mxu0 0.0
      %2134 = vmatprep.subr.mxu0 0.0
      %2135 = vmatpush2.msra.mxu0 0.0
      %2136 = vmatprep.subr.mxu0 0.0
      %2137 = vmatpush2.msra.mxu0 0.0
      %2138 = vmatprep.mubr.f32.mxu0 0.0
      %2139 = vmatmul.mubr.f32.gmra.mxu0 %v2069
      %v2140 = vpop.f32.mrf.mxu0
      %v2141 = vadd.f32 %v2066, %v2140
      %v2142 = vpop.f32.mrf.mxu0
      %2143 = vmatprep.mubr.f32.mxu0 0.0
      %2144 = vmatmul.mubr.f32.gmra.mxu0 %v2072
      %v2145 = vpop.f32.mrf.mxu0
      %v2146 = vadd.f32 %v2066, %v2145
      %v2147 = vpop.f32.mrf.mxu0
      %2148 = vdwg.mxu0
      %v2149 = vadd.f32 %v2141, %v1124
      %v2150 = vadd.f32 %v2146, %v1125
      %v2151 = vld [vmem:[%s18] sm:$0x1]
      %v2152 = vld [vmem:[%s19] sm:$0x1]
      %v2153 = vsel %vm1082, %v2149, 0.0
      %2154 = vadd.xlane.f32.xlu0 %v2153
      %v2155 = vpop.xlane.xlu0 %2154
      %v2156 = vsel %vm1082, %v2150, 0.0
      %2157 = vadd.xlane.f32.xlu0 %v2156
      %v2158 = vpop.xlane.xlu0 %2157
      %v2159 = vmul.f32 %v2155, %v1089
      %v2160 = vmul.f32 %v2158, %v1089
      %v2161 = vsub.f32 %v2149, %v2159
      %v2162 = vsub.f32 %v2150, %v2160
      %v2163 = vmul.f32 %v2161, %v2161
      %v2164 = vmul.f32 %v2162, %v2162
      %v2165 = vsel %vm1082, %v2163, 0.0
      %2166 = vadd.xlane.f32.xlu0 %v2165
      %v2167 = vpop.xlane.xlu0 %2166
      %v2168 = vsel %vm1082, %v2164, 0.0
      %2169 = vadd.xlane.f32.xlu0 %v2168
      %v2170 = vpop.xlane.xlu0 %2169
      %v2171 = vmul.f32 %v2167, %v1089
      %v2172 = vmul.f32 %v2170, %v1089
      %v2173 = vadd.f32 %v2171, 1e-12
      %v2174 = vadd.f32 %v2172, 1e-12
      %v2175 = vrsqrt.pop %v2173
      %v2176 = vrsqrt.pop %v2174
      %v2177 = vmul.f32 %v2161, %v2175
      %v2178 = vmul.f32 %v2162, %v2176
      %v2180 = vlaneseq
      %v2181 = vshrl.u32 %v2180, 7
      %v2182 = vsub.s32 0, %v2181
      %v2183 = vrot.slane %v2151, %v2182
      %v2185 = vmul.f32 %v2177, %v2183
      %v2186 = vmul.f32 %v2178, %v2183
      %v2188 = vlaneseq
      %v2189 = vshrl.u32 %v2188, 7
      %v2190 = vsub.s32 0, %v2189
      %v2191 = vrot.slane %v2152, %v2190
      %v2193 = vadd.f32 %v2185, %v2191
      %v2194 = vadd.f32 %v2186, %v2191
      %v2195 = vld [vmem:[%s20] sm:$0xff]
      %v2196 = vld [vmem:[%s20 + $0x8] sm:$0xff]
      %v2197 = vld [vmem:[%s20 + $0x10] sm:$0xff]
      %v2198 = vld [vmem:[%s20 + $0x18] sm:$0xff]
      %v2199 = vld [vmem:[%s21] sm:$0x1]
      %v2201 = vlaneseq
      %v2202 = vshrl.u32 %v2201, 7
      %v2203 = vsub.s32 0, %v2202
      %v2204 = vrot.slane %v2199, %v2203
      %v2207 = vsel %vm1082, %v2193, 0
      %v2210 = vsel %vm1082, %v2194, 0
      %2212 = vmatprep.subr.mxu0 0.0
      %2213 = vmatpush1.msra.mxu0 0.0
      %2214 = vmatprep.subr.mxu0 0.0
      %2215 = vmatpush1.msra.mxu0 0.0
      %2216 = vmatprep.subr.mxu0 0.0
      %2217 = vmatpush1.msra.mxu0 0.0
      %2218 = vmatprep.subr.mxu0 0.0
      %2219 = vmatpush1.msra.mxu0 0.0
      %2220 = vmatprep.subr.mxu0 0.0
      %2221 = vmatpush1.msra.mxu0 0.0
      %2222 = vmatprep.subr.mxu0 0.0
      %2223 = vmatpush1.msra.mxu0 0.0
      %2224 = vmatprep.subr.mxu0 0.0
      %2225 = vmatpush1.msra.mxu0 0.0
      %2226 = vmatprep.subr.mxu0 0.0
      %2227 = vmatpush1.msra.mxu0 0.0
      %2228 = vmatprep.subr.mxu0 0.0
      %2229 = vmatpush1.msra.mxu0 0.0
      %2230 = vmatprep.subr.mxu0 0.0
      %2231 = vmatpush1.msra.mxu0 0.0
      %2232 = vmatprep.subr.mxu0 0.0
      %2233 = vmatpush1.msra.mxu0 0.0
      %2234 = vmatprep.subr.mxu0 0.0
      %2235 = vmatpush1.msra.mxu0 0.0
      %2236 = vmatprep.subr.mxu0 0.0
      %2237 = vmatpush1.msra.mxu0 %v2198
      %2238 = vmatprep.subr.mxu0 0.0
      %2239 = vmatpush1.msra.mxu0 %v2197
      %2240 = vmatprep.subr.mxu0 0.0
      %2241 = vmatpush1.msra.mxu0 %v2196
      %2242 = vmatprep.subr.mxu0 0.0
      %2243 = vmatpush1.msra.mxu0 %v2195
      %2244 = vmatprep.subr.mxu0 0.0
      %2245 = vmatpush2.msra.mxu0 0.0
      %2246 = vmatprep.subr.mxu0 0.0
      %2247 = vmatpush2.msra.mxu0 0.0
      %2248 = vmatprep.subr.mxu0 0.0
      %2249 = vmatpush2.msra.mxu0 0.0
      %2250 = vmatprep.subr.mxu0 0.0
      %2251 = vmatpush2.msra.mxu0 0.0
      %2252 = vmatprep.subr.mxu0 0.0
      %2253 = vmatpush2.msra.mxu0 0.0
      %2254 = vmatprep.subr.mxu0 0.0
      %2255 = vmatpush2.msra.mxu0 0.0
      %2256 = vmatprep.subr.mxu0 0.0
      %2257 = vmatpush2.msra.mxu0 0.0
      %2258 = vmatprep.subr.mxu0 0.0
      %2259 = vmatpush2.msra.mxu0 0.0
      %2260 = vmatprep.subr.mxu0 0.0
      %2261 = vmatpush2.msra.mxu0 0.0
      %2262 = vmatprep.subr.mxu0 0.0
      %2263 = vmatpush2.msra.mxu0 0.0
      %2264 = vmatprep.subr.mxu0 0.0
      %2265 = vmatpush2.msra.mxu0 0.0
      %2266 = vmatprep.subr.mxu0 0.0
      %2267 = vmatpush2.msra.mxu0 0.0
      %2268 = vmatprep.subr.mxu0 0.0
      %2269 = vmatpush2.msra.mxu0 0.0
      %2270 = vmatprep.subr.mxu0 0.0
      %2271 = vmatpush2.msra.mxu0 0.0
      %2272 = vmatprep.subr.mxu0 0.0
      %2273 = vmatpush2.msra.mxu0 0.0
      %2274 = vmatprep.subr.mxu0 0.0
      %2275 = vmatpush2.msra.mxu0 0.0
      %2276 = vmatprep.mubr.f32.mxu0 0.0
      %2277 = vmatmul.mubr.f32.gmra.mxu0 %v2207
      %v2278 = vpop.f32.mrf.mxu0
      %v2279 = vadd.f32 %v2204, %v2278
      %v2280 = vpop.f32.mrf.mxu0
      %2281 = vmatprep.mubr.f32.mxu0 0.0
      %2282 = vmatmul.mubr.f32.gmra.mxu0 %v2210
      %v2283 = vpop.f32.mrf.mxu0
      %v2284 = vadd.f32 %v2204, %v2283
      %v2285 = vpop.f32.mrf.mxu0
      %2286 = vdwg.mxu0
      %v2287 = vmul.f32 %v2279, %v2279
      %v2288 = vmul.f32 %v2284, %v2284
      %v2289 = vmul.f32 %v2279, %v2287
      %v2290 = vmul.f32 %v2284, %v2288
      %v2291 = vmul.f32 %v2289, 0.044715
      %v2292 = vmul.f32 %v2290, 0.044715
      %v2293 = vadd.f32 %v2279, %v2291
      %v2294 = vadd.f32 %v2284, %v2292
      %v2295 = vmul.f32 %v2293, 0.7978846
      %v2296 = vmul.f32 %v2294, 0.7978846
      %v2297 = vtanh.pop %v2295
      %v2298 = vtanh.pop %v2296
      %v2299 = vadd.f32 %v2297, 1.0
      %v2300 = vadd.f32 %v2298, 1.0
      %v2301 = vmul.f32 %v2299, 0.5
      %v2302 = vmul.f32 %v2300, 0.5
      %v2303 = vmul.f32 %v2279, %v2301
      %v2304 = vmul.f32 %v2284, %v2302
      %v2305 = vld [vmem:[%s22] sm:$0xff]
      %v2306 = vld [vmem:[%s22 + $0x8] sm:$0xff]
      %v2307 = vld [vmem:[%s22 + $0x10] sm:$0xff]
      %v2308 = vld [vmem:[%s22 + $0x18] sm:$0xff]
      %v2309 = vld [vmem:[%s22 + $0x20] sm:$0xff]
      %v2310 = vld [vmem:[%s22 + $0x28] sm:$0xff]
      %v2311 = vld [vmem:[%s22 + $0x30] sm:$0xff]
      %v2312 = vld [vmem:[%s22 + $0x38] sm:$0xff]
      %v2313 = vld [vmem:[%s23] sm:$0x1]
      %v2315 = vlaneseq
      %v2316 = vshrl.u32 %v2315, 7
      %v2317 = vsub.s32 0, %v2316
      %v2318 = vrot.slane %v2313, %v2317
      %vm2320 = vcmask 523264
      %v2322 = vsel %vm2320, %v2303, 0
      %v2325 = vsel %vm2320, %v2304, 0
      %2327 = vmatprep.subr.mxu0 0.0
      %2328 = vmatpush1.msra.mxu0 0.0
      %2329 = vmatprep.subr.mxu0 0.0
      %2330 = vmatpush1.msra.mxu0 0.0
      %2331 = vmatprep.subr.mxu0 0.0
      %2332 = vmatpush1.msra.mxu0 0.0
      %2333 = vmatprep.subr.mxu0 0.0
      %2334 = vmatpush1.msra.mxu0 0.0
      %2335 = vmatprep.subr.mxu0 0.0
      %2336 = vmatpush1.msra.mxu0 0.0
      %2337 = vmatprep.subr.mxu0 0.0
      %2338 = vmatpush1.msra.mxu0 0.0
      %2339 = vmatprep.subr.mxu0 0.0
      %2340 = vmatpush1.msra.mxu0 0.0
      %2341 = vmatprep.subr.mxu0 0.0
      %2342 = vmatpush1.msra.mxu0 0.0
      %2343 = vmatprep.subr.mxu0 0.0
      %2344 = vmatpush1.msra.mxu0 %v2312
      %2345 = vmatprep.subr.mxu0 0.0
      %2346 = vmatpush1.msra.mxu0 %v2311
      %2347 = vmatprep.subr.mxu0 0.0
      %2348 = vmatpush1.msra.mxu0 %v2310
      %2349 = vmatprep.subr.mxu0 0.0
      %2350 = vmatpush1.msra.mxu0 %v2309
      %2351 = vmatprep.subr.mxu0 0.0
      %2352 = vmatpush1.msra.mxu0 %v2308
      %2353 = vmatprep.subr.mxu0 0.0
      %2354 = vmatpush1.msra.mxu0 %v2307
      %2355 = vmatprep.subr.mxu0 0.0
      %2356 = vmatpush1.msra.mxu0 %v2306
      %2357 = vmatprep.subr.mxu0 0.0
      %2358 = vmatpush1.msra.mxu0 %v2305
      %2359 = vmatprep.subr.mxu0 0.0
      %2360 = vmatpush2.msra.mxu0 0.0
      %2361 = vmatprep.subr.mxu0 0.0
      %2362 = vmatpush2.msra.mxu0 0.0
      %2363 = vmatprep.subr.mxu0 0.0
      %2364 = vmatpush2.msra.mxu0 0.0
      %2365 = vmatprep.subr.mxu0 0.0
      %2366 = vmatpush2.msra.mxu0 0.0
      %2367 = vmatprep.subr.mxu0 0.0
      %2368 = vmatpush2.msra.mxu0 0.0
      %2369 = vmatprep.subr.mxu0 0.0
      %2370 = vmatpush2.msra.mxu0 0.0
      %2371 = vmatprep.subr.mxu0 0.0
      %2372 = vmatpush2.msra.mxu0 0.0
      %2373 = vmatprep.subr.mxu0 0.0
      %2374 = vmatpush2.msra.mxu0 0.0
      %2375 = vmatprep.subr.mxu0 0.0
      %2376 = vmatpush2.msra.mxu0 0.0
      %2377 = vmatprep.subr.mxu0 0.0
      %2378 = vmatpush2.msra.mxu0 0.0
      %2379 = vmatprep.subr.mxu0 0.0
      %2380 = vmatpush2.msra.mxu0 0.0
      %2381 = vmatprep.subr.mxu0 0.0
      %2382 = vmatpush2.msra.mxu0 0.0
      %2383 = vmatprep.subr.mxu0 0.0
      %2384 = vmatpush2.msra.mxu0 0.0
      %2385 = vmatprep.subr.mxu0 0.0
      %2386 = vmatpush2.msra.mxu0 0.0
      %2387 = vmatprep.subr.mxu0 0.0
      %2388 = vmatpush2.msra.mxu0 0.0
      %2389 = vmatprep.subr.mxu0 0.0
      %2390 = vmatpush2.msra.mxu0 0.0
      %2391 = vmatprep.mubr.f32.mxu0 0.0
      %2392 = vmatmul.mubr.f32.gmra.mxu0 %v2322
      %v2393 = vpop.f32.mrf.mxu0
      %v2394 = vadd.f32 %v2318, %v2393
      %v2395 = vpop.f32.mrf.mxu0
      %2396 = vmatprep.mubr.f32.mxu0 0.0
      %2397 = vmatmul.mubr.f32.gmra.mxu0 %v2325
      %v2398 = vpop.f32.mrf.mxu0
      %v2399 = vadd.f32 %v2318, %v2398
      %v2400 = vpop.f32.mrf.mxu0
      %2401 = vdwg.mxu0
      %v2402 = vadd.f32 %v2394, %v2193
      %v2403 = vadd.f32 %v2399, %v2194
      %v2404 = vld [vmem:[%s24] sm:$0x1]
      %v2405 = vld [vmem:[%s25] sm:$0x1]
      %v2406 = vsel %vm1082, %v2402, 0.0
      %2407 = vadd.xlane.f32.xlu0 %v2406
      %v2408 = vpop.xlane.xlu0 %2407
      %v2409 = vsel %vm1082, %v2403, 0.0
      %2410 = vadd.xlane.f32.xlu0 %v2409
      %v2411 = vpop.xlane.xlu0 %2410
      %v2412 = vmul.f32 %v2408, %v1089
      %v2413 = vmul.f32 %v2411, %v1089
      %v2414 = vsub.f32 %v2402, %v2412
      %v2415 = vsub.f32 %v2403, %v2413
      %v2416 = vmul.f32 %v2414, %v2414
      %v2417 = vmul.f32 %v2415, %v2415
      %v2418 = vsel %vm1082, %v2416, 0.0
      %2419 = vadd.xlane.f32.xlu0 %v2418
      %v2420 = vpop.xlane.xlu0 %2419
      %v2421 = vsel %vm1082, %v2417, 0.0
      %2422 = vadd.xlane.f32.xlu0 %v2421
      %v2423 = vpop.xlane.xlu0 %2422
      %v2424 = vmul.f32 %v2420, %v1089
      %v2425 = vmul.f32 %v2423, %v1089
      %v2426 = vadd.f32 %v2424, 1e-12
      %v2427 = vadd.f32 %v2425, 1e-12
      %v2428 = vrsqrt.pop %v2426
      %v2429 = vrsqrt.pop %v2427
      %v2430 = vmul.f32 %v2414, %v2428
      %v2431 = vmul.f32 %v2415, %v2429
      %v2433 = vlaneseq
      %v2434 = vshrl.u32 %v2433, 7
      %v2435 = vsub.s32 0, %v2434
      %v2436 = vrot.slane %v2404, %v2435
      %v2438 = vmul.f32 %v2430, %v2436
      %v2439 = vmul.f32 %v2431, %v2436
      %v2441 = vlaneseq
      %v2442 = vshrl.u32 %v2441, 7
      %v2443 = vsub.s32 0, %v2442
      %v2444 = vrot.slane %v2405, %v2443
      %v2446 = vadd.f32 %v2438, %v2444
      %v2447 = vadd.f32 %v2439, %v2444
      %s2448 = scalar_lea.vmem %s14, 32
      %v2449 = vld [vmem:[%s2448] sm:$0xff]
      %v2450 = vld [vmem:[%s2448 + $0x8] sm:$0xff]
      %v2451 = vld [vmem:[%s2448 + $0x10] sm:$0xff]
      %v2452 = vld [vmem:[%s2448 + $0x18] sm:$0xff]
      %s2453 = scalar_lea.vmem %s15, 1
      %v2454 = vld [vmem:[%s2453] sm:$0x1]
      %v2456 = vlaneseq
      %v2457 = vshrl.u32 %v2456, 7
      %v2458 = vsub.s32 0, %v2457
      %v2459 = vrot.slane %v2454, %v2458
      %v2462 = vsel %vm1082, %v2446, 0
      %v2465 = vsel %vm1082, %v2447, 0
      %2467 = vmatprep.subr.mxu0 0.0
      %2468 = vmatpush1.msra.mxu0 0.0
      %2469 = vmatprep.subr.mxu0 0.0
      %2470 = vmatpush1.msra.mxu0 0.0
      %2471 = vmatprep.subr.mxu0 0.0
      %2472 = vmatpush1.msra.mxu0 0.0
      %2473 = vmatprep.subr.mxu0 0.0
      %2474 = vmatpush1.msra.mxu0 0.0
      %2475 = vmatprep.subr.mxu0 0.0
      %2476 = vmatpush1.msra.mxu0 0.0
      %2477 = vmatprep.subr.mxu0 0.0
      %2478 = vmatpush1.msra.mxu0 0.0
      %2479 = vmatprep.subr.mxu0 0.0
      %2480 = vmatpush1.msra.mxu0 0.0
      %2481 = vmatprep.subr.mxu0 0.0
      %2482 = vmatpush1.msra.mxu0 0.0
      %2483 = vmatprep.subr.mxu0 0.0
      %2484 = vmatpush1.msra.mxu0 0.0
      %2485 = vmatprep.subr.mxu0 0.0
      %2486 = vmatpush1.msra.mxu0 0.0
      %2487 = vmatprep.subr.mxu0 0.0
      %2488 = vmatpush1.msra.mxu0 0.0
      %2489 = vmatprep.subr.mxu0 0.0
      %2490 = vmatpush1.msra.mxu0 0.0
      %2491 = vmatprep.subr.mxu0 0.0
      %2492 = vmatpush1.msra.mxu0 %v2452
      %2493 = vmatprep.subr.mxu0 0.0
      %2494 = vmatpush1.msra.mxu0 %v2451
      %2495 = vmatprep.subr.mxu0 0.0
      %2496 = vmatpush1.msra.mxu0 %v2450
      %2497 = vmatprep.subr.mxu0 0.0
      %2498 = vmatpush1.msra.mxu0 %v2449
      %2499 = vmatprep.subr.mxu0 0.0
      %2500 = vmatpush2.msra.mxu0 0.0
      %2501 = vmatprep.subr.mxu0 0.0
      %2502 = vmatpush2.msra.mxu0 0.0
      %2503 = vmatprep.subr.mxu0 0.0
      %2504 = vmatpush2.msra.mxu0 0.0
      %2505 = vmatprep.subr.mxu0 0.0
      %2506 = vmatpush2.msra.mxu0 0.0
      %2507 = vmatprep.subr.mxu0 0.0
      %2508 = vmatpush2.msra.mxu0 0.0
      %2509 = vmatprep.subr.mxu0 0.0
      %2510 = vmatpush2.msra.mxu0 0.0
      %2511 = vmatprep.subr.mxu0 0.0
      %2512 = vmatpush2.msra.mxu0 0.0
      %2513 = vmatprep.subr.mxu0 0.0
      %2514 = vmatpush2.msra.mxu0 0.0
      %2515 = vmatprep.subr.mxu0 0.0
      %2516 = vmatpush2.msra.mxu0 0.0
      %2517 = vmatprep.subr.mxu0 0.0
      %2518 = vmatpush2.msra.mxu0 0.0
      %2519 = vmatprep.subr.mxu0 0.0
      %2520 = vmatpush2.msra.mxu0 0.0
      %2521 = vmatprep.subr.mxu0 0.0
      %2522 = vmatpush2.msra.mxu0 0.0
      %2523 = vmatprep.subr.mxu0 0.0
      %2524 = vmatpush2.msra.mxu0 0.0
      %2525 = vmatprep.subr.mxu0 0.0
      %2526 = vmatpush2.msra.mxu0 0.0
      %2527 = vmatprep.subr.mxu0 0.0
      %2528 = vmatpush2.msra.mxu0 0.0
      %2529 = vmatprep.subr.mxu0 0.0
      %2530 = vmatpush2.msra.mxu0 0.0
      %2531 = vmatprep.mubr.f32.mxu0 0.0
      %2532 = vmatmul.mubr.f32.gmra.mxu0 %v2462
      %v2533 = vpop.f32.mrf.mxu0
      %v2534 = vadd.f32 %v2459, %v2533
      %v2535 = vpop.f32.mrf.mxu0
      %2536 = vmatprep.mubr.f32.mxu0 0.0
      %2537 = vmatmul.mubr.f32.gmra.mxu0 %v2465
      %v2538 = vpop.f32.mrf.mxu0
      %v2539 = vadd.f32 %v2459, %v2538
      %v2540 = vpop.f32.mrf.mxu0
      %2541 = vdwg.mxu0
      %2544 = vrot.lane.b32.xlu0 %v2534, 96
      %v2545 = vpop.permute.xlu0 %2544
      %2546 = vrot.lane.b32.xlu0 %v2539, 96
      %v2547 = vpop.permute.xlu0 %2546
      %v2548 = vsel %vm1233, %v2534, 0
      %v2550 = vsel %vm1233, %v2539, 0
      %v2552 = vsel %vm1233, %v2545, 0
      %v2554 = vsel %vm1233, %v2547, 0
      %2556 = vmatprep.subr.mxu0 0.0
      %2557 = vmatpush1.xpose.msra.mxu0 0.0
      %2558 = vmatprep.subr.mxu0 0.0
      %2559 = vmatpush1.xpose.msra.mxu0 0.0
      %2560 = vmatprep.subr.mxu0 0.0
      %2561 = vmatpush1.xpose.msra.mxu0 0.0
      %2562 = vmatprep.subr.mxu0 0.0
      %2563 = vmatpush1.xpose.msra.mxu0 0.0
      %2564 = vmatprep.subr.mxu0 0.0
      %2565 = vmatpush1.xpose.msra.mxu0 0.0
      %2566 = vmatprep.subr.mxu0 0.0
      %2567 = vmatpush1.xpose.msra.mxu0 0.0
      %2568 = vmatprep.subr.mxu0 0.0
      %2569 = vmatpush1.xpose.msra.mxu0 0.0
      %2570 = vmatprep.subr.mxu0 0.0
      %2571 = vmatpush1.xpose.msra.mxu0 0.0
      %2572 = vmatprep.subr.mxu0 0.0
      %2573 = vmatpush1.xpose.msra.mxu0 0.0
      %2574 = vmatprep.subr.mxu0 0.0
      %2575 = vmatpush1.xpose.msra.mxu0 0.0
      %2576 = vmatprep.subr.mxu0 0.0
      %2577 = vmatpush1.xpose.msra.mxu0 0.0
      %2578 = vmatprep.subr.mxu0 0.0
      %2579 = vmatpush1.xpose.msra.mxu0 0.0
      %2580 = vmatprep.subr.mxu0 0.0
      %2581 = vmatpush1.xpose.msra.mxu0 0.0
      %2582 = vmatprep.subr.mxu0 0.0
      %2583 = vmatpush1.xpose.msra.mxu0 0.0
      %2584 = vmatprep.subr.mxu0 0.0
      %2585 = vmatpush1.xpose.msra.mxu0 %v2554
      %2586 = vmatprep.subr.mxu0 0.0
      %2587 = vmatpush1.xpose.msra.mxu0 %v2552
      %2588 = vmatprep.subr.mxu0 0.0
      %2589 = vmatpush2.xpose.msra.mxu0 0.0
      %2590 = vmatprep.subr.mxu0 0.0
      %2591 = vmatpush2.xpose.msra.mxu0 0.0
      %2592 = vmatprep.subr.mxu0 0.0
      %2593 = vmatpush2.xpose.msra.mxu0 0.0
      %2594 = vmatprep.subr.mxu0 0.0
      %2595 = vmatpush2.xpose.msra.mxu0 0.0
      %2596 = vmatprep.subr.mxu0 0.0
      %2597 = vmatpush2.xpose.msra.mxu0 0.0
      %2598 = vmatprep.subr.mxu0 0.0
      %2599 = vmatpush2.xpose.msra.mxu0 0.0
      %2600 = vmatprep.subr.mxu0 0.0
      %2601 = vmatpush2.xpose.msra.mxu0 0.0
      %2602 = vmatprep.subr.mxu0 0.0
      %2603 = vmatpush2.xpose.msra.mxu0 0.0
      %2604 = vmatprep.subr.mxu0 0.0
      %2605 = vmatpush2.xpose.msra.mxu0 0.0
      %2606 = vmatprep.subr.mxu0 0.0
      %2607 = vmatpush2.xpose.msra.mxu0 0.0
      %2608 = vmatprep.subr.mxu0 0.0
      %2609 = vmatpush2.xpose.msra.mxu0 0.0
      %2610 = vmatprep.subr.mxu0 0.0
      %2611 = vmatpush2.xpose.msra.mxu0 0.0
      %2612 = vmatprep.subr.mxu0 0.0
      %2613 = vmatpush2.xpose.msra.mxu0 0.0
      %2614 = vmatprep.subr.mxu0 0.0
      %2615 = vmatpush2.xpose.msra.mxu0 0.0
      %2616 = vmatprep.subr.mxu0 0.0
      %2617 = vmatpush2.xpose.msra.mxu0 0.0
      %2618 = vmatprep.subr.mxu0 0.0
      %2619 = vmatpush2.xpose.msra.mxu0 0.0
      %2620 = vmatprep.mubr.f32.mxu0 0.0
      %2621 = vmatmul.mubr.f32.gmra.mxu0 %v2548
      %v2622 = vpop.f32.mrf.mxu0
      %v2623 = vadd.f32 %v1133, %v2622
      %v2624 = vpop.f32.mrf.mxu0
      %2625 = vmatprep.mubr.f32.mxu0 0.0
      %2626 = vmatmul.mubr.f32.gmra.mxu0 %v2550
      %v2627 = vpop.f32.mrf.mxu0
      %v2628 = vadd.f32 %v1133, %v2627
      %v2629 = vpop.f32.mrf.mxu0
      %2630 = vdwg.mxu0
      %v2631 = vsel %vm1317, %v2623, -inf
      %2632 = vmax.xlane.f32.xlu0 %v2631
      %v2633 = vpop.xlane.xlu0 %2632
      %v2634 = vsel %vm1317, %v2628, -inf
      %2635 = vmax.xlane.f32.xlu0 %v2634
      %v2636 = vpop.xlane.xlu0 %2635
      %v2637 = vsub.f32 %v2623, %v2633
      %v2638 = vsub.f32 %v2628, %v2636
      %v2639 = vmul.f32 %v2637, 1.442695
      %v2640 = vpow.pop %v2639
      %v2641 = vmul.f32 %v2638, 1.442695
      %v2642 = vpow.pop %v2641
      %v2643 = vsel %vm1317, %v2640, 0.0
      %2644 = vadd.xlane.f32.xlu0 %v2643
      %v2645 = vpop.xlane.xlu0 %2644
      %v2646 = vsel %vm1317, %v2642, 0.0
      %2647 = vadd.xlane.f32.xlu0 %v2646
      %v2648 = vpop.xlane.xlu0 %2647
      %v2649 = vrcp.pop %v2645
      %v2650 = vrcp.pop %v2648
      %v2651 = vmul.f32 %v2640, %v2649
      %v2652 = vmul.f32 %v2642, %v2650
      %2653 = vrot.lane.b32.xlu0 %v2534, 64
      %v2654 = vpop.permute.xlu0 %2653
      %2655 = vrot.lane.b32.xlu0 %v2539, 64
      %v2656 = vpop.permute.xlu0 %2655
      %v2660 = vsel %vm1317, %v2651, 0
      %v2663 = vsel %vm1317, %v2652, 0
      %2665 = vmatprep.subr.mxu0 0.0
      %2666 = vmatpush1.msra.mxu0 0.0
      %2667 = vmatprep.subr.mxu0 0.0
      %2668 = vmatpush1.msra.mxu0 0.0
      %2669 = vmatprep.subr.mxu0 0.0
      %2670 = vmatpush1.msra.mxu0 0.0
      %2671 = vmatprep.subr.mxu0 0.0
      %2672 = vmatpush1.msra.mxu0 0.0
      %2673 = vmatprep.subr.mxu0 0.0
      %2674 = vmatpush1.msra.mxu0 0.0
      %2675 = vmatprep.subr.mxu0 0.0
      %2676 = vmatpush1.msra.mxu0 0.0
      %2677 = vmatprep.subr.mxu0 0.0
      %2678 = vmatpush1.msra.mxu0 0.0
      %2679 = vmatprep.subr.mxu0 0.0
      %2680 = vmatpush1.msra.mxu0 0.0
      %2681 = vmatprep.subr.mxu0 0.0
      %2682 = vmatpush1.msra.mxu0 0.0
      %2683 = vmatprep.subr.mxu0 0.0
      %2684 = vmatpush1.msra.mxu0 0.0
      %2685 = vmatprep.subr.mxu0 0.0
      %2686 = vmatpush1.msra.mxu0 0.0
      %2687 = vmatprep.subr.mxu0 0.0
      %2688 = vmatpush1.msra.mxu0 0.0
      %2689 = vmatprep.subr.mxu0 0.0
      %2690 = vmatpush1.msra.mxu0 0.0
      %2691 = vmatprep.subr.mxu0 0.0
      %2692 = vmatpush1.msra.mxu0 0.0
      %2693 = vmatprep.subr.mxu0 0.0
      %2694 = vmatpush1.msra.mxu0 %v2656
      %2695 = vmatprep.subr.mxu0 0.0
      %2696 = vmatpush1.msra.mxu0 %v2654
      %2697 = vmatprep.subr.mxu0 0.0
      %2698 = vmatpush2.msra.mxu0 0.0
      %2699 = vmatprep.subr.mxu0 0.0
      %2700 = vmatpush2.msra.mxu0 0.0
      %2701 = vmatprep.subr.mxu0 0.0
      %2702 = vmatpush2.msra.mxu0 0.0
      %2703 = vmatprep.subr.mxu0 0.0
      %2704 = vmatpush2.msra.mxu0 0.0
      %2705 = vmatprep.subr.mxu0 0.0
      %2706 = vmatpush2.msra.mxu0 0.0
      %2707 = vmatprep.subr.mxu0 0.0
      %2708 = vmatpush2.msra.mxu0 0.0
      %2709 = vmatprep.subr.mxu0 0.0
      %2710 = vmatpush2.msra.mxu0 0.0
      %2711 = vmatprep.subr.mxu0 0.0
      %2712 = vmatpush2.msra.mxu0 0.0
      %2713 = vmatprep.subr.mxu0 0.0
      %2714 = vmatpush2.msra.mxu0 0.0
      %2715 = vmatprep.subr.mxu0 0.0
      %2716 = vmatpush2.msra.mxu0 0.0
      %2717 = vmatprep.subr.mxu0 0.0
      %2718 = vmatpush2.msra.mxu0 0.0
      %2719 = vmatprep.subr.mxu0 0.0
      %2720 = vmatpush2.msra.mxu0 0.0
      %2721 = vmatprep.subr.mxu0 0.0
      %2722 = vmatpush2.msra.mxu0 0.0
      %2723 = vmatprep.subr.mxu0 0.0
      %2724 = vmatpush2.msra.mxu0 0.0
      %2725 = vmatprep.subr.mxu0 0.0
      %2726 = vmatpush2.msra.mxu0 0.0
      %2727 = vmatprep.subr.mxu0 0.0
      %2728 = vmatpush2.msra.mxu0 0.0
      %2729 = vmatprep.mubr.f32.mxu0 0.0
      %2730 = vmatmul.mubr.f32.gmra.mxu0 %v2660
      %v2731 = vpop.f32.mrf.mxu0
      %v2732 = vadd.f32 0.0, %v2731
      %v2733 = vpop.f32.mrf.mxu0
      %2734 = vmatprep.mubr.f32.mxu0 0.0
      %2735 = vmatmul.mubr.f32.gmra.mxu0 %v2663
      %v2736 = vpop.f32.mrf.mxu0
      %v2737 = vadd.f32 0.0, %v2736
      %v2738 = vpop.f32.mrf.mxu0
      %2739 = vdwg.mxu0
      %2740 = vrot.lane.b32.xlu0 %v2534, 120
      %v2741 = vpop.permute.xlu0 %2740
      %2742 = vrot.lane.b32.xlu0 %v2539, 120
      %v2743 = vpop.permute.xlu0 %2742
      %2744 = vrot.lane.b32.xlu0 %v2534, 88
      %v2745 = vpop.permute.xlu0 %2744
      %2746 = vrot.lane.b32.xlu0 %v2539, 88
      %v2747 = vpop.permute.xlu0 %2746
      %v2748 = vsel %vm1233, %v2741, 0
      %v2750 = vsel %vm1233, %v2743, 0
      %v2752 = vsel %vm1233, %v2745, 0
      %v2754 = vsel %vm1233, %v2747, 0
      %2756 = vmatprep.subr.mxu0 0.0
      %2757 = vmatpush1.xpose.msra.mxu0 0.0
      %2758 = vmatprep.subr.mxu0 0.0
      %2759 = vmatpush1.xpose.msra.mxu0 0.0
      %2760 = vmatprep.subr.mxu0 0.0
      %2761 = vmatpush1.xpose.msra.mxu0 0.0
      %2762 = vmatprep.subr.mxu0 0.0
      %2763 = vmatpush1.xpose.msra.mxu0 0.0
      %2764 = vmatprep.subr.mxu0 0.0
      %2765 = vmatpush1.xpose.msra.mxu0 0.0
      %2766 = vmatprep.subr.mxu0 0.0
      %2767 = vmatpush1.xpose.msra.mxu0 0.0
      %2768 = vmatprep.subr.mxu0 0.0
      %2769 = vmatpush1.xpose.msra.mxu0 0.0
      %2770 = vmatprep.subr.mxu0 0.0
      %2771 = vmatpush1.xpose.msra.mxu0 0.0
      %2772 = vmatprep.subr.mxu0 0.0
      %2773 = vmatpush1.xpose.msra.mxu0 0.0
      %2774 = vmatprep.subr.mxu0 0.0
      %2775 = vmatpush1.xpose.msra.mxu0 0.0
      %2776 = vmatprep.subr.mxu0 0.0
      %2777 = vmatpush1.xpose.msra.mxu0 0.0
      %2778 = vmatprep.subr.mxu0 0.0
      %2779 = vmatpush1.xpose.msra.mxu0 0.0
      %2780 = vmatprep.subr.mxu0 0.0
      %2781 = vmatpush1.xpose.msra.mxu0 0.0
      %2782 = vmatprep.subr.mxu0 0.0
      %2783 = vmatpush1.xpose.msra.mxu0 0.0
      %2784 = vmatprep.subr.mxu0 0.0
      %2785 = vmatpush1.xpose.msra.mxu0 %v2754
      %2786 = vmatprep.subr.mxu0 0.0
      %2787 = vmatpush1.xpose.msra.mxu0 %v2752
      %2788 = vmatprep.subr.mxu0 0.0
      %2789 = vmatpush2.xpose.msra.mxu0 0.0
      %2790 = vmatprep.subr.mxu0 0.0
      %2791 = vmatpush2.xpose.msra.mxu0 0.0
      %2792 = vmatprep.subr.mxu0 0.0
      %2793 = vmatpush2.xpose.msra.mxu0 0.0
      %2794 = vmatprep.subr.mxu0 0.0
      %2795 = vmatpush2.xpose.msra.mxu0 0.0
      %2796 = vmatprep.subr.mxu0 0.0
      %2797 = vmatpush2.xpose.msra.mxu0 0.0
      %2798 = vmatprep.subr.mxu0 0.0
      %2799 = vmatpush2.xpose.msra.mxu0 0.0
      %2800 = vmatprep.subr.mxu0 0.0
      %2801 = vmatpush2.xpose.msra.mxu0 0.0
      %2802 = vmatprep.subr.mxu0 0.0
      %2803 = vmatpush2.xpose.msra.mxu0 0.0
      %2804 = vmatprep.subr.mxu0 0.0
      %2805 = vmatpush2.xpose.msra.mxu0 0.0
      %2806 = vmatprep.subr.mxu0 0.0
      %2807 = vmatpush2.xpose.msra.mxu0 0.0
      %2808 = vmatprep.subr.mxu0 0.0
      %2809 = vmatpush2.xpose.msra.mxu0 0.0
      %2810 = vmatprep.subr.mxu0 0.0
      %2811 = vmatpush2.xpose.msra.mxu0 0.0
      %2812 = vmatprep.subr.mxu0 0.0
      %2813 = vmatpush2.xpose.msra.mxu0 0.0
      %2814 = vmatprep.subr.mxu0 0.0
      %2815 = vmatpush2.xpose.msra.mxu0 0.0
      %2816 = vmatprep.subr.mxu0 0.0
      %2817 = vmatpush2.xpose.msra.mxu0 0.0
      %2818 = vmatprep.subr.mxu0 0.0
      %2819 = vmatpush2.xpose.msra.mxu0 0.0
      %2820 = vmatprep.mubr.f32.mxu0 0.0
      %2821 = vmatmul.mubr.f32.gmra.mxu0 %v2748
      %v2822 = vpop.f32.mrf.mxu0
      %v2823 = vadd.f32 %v1133, %v2822
      %v2824 = vpop.f32.mrf.mxu0
      %2825 = vmatprep.mubr.f32.mxu0 0.0
      %2826 = vmatmul.mubr.f32.gmra.mxu0 %v2750
      %v2827 = vpop.f32.mrf.mxu0
      %v2828 = vadd.f32 %v1133, %v2827
      %v2829 = vpop.f32.mrf.mxu0
      %2830 = vdwg.mxu0
      %v2831 = vsel %vm1317, %v2823, -inf
      %2832 = vmax.xlane.f32.xlu0 %v2831
      %v2833 = vpop.xlane.xlu0 %2832
      %v2834 = vsel %vm1317, %v2828, -inf
      %2835 = vmax.xlane.f32.xlu0 %v2834
      %v2836 = vpop.xlane.xlu0 %2835
      %v2837 = vsub.f32 %v2823, %v2833
      %v2838 = vsub.f32 %v2828, %v2836
      %v2839 = vmul.f32 %v2837, 1.442695
      %v2840 = vpow.pop %v2839
      %v2841 = vmul.f32 %v2838, 1.442695
      %v2842 = vpow.pop %v2841
      %v2843 = vsel %vm1317, %v2840, 0.0
      %2844 = vadd.xlane.f32.xlu0 %v2843
      %v2845 = vpop.xlane.xlu0 %2844
      %v2846 = vsel %vm1317, %v2842, 0.0
      %2847 = vadd.xlane.f32.xlu0 %v2846
      %v2848 = vpop.xlane.xlu0 %2847
      %v2849 = vrcp.pop %v2845
      %v2850 = vrcp.pop %v2848
      %v2851 = vmul.f32 %v2840, %v2849
      %v2852 = vmul.f32 %v2842, %v2850
      %2853 = vrot.lane.b32.xlu0 %v2534, 56
      %v2854 = vpop.permute.xlu0 %2853
      %2855 = vrot.lane.b32.xlu0 %v2539, 56
      %v2856 = vpop.permute.xlu0 %2855
      %v2860 = vsel %vm1317, %v2851, 0
      %v2863 = vsel %vm1317, %v2852, 0
      %2865 = vmatprep.subr.mxu0 0.0
      %2866 = vmatpush1.msra.mxu0 0.0
      %2867 = vmatprep.subr.mxu0 0.0
      %2868 = vmatpush1.msra.mxu0 0.0
      %2869 = vmatprep.subr.mxu0 0.0
      %2870 = vmatpush1.msra.mxu0 0.0
      %2871 = vmatprep.subr.mxu0 0.0
      %2872 = vmatpush1.msra.mxu0 0.0
      %2873 = vmatprep.subr.mxu0 0.0
      %2874 = vmatpush1.msra.mxu0 0.0
      %2875 = vmatprep.subr.mxu0 0.0
      %2876 = vmatpush1.msra.mxu0 0.0
      %2877 = vmatprep.subr.mxu0 0.0
      %2878 = vmatpush1.msra.mxu0 0.0
      %2879 = vmatprep.subr.mxu0 0.0
      %2880 = vmatpush1.msra.mxu0 0.0
      %2881 = vmatprep.subr.mxu0 0.0
      %2882 = vmatpush1.msra.mxu0 0.0
      %2883 = vmatprep.subr.mxu0 0.0
      %2884 = vmatpush1.msra.mxu0 0.0
      %2885 = vmatprep.subr.mxu0 0.0
      %2886 = vmatpush1.msra.mxu0 0.0
      %2887 = vmatprep.subr.mxu0 0.0
      %2888 = vmatpush1.msra.mxu0 0.0
      %2889 = vmatprep.subr.mxu0 0.0
      %2890 = vmatpush1.msra.mxu0 0.0
      %2891 = vmatprep.subr.mxu0 0.0
      %2892 = vmatpush1.msra.mxu0 0.0
      %2893 = vmatprep.subr.mxu0 0.0
      %2894 = vmatpush1.msra.mxu0 %v2856
      %2895 = vmatprep.subr.mxu0 0.0
      %2896 = vmatpush1.msra.mxu0 %v2854
      %2897 = vmatprep.subr.mxu0 0.0
      %2898 = vmatpush2.msra.mxu0 0.0
      %2899 = vmatprep.subr.mxu0 0.0
      %2900 = vmatpush2.msra.mxu0 0.0
      %2901 = vmatprep.subr.mxu0 0.0
      %2902 = vmatpush2.msra.mxu0 0.0
      %2903 = vmatprep.subr.mxu0 0.0
      %2904 = vmatpush2.msra.mxu0 0.0
      %2905 = vmatprep.subr.mxu0 0.0
      %2906 = vmatpush2.msra.mxu0 0.0
      %2907 = vmatprep.subr.mxu0 0.0
      %2908 = vmatpush2.msra.mxu0 0.0
      %2909 = vmatprep.subr.mxu0 0.0
      %2910 = vmatpush2.msra.mxu0 0.0
      %2911 = vmatprep.subr.mxu0 0.0
      %2912 = vmatpush2.msra.mxu0 0.0
      %2913 = vmatprep.subr.mxu0 0.0
      %2914 = vmatpush2.msra.mxu0 0.0
      %2915 = vmatprep.subr.mxu0 0.0
      %2916 = vmatpush2.msra.mxu0 0.0
      %2917 = vmatprep.subr.mxu0 0.0
      %2918 = vmatpush2.msra.mxu0 0.0
      %2919 = vmatprep.subr.mxu0 0.0
      %2920 = vmatpush2.msra.mxu0 0.0
      %2921 = vmatprep.subr.mxu0 0.0
      %2922 = vmatpush2.msra.mxu0 0.0
      %2923 = vmatprep.subr.mxu0 0.0
      %2924 = vmatpush2.msra.mxu0 0.0
      %2925 = vmatprep.subr.mxu0 0.0
      %2926 = vmatpush2.msra.mxu0 0.0
      %2927 = vmatprep.subr.mxu0 0.0
      %2928 = vmatpush2.msra.mxu0 0.0
      %2929 = vmatprep.mubr.f32.mxu0 0.0
      %2930 = vmatmul.mubr.f32.gmra.mxu0 %v2860
      %v2931 = vpop.f32.mrf.mxu0
      %v2932 = vadd.f32 0.0, %v2931
      %v2933 = vpop.f32.mrf.mxu0
      %2934 = vmatprep.mubr.f32.mxu0 0.0
      %2935 = vmatmul.mubr.f32.gmra.mxu0 %v2863
      %v2936 = vpop.f32.mrf.mxu0
      %v2937 = vadd.f32 0.0, %v2936
      %v2938 = vpop.f32.mrf.mxu0
      %2939 = vdwg.mxu0
      %2940 = vrot.lane.b32.xlu0 %v2534, 112
      %v2941 = vpop.permute.xlu0 %2940
      %2942 = vrot.lane.b32.xlu0 %v2539, 112
      %v2943 = vpop.permute.xlu0 %2942
      %2944 = vrot.lane.b32.xlu0 %v2534, 80
      %v2945 = vpop.permute.xlu0 %2944
      %2946 = vrot.lane.b32.xlu0 %v2539, 80
      %v2947 = vpop.permute.xlu0 %2946
      %v2948 = vsel %vm1233, %v2941, 0
      %v2950 = vsel %vm1233, %v2943, 0
      %v2952 = vsel %vm1233, %v2945, 0
      %v2954 = vsel %vm1233, %v2947, 0
      %2956 = vmatprep.subr.mxu0 0.0
      %2957 = vmatpush1.xpose.msra.mxu0 0.0
      %2958 = vmatprep.subr.mxu0 0.0
      %2959 = vmatpush1.xpose.msra.mxu0 0.0
      %2960 = vmatprep.subr.mxu0 0.0
      %2961 = vmatpush1.xpose.msra.mxu0 0.0
      %2962 = vmatprep.subr.mxu0 0.0
      %2963 = vmatpush1.xpose.msra.mxu0 0.0
      %2964 = vmatprep.subr.mxu0 0.0
      %2965 = vmatpush1.xpose.msra.mxu0 0.0
      %2966 = vmatprep.subr.mxu0 0.0
      %2967 = vmatpush1.xpose.msra.mxu0 0.0
      %2968 = vmatprep.subr.mxu0 0.0
      %2969 = vmatpush1.xpose.msra.mxu0 0.0
      %2970 = vmatprep.subr.mxu0 0.0
      %2971 = vmatpush1.xpose.msra.mxu0 0.0
      %2972 = vmatprep.subr.mxu0 0.0
      %2973 = vmatpush1.xpose.msra.mxu0 0.0
      %2974 = vmatprep.subr.mxu0 0.0
      %2975 = vmatpush1.xpose.msra.mxu0 0.0
      %2976 = vmatprep.subr.mxu0 0.0
      %2977 = vmatpush1.xpose.msra.mxu0 0.0
      %2978 = vmatprep.subr.mxu0 0.0
      %2979 = vmatpush1.xpose.msra.mxu0 0.0
      %2980 = vmatprep.subr.mxu0 0.0
      %2981 = vmatpush1.xpose.msra.mxu0 0.0
      %2982 = vmatprep.subr.mxu0 0.0
      %2983 = vmatpush1.xpose.msra.mxu0 0.0
      %2984 = vmatprep.subr.mxu0 0.0
      %2985 = vmatpush1.xpose.msra.mxu0 %v2954
      %2986 = vmatprep.subr.mxu0 0.0
      %2987 = vmatpush1.xpose.msra.mxu0 %v2952
      %2988 = vmatprep.subr.mxu0 0.0
      %2989 = vmatpush2.xpose.msra.mxu0 0.0
      %2990 = vmatprep.subr.mxu0 0.0
      %2991 = vmatpush2.xpose.msra.mxu0 0.0
      %2992 = vmatprep.subr.mxu0 0.0
      %2993 = vmatpush2.xpose.msra.mxu0 0.0
      %2994 = vmatprep.subr.mxu0 0.0
      %2995 = vmatpush2.xpose.msra.mxu0 0.0
      %2996 = vmatprep.subr.mxu0 0.0
      %2997 = vmatpush2.xpose.msra.mxu0 0.0
      %2998 = vmatprep.subr.mxu0 0.0
      %2999 = vmatpush2.xpose.msra.mxu0 0.0
      %3000 = vmatprep.subr.mxu0 0.0
      %3001 = vmatpush2.xpose.msra.mxu0 0.0
      %3002 = vmatprep.subr.mxu0 0.0
      %3003 = vmatpush2.xpose.msra.mxu0 0.0
      %3004 = vmatprep.subr.mxu0 0.0
      %3005 = vmatpush2.xpose.msra.mxu0 0.0
      %3006 = vmatprep.subr.mxu0 0.0
      %3007 = vmatpush2.xpose.msra.mxu0 0.0
      %3008 = vmatprep.subr.mxu0 0.0
      %3009 = vmatpush2.xpose.msra.mxu0 0.0
      %3010 = vmatprep.subr.mxu0 0.0
      %3011 = vmatpush2.xpose.msra.mxu0 0.0
      %3012 = vmatprep.subr.mxu0 0.0
      %3013 = vmatpush2.xpose.msra.mxu0 0.0
      %3014 = vmatprep.subr.mxu0 0.0
      %3015 = vmatpush2.xpose.msra.mxu0 0.0
      %3016 = vmatprep.subr.mxu0 0.0
      %3017 = vmatpush2.xpose.msra.mxu0 0.0
      %3018 = vmatprep.subr.mxu0 0.0
      %3019 = vmatpush2.xpose.msra.mxu0 0.0
      %3020 = vmatprep.mubr.f32.mxu0 0.0
      %3021 = vmatmul.mubr.f32.gmra.mxu0 %v2948
      %v3022 = vpop.f32.mrf.mxu0
      %v3023 = vadd.f32 %v1133, %v3022
      %v3024 = vpop.f32.mrf.mxu0
      %3025 = vmatprep.mubr.f32.mxu0 0.0
      %3026 = vmatmul.mubr.f32.gmra.mxu0 %v2950
      %v3027 = vpop.f32.mrf.mxu0
      %v3028 = vadd.f32 %v1133, %v3027
      %v3029 = vpop.f32.mrf.mxu0
      %3030 = vdwg.mxu0
      %v3031 = vsel %vm1317, %v3023, -inf
      %3032 = vmax.xlane.f32.xlu0 %v3031
      %v3033 = vpop.xlane.xlu0 %3032
      %v3034 = vsel %vm1317, %v3028, -inf
      %3035 = vmax.xlane.f32.xlu0 %v3034
      %v3036 = vpop.xlane.xlu0 %3035
      %v3037 = vsub.f32 %v3023, %v3033
      %v3038 = vsub.f32 %v3028, %v3036
      %v3039 = vmul.f32 %v3037, 1.442695
      %v3040 = vpow.pop %v3039
      %v3041 = vmul.f32 %v3038, 1.442695
      %v3042 = vpow.pop %v3041
      %v3043 = vsel %vm1317, %v3040, 0.0
      %3044 = vadd.xlane.f32.xlu0 %v3043
      %v3045 = vpop.xlane.xlu0 %3044
      %v3046 = vsel %vm1317, %v3042, 0.0
      %3047 = vadd.xlane.f32.xlu0 %v3046
      %v3048 = vpop.xlane.xlu0 %3047
      %v3049 = vrcp.pop %v3045
      %v3050 = vrcp.pop %v3048
      %v3051 = vmul.f32 %v3040, %v3049
      %v3052 = vmul.f32 %v3042, %v3050
      %3053 = vrot.lane.b32.xlu0 %v2534, 48
      %v3054 = vpop.permute.xlu0 %3053
      %3055 = vrot.lane.b32.xlu0 %v2539, 48
      %v3056 = vpop.permute.xlu0 %3055
      %v3060 = vsel %vm1317, %v3051, 0
      %v3063 = vsel %vm1317, %v3052, 0
      %3065 = vmatprep.subr.mxu0 0.0
      %3066 = vmatpush1.msra.mxu0 0.0
      %3067 = vmatprep.subr.mxu0 0.0
      %3068 = vmatpush1.msra.mxu0 0.0
      %3069 = vmatprep.subr.mxu0 0.0
      %3070 = vmatpush1.msra.mxu0 0.0
      %3071 = vmatprep.subr.mxu0 0.0
      %3072 = vmatpush1.msra.mxu0 0.0
      %3073 = vmatprep.subr.mxu0 0.0
      %3074 = vmatpush1.msra.mxu0 0.0
      %3075 = vmatprep.subr.mxu0 0.0
      %3076 = vmatpush1.msra.mxu0 0.0
      %3077 = vmatprep.subr.mxu0 0.0
      %3078 = vmatpush1.msra.mxu0 0.0
      %3079 = vmatprep.subr.mxu0 0.0
      %3080 = vmatpush1.msra.mxu0 0.0
      %3081 = vmatprep.subr.mxu0 0.0
      %3082 = vmatpush1.msra.mxu0 0.0
      %3083 = vmatprep.subr.mxu0 0.0
      %3084 = vmatpush1.msra.mxu0 0.0
      %3085 = vmatprep.subr.mxu0 0.0
      %3086 = vmatpush1.msra.mxu0 0.0
      %3087 = vmatprep.subr.mxu0 0.0
      %3088 = vmatpush1.msra.mxu0 0.0
      %3089 = vmatprep.subr.mxu0 0.0
      %3090 = vmatpush1.msra.mxu0 0.0
      %3091 = vmatprep.subr.mxu0 0.0
      %3092 = vmatpush1.msra.mxu0 0.0
      %3093 = vmatprep.subr.mxu0 0.0
      %3094 = vmatpush1.msra.mxu0 %v3056
      %3095 = vmatprep.subr.mxu0 0.0
      %3096 = vmatpush1.msra.mxu0 %v3054
      %3097 = vmatprep.subr.mxu0 0.0
      %3098 = vmatpush2.msra.mxu0 0.0
      %3099 = vmatprep.subr.mxu0 0.0
      %3100 = vmatpush2.msra.mxu0 0.0
      %3101 = vmatprep.subr.mxu0 0.0
      %3102 = vmatpush2.msra.mxu0 0.0
      %3103 = vmatprep.subr.mxu0 0.0
      %3104 = vmatpush2.msra.mxu0 0.0
      %3105 = vmatprep.subr.mxu0 0.0
      %3106 = vmatpush2.msra.mxu0 0.0
      %3107 = vmatprep.subr.mxu0 0.0
      %3108 = vmatpush2.msra.mxu0 0.0
      %3109 = vmatprep.subr.mxu0 0.0
      %3110 = vmatpush2.msra.mxu0 0.0
      %3111 = vmatprep.subr.mxu0 0.0
      %3112 = vmatpush2.msra.mxu0 0.0
      %3113 = vmatprep.subr.mxu0 0.0
      %3114 = vmatpush2.msra.mxu0 0.0
      %3115 = vmatprep.subr.mxu0 0.0
      %3116 = vmatpush2.msra.mxu0 0.0
      %3117 = vmatprep.subr.mxu0 0.0
      %3118 = vmatpush2.msra.mxu0 0.0
      %3119 = vmatprep.subr.mxu0 0.0
      %3120 = vmatpush2.msra.mxu0 0.0
      %3121 = vmatprep.subr.mxu0 0.0
      %3122 = vmatpush2.msra.mxu0 0.0
      %3123 = vmatprep.subr.mxu0 0.0
      %3124 = vmatpush2.msra.mxu0 0.0
      %3125 = vmatprep.subr.mxu0 0.0
      %3126 = vmatpush2.msra.mxu0 0.0
      %3127 = vmatprep.subr.mxu0 0.0
      %3128 = vmatpush2.msra.mxu0 0.0
      %3129 = vmatprep.mubr.f32.mxu0 0.0
      %3130 = vmatmul.mubr.f32.gmra.mxu0 %v3060
      %v3131 = vpop.f32.mrf.mxu0
      %v3132 = vadd.f32 0.0, %v3131
      %v3133 = vpop.f32.mrf.mxu0
      %3134 = vmatprep.mubr.f32.mxu0 0.0
      %3135 = vmatmul.mubr.f32.gmra.mxu0 %v3063
      %v3136 = vpop.f32.mrf.mxu0
      %v3137 = vadd.f32 0.0, %v3136
      %v3138 = vpop.f32.mrf.mxu0
      %3139 = vdwg.mxu0
      %3140 = vrot.lane.b32.xlu0 %v2534, 104
      %v3141 = vpop.permute.xlu0 %3140
      %3142 = vrot.lane.b32.xlu0 %v2539, 104
      %v3143 = vpop.permute.xlu0 %3142
      %3144 = vrot.lane.b32.xlu0 %v2534, 72
      %v3145 = vpop.permute.xlu0 %3144
      %3146 = vrot.lane.b32.xlu0 %v2539, 72
      %v3147 = vpop.permute.xlu0 %3146
      %v3148 = vsel %vm1233, %v3141, 0
      %v3150 = vsel %vm1233, %v3143, 0
      %v3152 = vsel %vm1233, %v3145, 0
      %v3154 = vsel %vm1233, %v3147, 0
      %3156 = vmatprep.subr.mxu0 0.0
      %3157 = vmatpush1.xpose.msra.mxu0 0.0
      %3158 = vmatprep.subr.mxu0 0.0
      %3159 = vmatpush1.xpose.msra.mxu0 0.0
      %3160 = vmatprep.subr.mxu0 0.0
      %3161 = vmatpush1.xpose.msra.mxu0 0.0
      %3162 = vmatprep.subr.mxu0 0.0
      %3163 = vmatpush1.xpose.msra.mxu0 0.0
      %3164 = vmatprep.subr.mxu0 0.0
      %3165 = vmatpush1.xpose.msra.mxu0 0.0
      %3166 = vmatprep.subr.mxu0 0.0
      %3167 = vmatpush1.xpose.msra.mxu0 0.0
      %3168 = vmatprep.subr.mxu0 0.0
      %3169 = vmatpush1.xpose.msra.mxu0 0.0
      %3170 = vmatprep.subr.mxu0 0.0
      %3171 = vmatpush1.xpose.msra.mxu0 0.0
      %3172 = vmatprep.subr.mxu0 0.0
      %3173 = vmatpush1.xpose.msra.mxu0 0.0
      %3174 = vmatprep.subr.mxu0 0.0
      %3175 = vmatpush1.xpose.msra.mxu0 0.0
      %3176 = vmatprep.subr.mxu0 0.0
      %3177 = vmatpush1.xpose.msra.mxu0 0.0
      %3178 = vmatprep.subr.mxu0 0.0
      %3179 = vmatpush1.xpose.msra.mxu0 0.0
      %3180 = vmatprep.subr.mxu0 0.0
      %3181 = vmatpush1.xpose.msra.mxu0 0.0
      %3182 = vmatprep.subr.mxu0 0.0
      %3183 = vmatpush1.xpose.msra.mxu0 0.0
      %3184 = vmatprep.subr.mxu0 0.0
      %3185 = vmatpush1.xpose.msra.mxu0 %v3154
      %3186 = vmatprep.subr.mxu0 0.0
      %3187 = vmatpush1.xpose.msra.mxu0 %v3152
      %3188 = vmatprep.subr.mxu0 0.0
      %3189 = vmatpush2.xpose.msra.mxu0 0.0
      %3190 = vmatprep.subr.mxu0 0.0
      %3191 = vmatpush2.xpose.msra.mxu0 0.0
      %3192 = vmatprep.subr.mxu0 0.0
      %3193 = vmatpush2.xpose.msra.mxu0 0.0
      %3194 = vmatprep.subr.mxu0 0.0
      %3195 = vmatpush2.xpose.msra.mxu0 0.0
      %3196 = vmatprep.subr.mxu0 0.0
      %3197 = vmatpush2.xpose.msra.mxu0 0.0
      %3198 = vmatprep.subr.mxu0 0.0
      %3199 = vmatpush2.xpose.msra.mxu0 0.0
      %3200 = vmatprep.subr.mxu0 0.0
      %3201 = vmatpush2.xpose.msra.mxu0 0.0
      %3202 = vmatprep.subr.mxu0 0.0
      %3203 = vmatpush2.xpose.msra.mxu0 0.0
      %3204 = vmatprep.subr.mxu0 0.0
      %3205 = vmatpush2.xpose.msra.mxu0 0.0
      %3206 = vmatprep.subr.mxu0 0.0
      %3207 = vmatpush2.xpose.msra.mxu0 0.0
      %3208 = vmatprep.subr.mxu0 0.0
      %3209 = vmatpush2.xpose.msra.mxu0 0.0
      %3210 = vmatprep.subr.mxu0 0.0
      %3211 = vmatpush2.xpose.msra.mxu0 0.0
      %3212 = vmatprep.subr.mxu0 0.0
      %3213 = vmatpush2.xpose.msra.mxu0 0.0
      %3214 = vmatprep.subr.mxu0 0.0
      %3215 = vmatpush2.xpose.msra.mxu0 0.0
      %3216 = vmatprep.subr.mxu0 0.0
      %3217 = vmatpush2.xpose.msra.mxu0 0.0
      %3218 = vmatprep.subr.mxu0 0.0
      %3219 = vmatpush2.xpose.msra.mxu0 0.0
      %3220 = vmatprep.mubr.f32.mxu0 0.0
      %3221 = vmatmul.mubr.f32.gmra.mxu0 %v3148
      %v3222 = vpop.f32.mrf.mxu0
      %v3223 = vadd.f32 %v1133, %v3222
      %v3224 = vpop.f32.mrf.mxu0
      %3225 = vmatprep.mubr.f32.mxu0 0.0
      %3226 = vmatmul.mubr.f32.gmra.mxu0 %v3150
      %v3227 = vpop.f32.mrf.mxu0
      %v3228 = vadd.f32 %v1133, %v3227
      %v3229 = vpop.f32.mrf.mxu0
      %3230 = vdwg.mxu0
      %v3231 = vsel %vm1317, %v3223, -inf
      %3232 = vmax.xlane.f32.xlu0 %v3231
      %v3233 = vpop.xlane.xlu0 %3232
      %v3234 = vsel %vm1317, %v3228, -inf
      %3235 = vmax.xlane.f32.xlu0 %v3234
      %v3236 = vpop.xlane.xlu0 %3235
      %v3237 = vsub.f32 %v3223, %v3233
      %v3238 = vsub.f32 %v3228, %v3236
      %v3239 = vmul.f32 %v3237, 1.442695
      %v3240 = vpow.pop %v3239
      %v3241 = vmul.f32 %v3238, 1.442695
      %v3242 = vpow.pop %v3241
      %v3243 = vsel %vm1317, %v3240, 0.0
      %3244 = vadd.xlane.f32.xlu0 %v3243
      %v3245 = vpop.xlane.xlu0 %3244
      %v3246 = vsel %vm1317, %v3242, 0.0
      %3247 = vadd.xlane.f32.xlu0 %v3246
      %v3248 = vpop.xlane.xlu0 %3247
      %v3249 = vrcp.pop %v3245
      %v3250 = vrcp.pop %v3248
      %v3251 = vmul.f32 %v3240, %v3249
      %v3252 = vmul.f32 %v3242, %v3250
      %3253 = vrot.lane.b32.xlu0 %v2534, 40
      %v3254 = vpop.permute.xlu0 %3253
      %3255 = vrot.lane.b32.xlu0 %v2539, 40
      %v3256 = vpop.permute.xlu0 %3255
      %v3260 = vsel %vm1317, %v3251, 0
      %v3263 = vsel %vm1317, %v3252, 0
      %3265 = vmatprep.subr.mxu0 0.0
      %3266 = vmatpush1.msra.mxu0 0.0
      %3267 = vmatprep.subr.mxu0 0.0
      %3268 = vmatpush1.msra.mxu0 0.0
      %3269 = vmatprep.subr.mxu0 0.0
      %3270 = vmatpush1.msra.mxu0 0.0
      %3271 = vmatprep.subr.mxu0 0.0
      %3272 = vmatpush1.msra.mxu0 0.0
      %3273 = vmatprep.subr.mxu0 0.0
      %3274 = vmatpush1.msra.mxu0 0.0
      %3275 = vmatprep.subr.mxu0 0.0
      %3276 = vmatpush1.msra.mxu0 0.0
      %3277 = vmatprep.subr.mxu0 0.0
      %3278 = vmatpush1.msra.mxu0 0.0
      %3279 = vmatprep.subr.mxu0 0.0
      %3280 = vmatpush1.msra.mxu0 0.0
      %3281 = vmatprep.subr.mxu0 0.0
      %3282 = vmatpush1.msra.mxu0 0.0
      %3283 = vmatprep.subr.mxu0 0.0
      %3284 = vmatpush1.msra.mxu0 0.0
      %3285 = vmatprep.subr.mxu0 0.0
      %3286 = vmatpush1.msra.mxu0 0.0
      %3287 = vmatprep.subr.mxu0 0.0
      %3288 = vmatpush1.msra.mxu0 0.0
      %3289 = vmatprep.subr.mxu0 0.0
      %3290 = vmatpush1.msra.mxu0 0.0
      %3291 = vmatprep.subr.mxu0 0.0
      %3292 = vmatpush1.msra.mxu0 0.0
      %3293 = vmatprep.subr.mxu0 0.0
      %3294 = vmatpush1.msra.mxu0 %v3256
      %3295 = vmatprep.subr.mxu0 0.0
      %3296 = vmatpush1.msra.mxu0 %v3254
      %3297 = vmatprep.subr.mxu0 0.0
      %3298 = vmatpush2.msra.mxu0 0.0
      %3299 = vmatprep.subr.mxu0 0.0
      %3300 = vmatpush2.msra.mxu0 0.0
      %3301 = vmatprep.subr.mxu0 0.0
      %3302 = vmatpush2.msra.mxu0 0.0
      %3303 = vmatprep.subr.mxu0 0.0
      %3304 = vmatpush2.msra.mxu0 0.0
      %3305 = vmatprep.subr.mxu0 0.0
      %3306 = vmatpush2.msra.mxu0 0.0
      %3307 = vmatprep.subr.mxu0 0.0
      %3308 = vmatpush2.msra.mxu0 0.0
      %3309 = vmatprep.subr.mxu0 0.0
      %3310 = vmatpush2.msra.mxu0 0.0
      %3311 = vmatprep.subr.mxu0 0.0
      %3312 = vmatpush2.msra.mxu0 0.0
      %3313 = vmatprep.subr.mxu0 0.0
      %3314 = vmatpush2.msra.mxu0 0.0
      %3315 = vmatprep.subr.mxu0 0.0
      %3316 = vmatpush2.msra.mxu0 0.0
      %3317 = vmatprep.subr.mxu0 0.0
      %3318 = vmatpush2.msra.mxu0 0.0
      %3319 = vmatprep.subr.mxu0 0.0
      %3320 = vmatpush2.msra.mxu0 0.0
      %3321 = vmatprep.subr.mxu0 0.0
      %3322 = vmatpush2.msra.mxu0 0.0
      %3323 = vmatprep.subr.mxu0 0.0
      %3324 = vmatpush2.msra.mxu0 0.0
      %3325 = vmatprep.subr.mxu0 0.0
      %3326 = vmatpush2.msra.mxu0 0.0
      %3327 = vmatprep.subr.mxu0 0.0
      %3328 = vmatpush2.msra.mxu0 0.0
      %3329 = vmatprep.mubr.f32.mxu0 0.0
      %3330 = vmatmul.mubr.f32.gmra.mxu0 %v3260
      %v3331 = vpop.f32.mrf.mxu0
      %v3332 = vadd.f32 0.0, %v3331
      %v3333 = vpop.f32.mrf.mxu0
      %3334 = vmatprep.mubr.f32.mxu0 0.0
      %3335 = vmatmul.mubr.f32.gmra.mxu0 %v3263
      %v3336 = vpop.f32.mrf.mxu0
      %v3337 = vadd.f32 0.0, %v3336
      %v3338 = vpop.f32.mrf.mxu0
      %3339 = vdwg.mxu0
      %3342 = vrot.lane.b32.xlu0 %v2932, 8
      %v3343 = vpop.permute.xlu0 %3342
      %3344 = vrot.lane.b32.xlu0 %v2937, 8
      %v3345 = vpop.permute.xlu0 %3344
      %3350 = vrot.lane.b32.xlu0 %v3132, 16
      %v3351 = vpop.permute.xlu0 %3350
      %3352 = vrot.lane.b32.xlu0 %v3137, 16
      %v3353 = vpop.permute.xlu0 %3352
      %3358 = vrot.lane.b32.xlu0 %v3332, 24
      %v3359 = vpop.permute.xlu0 %3358
      %3360 = vrot.lane.b32.xlu0 %v3337, 24
      %v3361 = vpop.permute.xlu0 %3360
      %v3364 = vsel %vm1233, %v2732, %v3343
      %v3365 = vsel %vm1233, %v2737, %v3345
      %v3366 = vsel %vm1317, %v3364, %v3351
      %v3367 = vsel %vm1317, %v3365, %v3353
      %v3368 = vsel %vm963, %v3366, %v3359
      %v3369 = vsel %vm963, %v3367, %v3361
      %s3370 = scalar_lea.vmem %s16, 32
      %v3371 = vld [vmem:[%s3370] sm:$0xff]
      %v3372 = vld [vmem:[%s3370 + $0x8] sm:$0xff]
      %v3373 = vld [vmem:[%s3370 + $0x10] sm:$0xff]
      %v3374 = vld [vmem:[%s3370 + $0x18] sm:$0xff]
      %s3375 = scalar_lea.vmem %s17, 1
      %v3376 = vld [vmem:[%s3375] sm:$0x1]
      %v3378 = vlaneseq
      %v3379 = vshrl.u32 %v3378, 7
      %v3380 = vsub.s32 0, %v3379
      %v3381 = vrot.slane %v3376, %v3380
      %v3384 = vsel %vm1082, %v3368, 0
      %v3387 = vsel %vm1082, %v3369, 0
      %3389 = vmatprep.subr.mxu0 0.0
      %3390 = vmatpush1.msra.mxu0 0.0
      %3391 = vmatprep.subr.mxu0 0.0
      %3392 = vmatpush1.msra.mxu0 0.0
      %3393 = vmatprep.subr.mxu0 0.0
      %3394 = vmatpush1.msra.mxu0 0.0
      %3395 = vmatprep.subr.mxu0 0.0
      %3396 = vmatpush1.msra.mxu0 0.0
      %3397 = vmatprep.subr.mxu0 0.0
      %3398 = vmatpush1.msra.mxu0 0.0
      %3399 = vmatprep.subr.mxu0 0.0
      %3400 = vmatpush1.msra.mxu0 0.0
      %3401 = vmatprep.subr.mxu0 0.0
      %3402 = vmatpush1.msra.mxu0 0.0
      %3403 = vmatprep.subr.mxu0 0.0
      %3404 = vmatpush1.msra.mxu0 0.0
      %3405 = vmatprep.subr.mxu0 0.0
      %3406 = vmatpush1.msra.mxu0 0.0
      %3407 = vmatprep.subr.mxu0 0.0
      %3408 = vmatpush1.msra.mxu0 0.0
      %3409 = vmatprep.subr.mxu0 0.0
      %3410 = vmatpush1.msra.mxu0 0.0
      %3411 = vmatprep.subr.mxu0 0.0
      %3412 = vmatpush1.msra.mxu0 0.0
      %3413 = vmatprep.subr.mxu0 0.0
      %3414 = vmatpush1.msra.mxu0 %v3374
      %3415 = vmatprep.subr.mxu0 0.0
      %3416 = vmatpush1.msra.mxu0 %v3373
      %3417 = vmatprep.subr.mxu0 0.0
      %3418 = vmatpush1.msra.mxu0 %v3372
      %3419 = vmatprep.subr.mxu0 0.0
      %3420 = vmatpush1.msra.mxu0 %v3371
      %3421 = vmatprep.subr.mxu0 0.0
      %3422 = vmatpush2.msra.mxu0 0.0
      %3423 = vmatprep.subr.mxu0 0.0
      %3424 = vmatpush2.msra.mxu0 0.0
      %3425 = vmatprep.subr.mxu0 0.0
      %3426 = vmatpush2.msra.mxu0 0.0
      %3427 = vmatprep.subr.mxu0 0.0
      %3428 = vmatpush2.msra.mxu0 0.0
      %3429 = vmatprep.subr.mxu0 0.0
      %3430 = vmatpush2.msra.mxu0 0.0
      %3431 = vmatprep.subr.mxu0 0.0
      %3432 = vmatpush2.msra.mxu0 0.0
      %3433 = vmatprep.subr.mxu0 0.0
      %3434 = vmatpush2.msra.mxu0 0.0
      %3435 = vmatprep.subr.mxu0 0.0
      %3436 = vmatpush2.msra.mxu0 0.0
      %3437 = vmatprep.subr.mxu0 0.0
      %3438 = vmatpush2.msra.mxu0 0.0
      %3439 = vmatprep.subr.mxu0 0.0
      %3440 = vmatpush2.msra.mxu0 0.0
      %3441 = vmatprep.subr.mxu0 0.0
      %3442 = vmatpush2.msra.mxu0 0.0
      %3443 = vmatprep.subr.mxu0 0.0
      %3444 = vmatpush2.msra.mxu0 0.0
      %3445 = vmatprep.subr.mxu0 0.0
      %3446 = vmatpush2.msra.mxu0 0.0
      %3447 = vmatprep.subr.mxu0 0.0
      %3448 = vmatpush2.msra.mxu0 0.0
      %3449 = vmatprep.subr.mxu0 0.0
      %3450 = vmatpush2.msra.mxu0 0.0
      %3451 = vmatprep.subr.mxu0 0.0
      %3452 = vmatpush2.msra.mxu0 0.0
      %3453 = vmatprep.mubr.f32.mxu0 0.0
      %3454 = vmatmul.mubr.f32.gmra.mxu0 %v3384
      %v3455 = vpop.f32.mrf.mxu0
      %v3456 = vadd.f32 %v3381, %v3455
      %v3457 = vpop.f32.mrf.mxu0
      %3458 = vmatprep.mubr.f32.mxu0 0.0
      %3459 = vmatmul.mubr.f32.gmra.mxu0 %v3387
      %v3460 = vpop.f32.mrf.mxu0
      %v3461 = vadd.f32 %v3381, %v3460
      %v3462 = vpop.f32.mrf.mxu0
      %3463 = vdwg.mxu0
      %v3464 = vadd.f32 %v3456, %v2446
      %v3465 = vadd.f32 %v3461, %v2447
      %s3466 = scalar_lea.vmem %s18, 1
      %v3467 = vld [vmem:[%s3466] sm:$0x1]
      %s3468 = scalar_lea.vmem %s19, 1
      %v3469 = vld [vmem:[%s3468] sm:$0x1]
      %v3470 = vsel %vm1082, %v3464, 0.0
      %3471 = vadd.xlane.f32.xlu0 %v3470
      %v3472 = vpop.xlane.xlu0 %3471
      %v3473 = vsel %vm1082, %v3465, 0.0
      %3474 = vadd.xlane.f32.xlu0 %v3473
      %v3475 = vpop.xlane.xlu0 %3474
      %v3476 = vmul.f32 %v3472, %v1089
      %v3477 = vmul.f32 %v3475, %v1089
      %v3478 = vsub.f32 %v3464, %v3476
      %v3479 = vsub.f32 %v3465, %v3477
      %v3480 = vmul.f32 %v3478, %v3478
      %v3481 = vmul.f32 %v3479, %v3479
      %v3482 = vsel %vm1082, %v3480, 0.0
      %3483 = vadd.xlane.f32.xlu0 %v3482
      %v3484 = vpop.xlane.xlu0 %3483
      %v3485 = vsel %vm1082, %v3481, 0.0
      %3486 = vadd.xlane.f32.xlu0 %v3485
      %v3487 = vpop.xlane.xlu0 %3486
      %v3488 = vmul.f32 %v3484, %v1089
      %v3489 = vmul.f32 %v3487, %v1089
      %v3490 = vadd.f32 %v3488, 1e-12
      %v3491 = vadd.f32 %v3489, 1e-12
      %v3492 = vrsqrt.pop %v3490
      %v3493 = vrsqrt.pop %v3491
      %v3494 = vmul.f32 %v3478, %v3492
      %v3495 = vmul.f32 %v3479, %v3493
      %v3497 = vlaneseq
      %v3498 = vshrl.u32 %v3497, 7
      %v3499 = vsub.s32 0, %v3498
      %v3500 = vrot.slane %v3467, %v3499
      %v3502 = vmul.f32 %v3494, %v3500
      %v3503 = vmul.f32 %v3495, %v3500
      %v3505 = vlaneseq
      %v3506 = vshrl.u32 %v3505, 7
      %v3507 = vsub.s32 0, %v3506
      %v3508 = vrot.slane %v3469, %v3507
      %v3510 = vadd.f32 %v3502, %v3508
      %v3511 = vadd.f32 %v3503, %v3508
      %s3512 = scalar_lea.vmem %s20, 32
      %v3513 = vld [vmem:[%s3512] sm:$0xff]
      %v3514 = vld [vmem:[%s3512 + $0x8] sm:$0xff]
      %v3515 = vld [vmem:[%s3512 + $0x10] sm:$0xff]
      %v3516 = vld [vmem:[%s3512 + $0x18] sm:$0xff]
      %s3517 = scalar_lea.vmem %s21, 1
      %v3518 = vld [vmem:[%s3517] sm:$0x1]
      %v3520 = vlaneseq
      %v3521 = vshrl.u32 %v3520, 7
      %v3522 = vsub.s32 0, %v3521
      %v3523 = vrot.slane %v3518, %v3522
      %v3526 = vsel %vm1082, %v3510, 0
      %v3529 = vsel %vm1082, %v3511, 0
      %3531 = vmatprep.subr.mxu0 0.0
      %3532 = vmatpush1.msra.mxu0 0.0
      %3533 = vmatprep.subr.mxu0 0.0
      %3534 = vmatpush1.msra.mxu0 0.0
      %3535 = vmatprep.subr.mxu0 0.0
      %3536 = vmatpush1.msra.mxu0 0.0
      %3537 = vmatprep.subr.mxu0 0.0
      %3538 = vmatpush1.msra.mxu0 0.0
      %3539 = vmatprep.subr.mxu0 0.0
      %3540 = vmatpush1.msra.mxu0 0.0
      %3541 = vmatprep.subr.mxu0 0.0
      %3542 = vmatpush1.msra.mxu0 0.0
      %3543 = vmatprep.subr.mxu0 0.0
      %3544 = vmatpush1.msra.mxu0 0.0
      %3545 = vmatprep.subr.mxu0 0.0
      %3546 = vmatpush1.msra.mxu0 0.0
      %3547 = vmatprep.subr.mxu0 0.0
      %3548 = vmatpush1.msra.mxu0 0.0
      %3549 = vmatprep.subr.mxu0 0.0
      %3550 = vmatpush1.msra.mxu0 0.0
      %3551 = vmatprep.subr.mxu0 0.0
      %3552 = vmatpush1.msra.mxu0 0.0
      %3553 = vmatprep.subr.mxu0 0.0
      %3554 = vmatpush1.msra.mxu0 0.0
      %3555 = vmatprep.subr.mxu0 0.0
      %3556 = vmatpush1.msra.mxu0 %v3516
      %3557 = vmatprep.subr.mxu0 0.0
      %3558 = vmatpush1.msra.mxu0 %v3515
      %3559 = vmatprep.subr.mxu0 0.0
      %3560 = vmatpush1.msra.mxu0 %v3514
      %3561 = vmatprep.subr.mxu0 0.0
      %3562 = vmatpush1.msra.mxu0 %v3513
      %3563 = vmatprep.subr.mxu0 0.0
      %3564 = vmatpush2.msra.mxu0 0.0
      %3565 = vmatprep.subr.mxu0 0.0
      %3566 = vmatpush2.msra.mxu0 0.0
      %3567 = vmatprep.subr.mxu0 0.0
      %3568 = vmatpush2.msra.mxu0 0.0
      %3569 = vmatprep.subr.mxu0 0.0
      %3570 = vmatpush2.msra.mxu0 0.0
      %3571 = vmatprep.subr.mxu0 0.0
      %3572 = vmatpush2.msra.mxu0 0.0
      %3573 = vmatprep.subr.mxu0 0.0
      %3574 = vmatpush2.msra.mxu0 0.0
      %3575 = vmatprep.subr.mxu0 0.0
      %3576 = vmatpush2.msra.mxu0 0.0
      %3577 = vmatprep.subr.mxu0 0.0
      %3578 = vmatpush2.msra.mxu0 0.0
      %3579 = vmatprep.subr.mxu0 0.0
      %3580 = vmatpush2.msra.mxu0 0.0
      %3581 = vmatprep.subr.mxu0 0.0
      %3582 = vmatpush2.msra.mxu0 0.0
      %3583 = vmatprep.subr.mxu0 0.0
      %3584 = vmatpush2.msra.mxu0 0.0
      %3585 = vmatprep.subr.mxu0 0.0
      %3586 = vmatpush2.msra.mxu0 0.0
      %3587 = vmatprep.subr.mxu0 0.0
      %3588 = vmatpush2.msra.mxu0 0.0
      %3589 = vmatprep.subr.mxu0 0.0
      %3590 = vmatpush2.msra.mxu0 0.0
      %3591 = vmatprep.subr.mxu0 0.0
      %3592 = vmatpush2.msra.mxu0 0.0
      %3593 = vmatprep.subr.mxu0 0.0
      %3594 = vmatpush2.msra.mxu0 0.0
      %3595 = vmatprep.mubr.f32.mxu0 0.0
      %3596 = vmatmul.mubr.f32.gmra.mxu0 %v3526
      %v3597 = vpop.f32.mrf.mxu0
      %v3598 = vadd.f32 %v3523, %v3597
      %v3599 = vpop.f32.mrf.mxu0
      %3600 = vmatprep.mubr.f32.mxu0 0.0
      %3601 = vmatmul.mubr.f32.gmra.mxu0 %v3529
      %v3602 = vpop.f32.mrf.mxu0
      %v3603 = vadd.f32 %v3523, %v3602
      %v3604 = vpop.f32.mrf.mxu0
      %3605 = vdwg.mxu0
      %v3606 = vmul.f32 %v3598, %v3598
      %v3607 = vmul.f32 %v3603, %v3603
      %v3608 = vmul.f32 %v3598, %v3606
      %v3609 = vmul.f32 %v3603, %v3607
      %v3610 = vmul.f32 %v3608, 0.044715
      %v3611 = vmul.f32 %v3609, 0.044715
      %v3612 = vadd.f32 %v3598, %v3610
      %v3613 = vadd.f32 %v3603, %v3611
      %v3614 = vmul.f32 %v3612, 0.7978846
      %v3615 = vmul.f32 %v3613, 0.7978846
      %v3616 = vtanh.pop %v3614
      %v3617 = vtanh.pop %v3615
      %v3618 = vadd.f32 %v3616, 1.0
      %v3619 = vadd.f32 %v3617, 1.0
      %v3620 = vmul.f32 %v3618, 0.5
      %v3621 = vmul.f32 %v3619, 0.5
      %v3622 = vmul.f32 %v3598, %v3620
      %v3623 = vmul.f32 %v3603, %v3621
      %s3624 = scalar_lea.vmem %s22, 64
      %v3625 = vld [vmem:[%s3624] sm:$0xff]
      %v3626 = vld [vmem:[%s3624 + $0x8] sm:$0xff]
      %v3627 = vld [vmem:[%s3624 + $0x10] sm:$0xff]
      %v3628 = vld [vmem:[%s3624 + $0x18] sm:$0xff]
      %v3629 = vld [vmem:[%s3624 + $0x20] sm:$0xff]
      %v3630 = vld [vmem:[%s3624 + $0x28] sm:$0xff]
      %v3631 = vld [vmem:[%s3624 + $0x30] sm:$0xff]
      %v3632 = vld [vmem:[%s3624 + $0x38] sm:$0xff]
      %s3633 = scalar_lea.vmem %s23, 1
      %v3634 = vld [vmem:[%s3633] sm:$0x1]
      %v3636 = vlaneseq
      %v3637 = vshrl.u32 %v3636, 7
      %v3638 = vsub.s32 0, %v3637
      %v3639 = vrot.slane %v3634, %v3638
      %v3642 = vsel %vm2320, %v3622, 0
      %v3645 = vsel %vm2320, %v3623, 0
      %3647 = vmatprep.subr.mxu0 0.0
      %3648 = vmatpush1.msra.mxu0 0.0
      %3649 = vmatprep.subr.mxu0 0.0
      %3650 = vmatpush1.msra.mxu0 0.0
      %3651 = vmatprep.subr.mxu0 0.0
      %3652 = vmatpush1.msra.mxu0 0.0
      %3653 = vmatprep.subr.mxu0 0.0
      %3654 = vmatpush1.msra.mxu0 0.0
      %3655 = vmatprep.subr.mxu0 0.0
      %3656 = vmatpush1.msra.mxu0 0.0
      %3657 = vmatprep.subr.mxu0 0.0
      %3658 = vmatpush1.msra.mxu0 0.0
      %3659 = vmatprep.subr.mxu0 0.0
      %3660 = vmatpush1.msra.mxu0 0.0
      %3661 = vmatprep.subr.mxu0 0.0
      %3662 = vmatpush1.msra.mxu0 0.0
      %3663 = vmatprep.subr.mxu0 0.0
      %3664 = vmatpush1.msra.mxu0 %v3632
      %3665 = vmatprep.subr.mxu0 0.0
      %3666 = vmatpush1.msra.mxu0 %v3631
      %3667 = vmatprep.subr.mxu0 0.0
      %3668 = vmatpush1.msra.mxu0 %v3630
      %3669 = vmatprep.subr.mxu0 0.0
      %3670 = vmatpush1.msra.mxu0 %v3629
      %3671 = vmatprep.subr.mxu0 0.0
      %3672 = vmatpush1.msra.mxu0 %v3628
      %3673 = vmatprep.subr.mxu0 0.0
      %3674 = vmatpush1.msra.mxu0 %v3627
      %3675 = vmatprep.subr.mxu0 0.0
      %3676 = vmatpush1.msra.mxu0 %v3626
      %3677 = vmatprep.subr.mxu0 0.0
      %3678 = vmatpush1.msra.mxu0 %v3625
      %3679 = vmatprep.subr.mxu0 0.0
      %3680 = vmatpush2.msra.mxu0 0.0
      %3681 = vmatprep.subr.mxu0 0.0
      %3682 = vmatpush2.msra.mxu0 0.0
      %3683 = vmatprep.subr.mxu0 0.0
      %3684 = vmatpush2.msra.mxu0 0.0
      %3685 = vmatprep.subr.mxu0 0.0
      %3686 = vmatpush2.msra.mxu0 0.0
      %3687 = vmatprep.subr.mxu0 0.0
      %3688 = vmatpush2.msra.mxu0 0.0
      %3689 = vmatprep.subr.mxu0 0.0
      %3690 = vmatpush2.msra.mxu0 0.0
      %3691 = vmatprep.subr.mxu0 0.0
      %3692 = vmatpush2.msra.mxu0 0.0
      %3693 = vmatprep.subr.mxu0 0.0
      %3694 = vmatpush2.msra.mxu0 0.0
      %3695 = vmatprep.subr.mxu0 0.0
      %3696 = vmatpush2.msra.mxu0 0.0
      %3697 = vmatprep.subr.mxu0 0.0
      %3698 = vmatpush2.msra.mxu0 0.0
      %3699 = vmatprep.subr.mxu0 0.0
      %3700 = vmatpush2.msra.mxu0 0.0
      %3701 = vmatprep.subr.mxu0 0.0
      %3702 = vmatpush2.msra.mxu0 0.0
      %3703 = vmatprep.subr.mxu0 0.0
      %3704 = vmatpush2.msra.mxu0 0.0
      %3705 = vmatprep.subr.mxu0 0.0
      %3706 = vmatpush2.msra.mxu0 0.0
      %3707 = vmatprep.subr.mxu0 0.0
      %3708 = vmatpush2.msra.mxu0 0.0
      %3709 = vmatprep.subr.mxu0 0.0
      %3710 = vmatpush2.msra.mxu0 0.0
      %3711 = vmatprep.mubr.f32.mxu0 0.0
      %3712 = vmatmul.mubr.f32.gmra.mxu0 %v3642
      %v3713 = vpop.f32.mrf.mxu0
      %v3714 = vadd.f32 %v3639, %v3713
      %v3715 = vpop.f32.mrf.mxu0
      %3716 = vmatprep.mubr.f32.mxu0 0.0
      %3717 = vmatmul.mubr.f32.gmra.mxu0 %v3645
      %v3718 = vpop.f32.mrf.mxu0
      %v3719 = vadd.f32 %v3639, %v3718
      %v3720 = vpop.f32.mrf.mxu0
      %3721 = vdwg.mxu0
      %v3722 = vadd.f32 %v3714, %v3510
      %v3723 = vadd.f32 %v3719, %v3511
      %s3724 = scalar_lea.vmem %s24, 1
      %v3725 = vld [vmem:[%s3724] sm:$0x1]
      %s3726 = scalar_lea.vmem %s25, 1
      %v3727 = vld [vmem:[%s3726] sm:$0x1]
      %v3728 = vsel %vm1082, %v3722, 0.0
      %3729 = vadd.xlane.f32.xlu0 %v3728
      %v3730 = vpop.xlane.xlu0 %3729
      %v3731 = vsel %vm1082, %v3723, 0.0
      %3732 = vadd.xlane.f32.xlu0 %v3731
      %v3733 = vpop.xlane.xlu0 %3732
      %v3734 = vmul.f32 %v3730, %v1089
      %v3735 = vmul.f32 %v3733, %v1089
      %v3736 = vsub.f32 %v3722, %v3734
      %v3737 = vsub.f32 %v3723, %v3735
      %v3738 = vmul.f32 %v3736, %v3736
      %v3739 = vmul.f32 %v3737, %v3737
      %v3740 = vsel %vm1082, %v3738, 0.0
      %3741 = vadd.xlane.f32.xlu0 %v3740
      %v3742 = vpop.xlane.xlu0 %3741
      %v3743 = vsel %vm1082, %v3739, 0.0
      %3744 = vadd.xlane.f32.xlu0 %v3743
      %v3745 = vpop.xlane.xlu0 %3744
      %v3746 = vmul.f32 %v3742, %v1089
      %v3747 = vmul.f32 %v3745, %v1089
      %v3748 = vadd.f32 %v3746, 1e-12
      %v3749 = vadd.f32 %v3747, 1e-12
      %v3750 = vrsqrt.pop %v3748
      %v3751 = vrsqrt.pop %v3749
      %v3752 = vmul.f32 %v3736, %v3750
      %v3753 = vmul.f32 %v3737, %v3751
      %v3755 = vlaneseq
      %v3756 = vshrl.u32 %v3755, 7
      %v3757 = vsub.s32 0, %v3756
      %v3758 = vrot.slane %v3725, %v3757
      %v3760 = vmul.f32 %v3752, %v3758
      %v3761 = vmul.f32 %v3753, %v3758
      %v3763 = vlaneseq
      %v3764 = vshrl.u32 %v3763, 7
      %v3765 = vsub.s32 0, %v3764
      %v3766 = vrot.slane %v3727, %v3765
      %v3768 = vadd.f32 %v3760, %v3766
      %v3769 = vadd.f32 %v3761, %v3766
      %3770 = vst.msk [vmem:[%s839] sm:$0xff] %vm1082, %v3768
      %3771 = vst.msk [vmem:[%s839 + $0x8] sm:$0xff] %vm1082, %v3769
      %p3772 = scmp.lt.s32.totalorder %s37, 1
      %s3773 = scalar_select %p3772, %s37, 1
      %s3774 = smul.addr %s3773, 2
      %s3775 = smul.addr %s3774, 8
      %s3776 = scalar_lea.vmem %s26, %s3775
      // Predicated region
      $region125: #{mma_forward.1} parent=123 // pred_check
        %p3777 = pneg %p621
      $region126: #{mma_forward.1} parent=123 // pred_check_branch
        %3779 = sbr.rel (%p3777) target = $region128
      $region127: #{mma_forward.1} parent=123 // pred_region
        _
      $region128: #{mma_forward.1} parent=123 // pred_fallthru
        _
    $region124: #{mma_forward.1} parent=5 // pred_fallthru
      _
    %p3780 = scmp.le.s32.totalorder 2, %s32
    // Predicated region
    $region129: #{mma_forward.1} parent=5 // pred_check
      %p3781 = pneg %p3780
    $region130: #{mma_forward.1} parent=5 // pred_check_branch
      %3783 = sbr.rel (%p3781) target = $region132
    $region131: #{mma_forward.1} parent=5 // pred_region
      %s3784 = ssub.s32 %s32, 2
      // Predicated region
      $region133: #{mma_forward.1} parent=131 // pred_check
        %p3785 = pneg %p627
      $region134: #{mma_forward.1} parent=131 // pred_check_branch
        %3787 = sbr.rel (%p3785) target = $region136
      $region135: #{mma_forward.1} parent=131 // pred_region
        %p3788 = scmp.lt.s32.totalorder %s38, 1
        %s3789 = scalar_select %p3788, %s38, 1
        %s3790 = smul.addr %s3789, 2
        %s3791 = smul.addr %s3790, 8
        %s3792 = scalar_lea.vmem %s26, %s3791
      $region136: #{mma_forward.1} parent=131 // pred_fallthru
        _
    $region132: #{mma_forward.1} parent=5 // pred_fallthru
      _
  $region6: #{mma_forward.1} parent=0 // loop_footer
    %s36 = sadd.s32 1, %s32
  $region7: #{mma_forward.1} parent=0 // loop_footer_branch
    %31 = sbr.rel target = $region3
  $region8: #{mma_forward.1} parent=0 // loop_exit
    _

</llo_original>
